<compile_context>
chip_gen: v7x
topology: tpu7x:2x2x1
jax: 0.10.0
libtpu: 0.0.40
codegen_flags: <defaults>
</compile_context>

<pallas_src>
import jax
import jax.numpy as jnp
import numpy as np
from jax.experimental import pallas as pl
from jax.experimental.pallas import tpu as pltpu

EPS = 1e-12          # F.normalize default eps (clamp on the norm)
EPS2 = EPS * EPS     # equivalent clamp on the squared norm (sqrt is monotonic)


def _lit_emb_kernel(w_ref, src_ref, segid_ref, tk_ref, out_ref):
    # w_ref:     (1, TS)       f32   per-position scale slab (torch Parameter `w`)
    # src_ref:   (TB, E, TS)   bf16  src embeddings, already raw-viewed to (E, S)
    # segid_ref: (TB, E, TS)   int8  scrambled segment ids (exact 0/1/2)
    # tk_ref:    (3, E, TS)    f32   seg_table pre-scrambled by the view's column map
    # out_ref:   (TB, E)       f32   accumulated across the S-slab grid axis
    w = w_ref[...]                                    # (1, TS)
    a = src_ref[...].astype(jnp.float32)              # f32 math; only bf16 crosses HBM
    ids = segid_ref[...].astype(jnp.float32)          # {0.,1.,2.}; upconvert is filler

    # Fused 3-row segment-embedding "gather": select among the 3 viewed table rows.
    t0, t1, t2 = tk_ref[0], tk_ref[1], tk_ref[2]                   # (E, TS) each
    b = jnp.where(ids < 0.5, t0, jnp.where(ids < 1.5, t1, t2))     # (TB, E, TS)

    # F.normalize(w*a, dim=1) and F.normalize(b, dim=1) with `w` folded into the
    # per-(batch, s) scale (||w*a||^2 == w^2 * ||a||^2).  rsqrt runs on the EUP over
    # small (TB, TS) tensors; no full-tile divide, no (TB, E, TS) `w*a` temporary.
    ssq_a = jnp.sum(a * a, axis=1)                                  # (TB, TS)
    ssq_b = jnp.sum(b * b, axis=1)                                  # (TB, TS)
    scale_a = w * jax.lax.rsqrt(jnp.maximum(w * w * ssq_a, EPS2))   # (TB, TS)
    scale_b = jax.lax.rsqrt(jnp.maximum(ssq_b, EPS2))               # (TB, TS)

    # (normalize(w*a) + normalize(b)).sum over this S-slab  ->  (TB, E)
    part = jnp.sum(a * scale_a[:, None, :] + b * scale_b[:, None, :], axis=-1)

    # Accumulate across S-slabs directly in the resident output block.
    @pl.when(pl.program_id(1) == 0)
    def _():
        out_ref[...] = part

    @pl.when(pl.program_id(1) > 0)
    def _():
        out_ref[...] += part


def _vmem_capacity_bytes():
    """Per-core VMEM capacity; conservative (v7x-sized) fallback if query fails."""
    try:
        cap = int(getattr(pltpu.get_tpu_info(), "vmem_capacity_bytes"))
        if cap > 0:
            return cap
    except Exception:
        pass
    return 64 * 1024 * 1024


def _choose_tiling(B, E, S, budget):
    """Pick (TB, TS, NS): batch tile, sequence-slab size, number of slabs."""

    def step_bytes(tb, ts):
        a = tb * E * ts * 2        # bf16 src view
        ids = tb * E * ts * 1      # int8 scrambled seg ids
        tab = 3 * E * ts * 4       # f32 pre-viewed seg table (worst case double-buffered)
        wv = ts * 4                # f32 w slab
        out = tb * E * 4           # f32 output block
        return 2 * (a + ids + tab + wv + out)

    if B < 8:
        candidates = [B]
    else:
        candidates = [tb for tb in (64, 32, 16, 8) if tb <= B] or [8]
        # Keep >=2 grid steps when the batch allows it, so the "parallel" batch
        # axis actually feeds both v7x TensorCores.
        two_step = [tb for tb in candidates if -(-B // tb) >= 2]
        if two_step:
            candidates = two_step

    for tb in candidates:
        if step_bytes(tb, S) <= budget:
            return tb, S, 1

    # TB=8 (or the small-batch tile) does not fit: split S into 128-aligned slabs
    # on a second "arbitrary" grid axis instead of shrinking the batch tile.
    tb = candidates[-1]
    if S % 128 == 0:
        for ns in range(2, S // 128 + 1):
            ts = S // ns
            if S % ns == 0 and ts % 128 == 0 and step_bytes(tb, ts) <= budget:
                return tb, ts, ns

    # Last resort (S not 128-divisible): shrink the batch tile (sublane-sparse stores).
    while tb > 1 and step_bytes(tb, S) > budget:
        tb = max(1, tb // 2)
    return tb, S, 1


def literature_embedding(src, seg, src_table, seg_table, w, *, seq_length, emb_size):
    """src, seg: int32 (B, S) token / segment ids."""
    B, S = src.shape
    E = emb_size
    assert S == seq_length
    assert src_table.shape[1] == E and seg_table.shape == (3, E)

    # ---- generation-aware tiling -------------------------------------------
    vmem_cap = _vmem_capacity_bytes()
    budget = int(0.65 * vmem_cap)         # pipeline working set (~42 MiB v7x, ~83 MiB v5e/v6e)
    vmem_limit = int(0.85 * vmem_cap)     # explicit scoped-VMEM limit (v5e default is only 16 MiB)
    TB, TS, NS = _choose_tiling(B, E, S, budget)

    Bp = ((B + TB - 1) // TB) * TB
    if Bp != B:
        pad = Bp - B
        src = jnp.concatenate([src, jnp.zeros((pad, S), src.dtype)], axis=0)
        seg = jnp.concatenate([seg, jnp.zeros((pad, S), seg.dtype)], axis=0)

    # ---- glue ---------------------------------------------------------------
    # Raw .view(B, E, S) of a contiguous (B, S, E) tensor preserves flat order:
    # viewed element (e, s) comes from gathered row (e*S+s)//E, column (e*S+s)%E.
    flat = np.arange(E * S, dtype=np.int32)
    q_idx = (flat // E).reshape(E, S)       # which seq position  (static)
    c_idx = (flat % E).reshape(E, S)        # which embedding col (static)

    # src path: XLA gather of a bf16 table + free contiguous reshape (raw .view).
    # bf16 halves both the gather write and the kernel read; f32 math stays in-kernel.
    # TODO(synk): fuse this gather (scalar-prefetched ids + per-row DMA) to also
    #             remove the gathered stream's HBM write + re-read.
    a = jnp.take(src_table.astype(jnp.bfloat16), src, axis=0).reshape(Bp, E, S)

    # seg path: fused in-kernel 3-way select.  The pre-viewed table is tiny, batch
    # independent and kept f32; ids cross HBM as narrow ints.
    seg_view_tab = seg_table[:, c_idx].astype(jnp.float32)   # (3, E, S)
    w2 = w.reshape(1, S).astype(jnp.float32)

    def _call(seg_view_ids, single_buffer_consts):
        const_kw = {}
        if single_buffer_consts:
            # Grid-constant inputs: a second pipeline buffer is pure VMEM waste.
            const_kw = dict(pipeline_mode=pl.Buffered(1))
        return pl.pallas_call(
            _lit_emb_kernel,
            out_shape=jax.ShapeDtypeStruct((Bp, E), jnp.float32),
            grid=(Bp // TB, NS),
            in_specs=[
                pl.BlockSpec((1, TS), lambda i, j: (0, j), **const_kw),        # w
                pl.BlockSpec((TB, E, TS), lambda i, j: (i, 0, j)),             # src view (bf16)
                pl.BlockSpec((TB, E, TS), lambda i, j: (i, 0, j)),             # seg ids
                pl.BlockSpec((3, E, TS), lambda i, j: (0, 0, j), **const_kw),  # viewed seg table
            ],
            out_specs=pl.BlockSpec((TB, E), lambda i, j: (i, 0)),
            compiler_params=pltpu.CompilerParams(
                dimension_semantics=("parallel", "arbitrary"),
                vmem_limit_bytes=vmem_limit,
            ),
        )(w2, a, seg_view_ids, seg_view_tab)

    # Most HBM-frugal configuration first; fall back for Pallas versions without
    # pipeline_mode on pallas_call, or Mosaic int8-layout gaps (bf16 ids are exact
    # for {0,1,2} and were validated previously).
    attempts = []
    if NS == 1:
        attempts.append((jnp.int8, True))
    attempts += [(jnp.int8, False), (jnp.bfloat16, False)]
    last_err = None
    out = None
    for ids_dtype, single_buf in attempts:
        try:
            out = _call(seg[:, q_idx].astype(ids_dtype), single_buf)
            break
        except Exception as e:   # noqa: BLE001 - compile-time fallback ladder
            last_err = e
    if out is None:
        raise last_err
    return out[:B]


def _reference(src, seg, src_table, seg_table, w, *, seq_length, emb_size):
    B, S = src.shape
    E = emb_size
    a = jnp.take(src_table, src, axis=0).reshape(B, E, S)
    b = jnp.take(seg_table, seg, axis=0).reshape(B, E, S)
    x = a * w[None, None, :]
    xn = x / jnp.maximum(jnp.linalg.norm(x, axis=1, keepdims=True), EPS)
    bn = b / jnp.maximum(jnp.linalg.norm(b, axis=1, keepdims=True), EPS)
    return jnp.sum(xn + bn, axis=-1)


if __name__ == "__main__":
    # Small, forward-consistent shapes (B large enough to exercise a 2-step grid).
    B = 16
    vocab_size = 32
    seq_length = 8
    emb_size = 16

    key = jax.random.PRNGKey(0)
    k1, k2, k3, k4, k5 = jax.random.split(key, 5)

    src_table = jax.random.normal(k1, (vocab_size, emb_size), dtype=jnp.float32)
    seg_table = jax.random.normal(k2, (3, emb_size), dtype=jnp.float32)
    # nn.Parameter init is ones; perturb deterministically so the w-folding path
    # is actually exercised by the correctness check.
    w = 1.0 + 0.25 * jax.random.normal(k5, (seq_length,), dtype=jnp.float32)

    src = jax.random.randint(k3, (B, seq_length), 0, vocab_size, dtype=jnp.int32)
    seg = jax.random.randint(k4, (B, seq_length), 0, 3, dtype=jnp.int32)

    out = literature_embedding(src, seg, src_table, seg_table, w,
                               seq_length=seq_length, emb_size=emb_size)
    out = jax.block_until_ready(out)
    assert out.shape == (B, emb_size)

    # Tight check against a reference fed the same bf16-quantized src embeddings
    # (validates the kernel math exactly) ...
    ref_bf16_in = _reference(src, seg,
                             src_table.astype(jnp.bfloat16).astype(jnp.float32),
                             seg_table, w, seq_length=seq_length, emb_size=emb_size)
    assert jnp.allclose(out, ref_bf16_in, atol=1e-3, rtol=1e-3), \
        "mismatch vs bf16-input reference"

    # ... plus a looser check against the full-f32 module semantics (tolerance is
    # the bf16 src-stream precision trade-off recommended by the perf review).
    ref_f32 = _reference(src, seg, src_table, seg_table, w,
                         seq_length=seq_length, emb_size=emb_size)
    assert jnp.allclose(out, ref_f32, atol=5e-2, rtol=5e-2), "mismatch vs f32 reference"

    print("KERNEL_OK")
</pallas_src>

<mosaic_0001>
module attributes {stable_mosaic.version = 11 : i64} {
  func.func @_lit_emb_kernel(%arg0: i32, %arg1: i32, %arg2: memref<1x8xf32, #tpu.memory_space<vmem>>, %arg3: memref<8x16x8xbf16, #tpu.memory_space<vmem>>, %arg4: memref<8x16x8xi8, #tpu.memory_space<vmem>>, %arg5: memref<3x16x8xf32, #tpu.memory_space<vmem>>, %arg6: memref<8x16xf32, #tpu.memory_space<vmem>>) attributes {dimension_semantics = [#tpu.dimension_semantics<parallel>, #tpu.dimension_semantics<arbitrary>], iteration_bounds = array<i64: 2, 1>, scalar_prefetch = 0 : i64, scratch_operands = 0 : i64, tpu.core_type = #tpu.core_type<tc>, window_params = [{pipeline_mode = #tpu.pipeline_mode<synchronous>, transform_indices = @transform_0, window_bounds = array<i64: 1, 8>}, {transform_indices = @transform_1, window_bounds = array<i64: 8, 16, 8>}, {transform_indices = @transform_2, window_bounds = array<i64: 8, 16, 8>}, {pipeline_mode = #tpu.pipeline_mode<synchronous>, transform_indices = @transform_3, window_bounds = array<i64: 3, 16, 8>}, {transform_indices = @transform_4, window_bounds = array<i64: 8, 16>}]} {
    %c0 = arith.constant 0 : index
    %c0_0 = arith.constant 0 : index
    %0 = vector.load %arg2[%c0, %c0_0] : memref<1x8xf32, #tpu.memory_space<vmem>>, vector<1x8xf32>
    %c0_1 = arith.constant 0 : index
    %c0_2 = arith.constant 0 : index
    %c0_3 = arith.constant 0 : index
    %1 = vector.load %arg3[%c0_1, %c0_2, %c0_3] : memref<8x16x8xbf16, #tpu.memory_space<vmem>>, vector<8x16x8xbf16>
    %2 = arith.extf %1 : vector<8x16x8xbf16> to vector<8x16x8xf32>
    %c0_4 = arith.constant 0 : index
    %c0_5 = arith.constant 0 : index
    %c0_6 = arith.constant 0 : index
    %3 = vector.load %arg4[%c0_4, %c0_5, %c0_6] : memref<8x16x8xi8, #tpu.memory_space<vmem>>, vector<8x16x8xi8>
    %4 = arith.sitofp %3 : vector<8x16x8xi8> to vector<8x16x8xf32>
    %c0_7 = arith.constant 0 : index
    %c0_8 = arith.constant 0 : index
    %c0_9 = arith.constant 0 : index
    %5 = vector.load %arg5[%c0_7, %c0_8, %c0_9] : memref<3x16x8xf32, #tpu.memory_space<vmem>>, vector<1x16x8xf32>
    %6 = vector.shape_cast %5 : vector<1x16x8xf32> to vector<16x8xf32>
    %c1 = arith.constant 1 : index
    %c0_10 = arith.constant 0 : index
    %c0_11 = arith.constant 0 : index
    %7 = vector.load %arg5[%c1, %c0_10, %c0_11] : memref<3x16x8xf32, #tpu.memory_space<vmem>>, vector<1x16x8xf32>
    %8 = vector.shape_cast %7 : vector<1x16x8xf32> to vector<16x8xf32>
    %c2 = arith.constant 2 : index
    %c0_12 = arith.constant 0 : index
    %c0_13 = arith.constant 0 : index
    %9 = vector.load %arg5[%c2, %c0_12, %c0_13] : memref<3x16x8xf32, #tpu.memory_space<vmem>>, vector<1x16x8xf32>
    %10 = vector.shape_cast %9 : vector<1x16x8xf32> to vector<16x8xf32>
    %cst = arith.constant 5.000000e-01 : f32
    %11 = vector.broadcast %cst : f32 to vector<8x16x8xf32>
    %12 = arith.cmpf olt, %4, %11 : vector<8x16x8xf32>
    %cst_14 = arith.constant 1.500000e+00 : f32
    %13 = vector.broadcast %cst_14 : f32 to vector<8x16x8xf32>
    %14 = arith.cmpf olt, %4, %13 : vector<8x16x8xf32>
    %15 = vector.shape_cast %8 : vector<16x8xf32> to vector<1x16x8xf32>
    %16 = vector.broadcast %15 : vector<1x16x8xf32> to vector<8x16x8xf32>
    %17 = vector.shape_cast %10 : vector<16x8xf32> to vector<1x16x8xf32>
    %18 = vector.broadcast %17 : vector<1x16x8xf32> to vector<8x16x8xf32>
    %19 = arith.select %14, %16, %18 : vector<8x16x8xi1>, vector<8x16x8xf32>
    %20 = vector.shape_cast %6 : vector<16x8xf32> to vector<1x16x8xf32>
    %21 = vector.broadcast %20 : vector<1x16x8xf32> to vector<8x16x8xf32>
    %22 = arith.select %12, %21, %19 : vector<8x16x8xi1>, vector<8x16x8xf32>
    %23 = arith.mulf %2, %2 : vector<8x16x8xf32>
    %cst_15 = arith.constant dense<0.000000e+00> : vector<8x8xf32>
    %24 = vector.multi_reduction <add>, %23, %cst_15 [1] : vector<8x16x8xf32> to vector<8x8xf32>
    %25 = arith.mulf %22, %22 : vector<8x16x8xf32>
    %cst_16 = arith.constant dense<0.000000e+00> : vector<8x8xf32>
    %26 = vector.multi_reduction <add>, %25, %cst_16 [1] : vector<8x16x8xf32> to vector<8x8xf32>
    %27 = arith.mulf %0, %0 : vector<1x8xf32>
    %28 = vector.broadcast %27 : vector<1x8xf32> to vector<8x8xf32>
    %29 = arith.mulf %28, %24 : vector<8x8xf32>
    %cst_17 = arith.constant 1.000000e-24 : f32
    %30 = vector.broadcast %cst_17 : f32 to vector<8x8xf32>
    %31 = arith.maximumf %29, %30 : vector<8x8xf32>
    %32 = math.rsqrt %31 : vector<8x8xf32>
    %33 = vector.broadcast %0 : vector<1x8xf32> to vector<8x8xf32>
    %34 = arith.mulf %33, %32 : vector<8x8xf32>
    %cst_18 = arith.constant 1.000000e-24 : f32
    %35 = vector.broadcast %cst_18 : f32 to vector<8x8xf32>
    %36 = arith.maximumf %26, %35 : vector<8x8xf32>
    %37 = math.rsqrt %36 : vector<8x8xf32>
    %38 = vector.shape_cast %34 : vector<8x8xf32> to vector<8x1x8xf32>
    %39 = vector.broadcast %38 : vector<8x1x8xf32> to vector<8x16x8xf32>
    %40 = arith.mulf %2, %39 : vector<8x16x8xf32>
    %41 = vector.shape_cast %37 : vector<8x8xf32> to vector<8x1x8xf32>
    %42 = vector.broadcast %41 : vector<8x1x8xf32> to vector<8x16x8xf32>
    %43 = arith.mulf %22, %42 : vector<8x16x8xf32>
    %44 = arith.addf %40, %43 : vector<8x16x8xf32>
    %cst_19 = arith.constant dense<0.000000e+00> : vector<8x16xf32>
    %45 = vector.multi_reduction <add>, %44, %cst_19 [2] : vector<8x16x8xf32> to vector<8x16xf32>
    %c0_i32 = arith.constant 0 : i32
    %46 = arith.cmpi eq, %arg1, %c0_i32 : i32
    %47 = arith.extui %46 : i1 to i32
    %c0_i32_20 = arith.constant 0 : i32
    %48 = arith.cmpi ne, %47, %c0_i32_20 : i32
    scf.if %48 {
      %c0_23 = arith.constant 0 : index
      %c0_24 = arith.constant 0 : index
      %52 = vector.load %arg6[%c0_23, %c0_24] : memref<8x16xf32, #tpu.memory_space<vmem>>, vector<8x16xf32>
      tpu.vector_store %arg6[%c0_23, %c0_24], %45 {strides = array<i32>} : memref<8x16xf32, #tpu.memory_space<vmem>>, vector<8x16xf32>,
    } else {
    }
    %c0_i32_21 = arith.constant 0 : i32
    %49 = arith.cmpi sgt, %arg1, %c0_i32_21 : i32
    %50 = arith.extui %49 : i1 to i32
    %c0_i32_22 = arith.constant 0 : i32
    %51 = arith.cmpi ne, %50, %c0_i32_22 : i32
    scf.if %51 {
      %c0_23 = arith.constant 0 : index
      %c0_24 = arith.constant 0 : index
      %52 = vector.load %arg6[%c0_23, %c0_24] : memref<8x16xf32, #tpu.memory_space<vmem>>, vector<8x16xf32>
      %53 = arith.addf %52, %45 : vector<8x16xf32>
      %c0_25 = arith.constant 0 : index
      %c0_26 = arith.constant 0 : index
      %54 = vector.load %arg6[%c0_25, %c0_26] : memref<8x16xf32, #tpu.memory_space<vmem>>, vector<8x16xf32>
      tpu.vector_store %arg6[%c0_25, %c0_26], %53 {strides = array<i32>} : memref<8x16xf32, #tpu.memory_space<vmem>>, vector<8x16xf32>,
    } else {
    }
    return
  }
  func.func @transform_0(%arg0: i32, %arg1: i32) -> (i32, i32) {
    %c0_i32 = arith.constant 0 : i32
    %c0_i32_0 = arith.constant 0 : i32
    return %c0_i32, %arg1 : i32, i32
  }
  func.func @transform_1(%arg0: i32, %arg1: i32) -> (i32, i32, i32) {
    %c0_i32 = arith.constant 0 : i32
    %c0_i32_0 = arith.constant 0 : i32
    return %arg0, %c0_i32, %arg1 : i32, i32, i32
  }
  func.func @transform_2(%arg0: i32, %arg1: i32) -> (i32, i32, i32) {
    %c0_i32 = arith.constant 0 : i32
    %c0_i32_0 = arith.constant 0 : i32
    return %arg0, %c0_i32, %arg1 : i32, i32, i32
  }
  func.func @transform_3(%arg0: i32, %arg1: i32) -> (i32, i32, i32) {
    %c0_i32 = arith.constant 0 : i32
    %c0_i32_0 = arith.constant 0 : i32
    %c0_i32_1 = arith.constant 0 : i32
    return %c0_i32, %c0_i32_0, %arg1 : i32, i32, i32
  }
  func.func @transform_4(%arg0: i32, %arg1: i32) -> (i32, i32) {
    %c0_i32 = arith.constant 0 : i32
    %c0_i32_0 = arith.constant 0 : i32
    return %arg0, %c0_i32 : i32, i32
  }
}

module attributes {stable_mosaic.version = 11 : i64} {
  func.func @_lit_emb_kernel(%arg0: i32, %arg1: i32, %arg2: memref<1x8xf32, #tpu.memory_space<vmem>>, %arg3: memref<8x16x8xbf16, #tpu.memory_space<vmem>>, %arg4: memref<8x16x8xi8, #tpu.memory_space<vmem>>, %arg5: memref<3x16x8xf32, #tpu.memory_space<vmem>>, %arg6: memref<8x16xf32, #tpu.memory_space<vmem>>) attributes {dimension_semantics = [#tpu.dimension_semantics<parallel>, #tpu.dimension_semantics<arbitrary>], iteration_bounds = array<i64: 2, 1>, scalar_prefetch = 0 : i64, scratch_operands = 0 : i64, tpu.core_type = #tpu.core_type<tc>, window_params = [{transform_indices = @transform_0, window_bounds = array<i64: 1, 8>}, {transform_indices = @transform_1, window_bounds = array<i64: 8, 16, 8>}, {transform_indices = @transform_2, window_bounds = array<i64: 8, 16, 8>}, {transform_indices = @transform_3, window_bounds = array<i64: 3, 16, 8>}, {transform_indices = @transform_4, window_bounds = array<i64: 8, 16>}]} {
    %c0 = arith.constant 0 : index
    %c0_0 = arith.constant 0 : index
    %0 = vector.load %arg2[%c0, %c0_0] : memref<1x8xf32, #tpu.memory_space<vmem>>, vector<1x8xf32>
    %c0_1 = arith.constant 0 : index
    %c0_2 = arith.constant 0 : index
    %c0_3 = arith.constant 0 : index
    %1 = vector.load %arg3[%c0_1, %c0_2, %c0_3] : memref<8x16x8xbf16, #tpu.memory_space<vmem>>, vector<8x16x8xbf16>
    %2 = arith.extf %1 : vector<8x16x8xbf16> to vector<8x16x8xf32>
    %c0_4 = arith.constant 0 : index
    %c0_5 = arith.constant 0 : index
    %c0_6 = arith.constant 0 : index
    %3 = vector.load %arg4[%c0_4, %c0_5, %c0_6] : memref<8x16x8xi8, #tpu.memory_space<vmem>>, vector<8x16x8xi8>
    %4 = arith.sitofp %3 : vector<8x16x8xi8> to vector<8x16x8xf32>
    %c0_7 = arith.constant 0 : index
    %c0_8 = arith.constant 0 : index
    %c0_9 = arith.constant 0 : index
    %5 = vector.load %arg5[%c0_7, %c0_8, %c0_9] : memref<3x16x8xf32, #tpu.memory_space<vmem>>, vector<1x16x8xf32>
    %6 = vector.shape_cast %5 : vector<1x16x8xf32> to vector<16x8xf32>
    %c1 = arith.constant 1 : index
    %c0_10 = arith.constant 0 : index
    %c0_11 = arith.constant 0 : index
    %7 = vector.load %arg5[%c1, %c0_10, %c0_11] : memref<3x16x8xf32, #tpu.memory_space<vmem>>, vector<1x16x8xf32>
    %8 = vector.shape_cast %7 : vector<1x16x8xf32> to vector<16x8xf32>
    %c2 = arith.constant 2 : index
    %c0_12 = arith.constant 0 : index
    %c0_13 = arith.constant 0 : index
    %9 = vector.load %arg5[%c2, %c0_12, %c0_13] : memref<3x16x8xf32, #tpu.memory_space<vmem>>, vector<1x16x8xf32>
    %10 = vector.shape_cast %9 : vector<1x16x8xf32> to vector<16x8xf32>
    %cst = arith.constant 5.000000e-01 : f32
    %11 = vector.broadcast %cst : f32 to vector<8x16x8xf32>
    %12 = arith.cmpf olt, %4, %11 : vector<8x16x8xf32>
    %cst_14 = arith.constant 1.500000e+00 : f32
    %13 = vector.broadcast %cst_14 : f32 to vector<8x16x8xf32>
    %14 = arith.cmpf olt, %4, %13 : vector<8x16x8xf32>
    %15 = vector.shape_cast %8 : vector<16x8xf32> to vector<1x16x8xf32>
    %16 = vector.broadcast %15 : vector<1x16x8xf32> to vector<8x16x8xf32>
    %17 = vector.shape_cast %10 : vector<16x8xf32> to vector<1x16x8xf32>
    %18 = vector.broadcast %17 : vector<1x16x8xf32> to vector<8x16x8xf32>
    %19 = arith.select %14, %16, %18 : vector<8x16x8xi1>, vector<8x16x8xf32>
    %20 = vector.shape_cast %6 : vector<16x8xf32> to vector<1x16x8xf32>
    %21 = vector.broadcast %20 : vector<1x16x8xf32> to vector<8x16x8xf32>
    %22 = arith.select %12, %21, %19 : vector<8x16x8xi1>, vector<8x16x8xf32>
    %23 = arith.mulf %2, %2 : vector<8x16x8xf32>
    %cst_15 = arith.constant dense<0.000000e+00> : vector<8x8xf32>
    %24 = vector.multi_reduction <add>, %23, %cst_15 [1] : vector<8x16x8xf32> to vector<8x8xf32>
    %25 = arith.mulf %22, %22 : vector<8x16x8xf32>
    %cst_16 = arith.constant dense<0.000000e+00> : vector<8x8xf32>
    %26 = vector.multi_reduction <add>, %25, %cst_16 [1] : vector<8x16x8xf32> to vector<8x8xf32>
    %27 = arith.mulf %0, %0 : vector<1x8xf32>
    %28 = vector.broadcast %27 : vector<1x8xf32> to vector<8x8xf32>
    %29 = arith.mulf %28, %24 : vector<8x8xf32>
    %cst_17 = arith.constant 1.000000e-24 : f32
    %30 = vector.broadcast %cst_17 : f32 to vector<8x8xf32>
    %31 = arith.maximumf %29, %30 : vector<8x8xf32>
    %32 = math.rsqrt %31 : vector<8x8xf32>
    %33 = vector.broadcast %0 : vector<1x8xf32> to vector<8x8xf32>
    %34 = arith.mulf %33, %32 : vector<8x8xf32>
    %cst_18 = arith.constant 1.000000e-24 : f32
    %35 = vector.broadcast %cst_18 : f32 to vector<8x8xf32>
    %36 = arith.maximumf %26, %35 : vector<8x8xf32>
    %37 = math.rsqrt %36 : vector<8x8xf32>
    %38 = vector.shape_cast %34 : vector<8x8xf32> to vector<8x1x8xf32>
    %39 = vector.broadcast %38 : vector<8x1x8xf32> to vector<8x16x8xf32>
    %40 = arith.mulf %2, %39 : vector<8x16x8xf32>
    %41 = vector.shape_cast %37 : vector<8x8xf32> to vector<8x1x8xf32>
    %42 = vector.broadcast %41 : vector<8x1x8xf32> to vector<8x16x8xf32>
    %43 = arith.mulf %22, %42 : vector<8x16x8xf32>
    %44 = arith.addf %40, %43 : vector<8x16x8xf32>
    %cst_19 = arith.constant dense<0.000000e+00> : vector<8x16xf32>
    %45 = vector.multi_reduction <add>, %44, %cst_19 [2] : vector<8x16x8xf32> to vector<8x16xf32>
    %c0_i32 = arith.constant 0 : i32
    %46 = arith.cmpi eq, %arg1, %c0_i32 : i32
    %47 = arith.extui %46 : i1 to i32
    %c0_i32_20 = arith.constant 0 : i32
    %48 = arith.cmpi ne, %47, %c0_i32_20 : i32
    scf.if %48 {
      %c0_23 = arith.constant 0 : index
      %c0_24 = arith.constant 0 : index
      %52 = vector.load %arg6[%c0_23, %c0_24] : memref<8x16xf32, #tpu.memory_space<vmem>>, vector<8x16xf32>
      tpu.vector_store %arg6[%c0_23, %c0_24], %45 {strides = array<i32>} : memref<8x16xf32, #tpu.memory_space<vmem>>, vector<8x16xf32>,
    } else {
    }
    %c0_i32_21 = arith.constant 0 : i32
    %49 = arith.cmpi sgt, %arg1, %c0_i32_21 : i32
    %50 = arith.extui %49 : i1 to i32
    %c0_i32_22 = arith.constant 0 : i32
    %51 = arith.cmpi ne, %50, %c0_i32_22 : i32
    scf.if %51 {
      %c0_23 = arith.constant 0 : index
      %c0_24 = arith.constant 0 : index
      %52 = vector.load %arg6[%c0_23, %c0_24] : memref<8x16xf32, #tpu.memory_space<vmem>>, vector<8x16xf32>
      %53 = arith.addf %52, %45 : vector<8x16xf32>
      %c0_25 = arith.constant 0 : index
      %c0_26 = arith.constant 0 : index
      %54 = vector.load %arg6[%c0_25, %c0_26] : memref<8x16xf32, #tpu.memory_space<vmem>>, vector<8x16xf32>
      tpu.vector_store %arg6[%c0_25, %c0_26], %53 {strides = array<i32>} : memref<8x16xf32, #tpu.memory_space<vmem>>, vector<8x16xf32>,
    } else {
    }
    return
  }
  func.func @transform_0(%arg0: i32, %arg1: i32) -> (i32, i32) {
    %c0_i32 = arith.constant 0 : i32
    %c0_i32_0 = arith.constant 0 : i32
    return %c0_i32, %arg1 : i32, i32
  }
  func.func @transform_1(%arg0: i32, %arg1: i32) -> (i32, i32, i32) {
    %c0_i32 = arith.constant 0 : i32
    %c0_i32_0 = arith.constant 0 : i32
    return %arg0, %c0_i32, %arg1 : i32, i32, i32
  }
  func.func @transform_2(%arg0: i32, %arg1: i32) -> (i32, i32, i32) {
    %c0_i32 = arith.constant 0 : i32
    %c0_i32_0 = arith.constant 0 : i32
    return %arg0, %c0_i32, %arg1 : i32, i32, i32
  }
  func.func @transform_3(%arg0: i32, %arg1: i32) -> (i32, i32, i32) {
    %c0_i32 = arith.constant 0 : i32
    %c0_i32_0 = arith.constant 0 : i32
    %c0_i32_1 = arith.constant 0 : i32
    return %c0_i32, %c0_i32_0, %arg1 : i32, i32, i32
  }
  func.func @transform_4(%arg0: i32, %arg1: i32) -> (i32, i32) {
    %c0_i32 = arith.constant 0 : i32
    %c0_i32_0 = arith.constant 0 : i32
    return %arg0, %c0_i32 : i32, i32
  }
}

module attributes {stable_mosaic.version = 11 : i64} {
  func.func @_lit_emb_kernel(%arg0: i32, %arg1: i32, %arg2: memref<1x8xf32, #tpu.memory_space<vmem>>, %arg3: memref<8x16x8xbf16, #tpu.memory_space<vmem>>, %arg4: memref<8x16x8xbf16, #tpu.memory_space<vmem>>, %arg5: memref<3x16x8xf32, #tpu.memory_space<vmem>>, %arg6: memref<8x16xf32, #tpu.memory_space<vmem>>) attributes {dimension_semantics = [#tpu.dimension_semantics<parallel>, #tpu.dimension_semantics<arbitrary>], iteration_bounds = array<i64: 2, 1>, scalar_prefetch = 0 : i64, scratch_operands = 0 : i64, tpu.core_type = #tpu.core_type<tc>, window_params = [{transform_indices = @transform_0, window_bounds = array<i64: 1, 8>}, {transform_indices = @transform_1, window_bounds = array<i64: 8, 16, 8>}, {transform_indices = @transform_2, window_bounds = array<i64: 8, 16, 8>}, {transform_indices = @transform_3, window_bounds = array<i64: 3, 16, 8>}, {transform_indices = @transform_4, window_bounds = array<i64: 8, 16>}]} {
    %c0 = arith.constant 0 : index
    %c0_0 = arith.constant 0 : index
    %0 = vector.load %arg2[%c0, %c0_0] : memref<1x8xf32, #tpu.memory_space<vmem>>, vector<1x8xf32>
    %c0_1 = arith.constant 0 : index
    %c0_2 = arith.constant 0 : index
    %c0_3 = arith.constant 0 : index
    %1 = vector.load %arg3[%c0_1, %c0_2, %c0_3] : memref<8x16x8xbf16, #tpu.memory_space<vmem>>, vector<8x16x8xbf16>
    %2 = arith.extf %1 : vector<8x16x8xbf16> to vector<8x16x8xf32>
    %c0_4 = arith.constant 0 : index
    %c0_5 = arith.constant 0 : index
    %c0_6 = arith.constant 0 : index
    %3 = vector.load %arg4[%c0_4, %c0_5, %c0_6] : memref<8x16x8xbf16, #tpu.memory_space<vmem>>, vector<8x16x8xbf16>
    %4 = arith.extf %3 : vector<8x16x8xbf16> to vector<8x16x8xf32>
    %c0_7 = arith.constant 0 : index
    %c0_8 = arith.constant 0 : index
    %c0_9 = arith.constant 0 : index
    %5 = vector.load %arg5[%c0_7, %c0_8, %c0_9] : memref<3x16x8xf32, #tpu.memory_space<vmem>>, vector<1x16x8xf32>
    %6 = vector.shape_cast %5 : vector<1x16x8xf32> to vector<16x8xf32>
    %c1 = arith.constant 1 : index
    %c0_10 = arith.constant 0 : index
    %c0_11 = arith.constant 0 : index
    %7 = vector.load %arg5[%c1, %c0_10, %c0_11] : memref<3x16x8xf32, #tpu.memory_space<vmem>>, vector<1x16x8xf32>
    %8 = vector.shape_cast %7 : vector<1x16x8xf32> to vector<16x8xf32>
    %c2 = arith.constant 2 : index
    %c0_12 = arith.constant 0 : index
    %c0_13 = arith.constant 0 : index
    %9 = vector.load %arg5[%c2, %c0_12, %c0_13] : memref<3x16x8xf32, #tpu.memory_space<vmem>>, vector<1x16x8xf32>
    %10 = vector.shape_cast %9 : vector<1x16x8xf32> to vector<16x8xf32>
    %cst = arith.constant 5.000000e-01 : f32
    %11 = vector.broadcast %cst : f32 to vector<8x16x8xf32>
    %12 = arith.cmpf olt, %4, %11 : vector<8x16x8xf32>
    %cst_14 = arith.constant 1.500000e+00 : f32
    %13 = vector.broadcast %cst_14 : f32 to vector<8x16x8xf32>
    %14 = arith.cmpf olt, %4, %13 : vector<8x16x8xf32>
    %15 = vector.shape_cast %8 : vector<16x8xf32> to vector<1x16x8xf32>
    %16 = vector.broadcast %15 : vector<1x16x8xf32> to vector<8x16x8xf32>
    %17 = vector.shape_cast %10 : vector<16x8xf32> to vector<1x16x8xf32>
    %18 = vector.broadcast %17 : vector<1x16x8xf32> to vector<8x16x8xf32>
    %19 = arith.select %14, %16, %18 : vector<8x16x8xi1>, vector<8x16x8xf32>
    %20 = vector.shape_cast %6 : vector<16x8xf32> to vector<1x16x8xf32>
    %21 = vector.broadcast %20 : vector<1x16x8xf32> to vector<8x16x8xf32>
    %22 = arith.select %12, %21, %19 : vector<8x16x8xi1>, vector<8x16x8xf32>
    %23 = arith.mulf %2, %2 : vector<8x16x8xf32>
    %cst_15 = arith.constant dense<0.000000e+00> : vector<8x8xf32>
    %24 = vector.multi_reduction <add>, %23, %cst_15 [1] : vector<8x16x8xf32> to vector<8x8xf32>
    %25 = arith.mulf %22, %22 : vector<8x16x8xf32>
    %cst_16 = arith.constant dense<0.000000e+00> : vector<8x8xf32>
    %26 = vector.multi_reduction <add>, %25, %cst_16 [1] : vector<8x16x8xf32> to vector<8x8xf32>
    %27 = arith.mulf %0, %0 : vector<1x8xf32>
    %28 = vector.broadcast %27 : vector<1x8xf32> to vector<8x8xf32>
    %29 = arith.mulf %28, %24 : vector<8x8xf32>
    %cst_17 = arith.constant 1.000000e-24 : f32
    %30 = vector.broadcast %cst_17 : f32 to vector<8x8xf32>
    %31 = arith.maximumf %29, %30 : vector<8x8xf32>
    %32 = math.rsqrt %31 : vector<8x8xf32>
    %33 = vector.broadcast %0 : vector<1x8xf32> to vector<8x8xf32>
    %34 = arith.mulf %33, %32 : vector<8x8xf32>
    %cst_18 = arith.constant 1.000000e-24 : f32
    %35 = vector.broadcast %cst_18 : f32 to vector<8x8xf32>
    %36 = arith.maximumf %26, %35 : vector<8x8xf32>
    %37 = math.rsqrt %36 : vector<8x8xf32>
    %38 = vector.shape_cast %34 : vector<8x8xf32> to vector<8x1x8xf32>
    %39 = vector.broadcast %38 : vector<8x1x8xf32> to vector<8x16x8xf32>
    %40 = arith.mulf %2, %39 : vector<8x16x8xf32>
    %41 = vector.shape_cast %37 : vector<8x8xf32> to vector<8x1x8xf32>
    %42 = vector.broadcast %41 : vector<8x1x8xf32> to vector<8x16x8xf32>
    %43 = arith.mulf %22, %42 : vector<8x16x8xf32>
    %44 = arith.addf %40, %43 : vector<8x16x8xf32>
    %cst_19 = arith.constant dense<0.000000e+00> : vector<8x16xf32>
    %45 = vector.multi_reduction <add>, %44, %cst_19 [2] : vector<8x16x8xf32> to vector<8x16xf32>
    %c0_i32 = arith.constant 0 : i32
    %46 = arith.cmpi eq, %arg1, %c0_i32 : i32
    %47 = arith.extui %46 : i1 to i32
    %c0_i32_20 = arith.constant 0 : i32
    %48 = arith.cmpi ne, %47, %c0_i32_20 : i32
    scf.if %48 {
      %c0_23 = arith.constant 0 : index
      %c0_24 = arith.constant 0 : index
      %52 = vector.load %arg6[%c0_23, %c0_24] : memref<8x16xf32, #tpu.memory_space<vmem>>, vector<8x16xf32>
      tpu.vector_store %arg6[%c0_23, %c0_24], %45 {strides = array<i32>} : memref<8x16xf32, #tpu.memory_space<vmem>>, vector<8x16xf32>,
    } else {
    }
    %c0_i32_21 = arith.constant 0 : i32
    %49 = arith.cmpi sgt, %arg1, %c0_i32_21 : i32
    %50 = arith.extui %49 : i1 to i32
    %c0_i32_22 = arith.constant 0 : i32
    %51 = arith.cmpi ne, %50, %c0_i32_22 : i32
    scf.if %51 {
      %c0_23 = arith.constant 0 : index
      %c0_24 = arith.constant 0 : index
      %52 = vector.load %arg6[%c0_23, %c0_24] : memref<8x16xf32, #tpu.memory_space<vmem>>, vector<8x16xf32>
      %53 = arith.addf %52, %45 : vector<8x16xf32>
      %c0_25 = arith.constant 0 : index
      %c0_26 = arith.constant 0 : index
      %54 = vector.load %arg6[%c0_25, %c0_26] : memref<8x16xf32, #tpu.memory_space<vmem>>, vector<8x16xf32>
      tpu.vector_store %arg6[%c0_25, %c0_26], %53 {strides = array<i32>} : memref<8x16xf32, #tpu.memory_space<vmem>>, vector<8x16xf32>,
    } else {
    }
    return
  }
  func.func @transform_0(%arg0: i32, %arg1: i32) -> (i32, i32) {
    %c0_i32 = arith.constant 0 : i32
    %c0_i32_0 = arith.constant 0 : i32
    return %c0_i32, %arg1 : i32, i32
  }
  func.func @transform_1(%arg0: i32, %arg1: i32) -> (i32, i32, i32) {
    %c0_i32 = arith.constant 0 : i32
    %c0_i32_0 = arith.constant 0 : i32
    return %arg0, %c0_i32, %arg1 : i32, i32, i32
  }
  func.func @transform_2(%arg0: i32, %arg1: i32) -> (i32, i32, i32) {
    %c0_i32 = arith.constant 0 : i32
    %c0_i32_0 = arith.constant 0 : i32
    return %arg0, %c0_i32, %arg1 : i32, i32, i32
  }
  func.func @transform_3(%arg0: i32, %arg1: i32) -> (i32, i32, i32) {
    %c0_i32 = arith.constant 0 : i32
    %c0_i32_0 = arith.constant 0 : i32
    %c0_i32_1 = arith.constant 0 : i32
    return %c0_i32, %c0_i32_0, %arg1 : i32, i32, i32
  }
  func.func @transform_4(%arg0: i32, %arg1: i32) -> (i32, i32) {
    %c0_i32 = arith.constant 0 : i32
    %c0_i32_0 = arith.constant 0 : i32
    return %arg0, %c0_i32 : i32, i32
  }
}

</mosaic_0001>

<llo_original>
// kernel: tpu_custom_call.1
$region0: #{tpu_custom_call.1}
  #allocation0 [shape = 'u32[]', space=smem, size = 0x4, offset = 0x4, fixed_abs, tag = 'smem constant byte address 0x4 - core index']
  #allocation1 [shape = 'u32[144,128]{1,0:T(1,128)}', space=vmem, size = 0x12000, scoped, tag = 'internal scratch']
  %s0 = inlined_call_operand.vmem [shape: f32[1,8], index: 0, kind: input, shape index: {}]
  %s1 = inlined_call_operand.vmem [shape: bf16[16,16,8], index: 1, kind: input, shape index: {}]
  %s2 = inlined_call_operand.vmem [shape: s8[16,16,8], index: 2, kind: input, shape index: {}]
  %s3 = inlined_call_operand.vmem [shape: f32[3,16,8], index: 3, kind: input, shape index: {}]
  %s4 = inlined_call_operand.hbm [shape: f32[16,16], index: 4, kind: output, shape index: {}]
  %s5 = sld [smem:[#allocation0]]
  $region57: #{tpu_custom_call.1} parent=0
    _
  %s7 = ssub.s32 1, %s5
  %s8 = scalar_select 0, %s7, %s5
  $region1: #{tpu_custom_call.1} parent=0
    #allocation2 [shape = 'u8[8192]{0}', space=vmem, size = 0x2000, scoped, tag = 'output window, operand 0']
    #allocation3 [shape = 's32[2]{0}', space=sflag, size = 0x8, scoped, tag = 'scoped memory for tpu_custom_call.1']
    %9 = vsyncpa [#allocation3], 0
    %s10 = scalar_lea.sflag [#allocation3], 1
    %11 = vsyncpa %s10, 0
    loop: start=0, step=1, limit=4
    $region2: #{tpu_custom_call.1} parent=1 // loop_pre_header
      _
    $region3: #{tpu_custom_call.1} parent=1 // loop_header
      %s13 = sphi 0, %s17
      %p14 = scmp.ge.s32.totalorder %s13, 4
      %s20 = sphi 0, %s32
      %s21 = sphi 0, %s28
      %s22 = sphi 0, %s20
      %s23 = sphi 0, %s21
      %s24 = sphi 0, %s22
      %s25 = sphi 0, %s23
      %s35 = sphi 0, %s37
      %s38 = sphi 0, %s35
      %s39 = sphi 0, %s38
      %s55 = sphi 0, %s39
      %s63 = sphi 0, %s65
      %s66 = sphi 0, %s63
      %s67 = sphi 0, %s66
      %s83 = sphi 0, %s67
      %s91 = sphi 0, %s93
      %s94 = sphi 0, %s91
      %s95 = sphi 0, %s94
      %s111 = sphi 0, %s95
      %s117 = sphi 0, %s119
      %s120 = sphi 0, %s117
      %s121 = sphi 0, %s120
      %s137 = sphi 0, %s121
      %s143 = sphi 0, %s145
      %s146 = sphi 0, %s143
      %s147 = sphi 0, %s146
      %s163 = sphi 0, %s147
    $region4: #{tpu_custom_call.1} parent=1 // loop_header_branch
      %16 = sbr.rel (%p14) target = $region8
    $region5: #{tpu_custom_call.1} parent=1 // loop_body
      %s18 = ssub.s32 %s13, 1
      %s19 = ssub.s32 %s13, 2
      %s26 = sadd.s32 1, %s21
      %p27 = scmp.ge.s32.totalorder %s26, 1
      %s28 = scalar_select %p27, 0, %s26
      %s29 = sadd.s32 1, %s20
      %s30 = scalar_select %p27, %s29, %s20
      %p31 = scmp.ge.s32.totalorder %s30, 2
      %s32 = scalar_select %p31, 0, %s30
      %s33 = ssub.s32 %s21, %s28
      %p34 = scmp.eq.s32.totalorder %s33, 0
      %s36 = sadd.s32 %s35, 1
      %s37 = scalar_select %p34, %s35, %s36
      %p40 = pneg %p34
      %p41 = scmp.eq.s32.totalorder %s13, 1
      %p42 = por %p40, %p41
      %p43 = scmp.ne.s32.totalorder %s35, %s38
      %p44 = scmp.eq.s32.totalorder %s13, 0
      %p45 = por %p43, %p44
      %p46 = scmp.ne.s32.totalorder %s35, %s38
      %p47 = scmp.eq.s32.totalorder %s18, 1
      %p48 = por %p46, %p47
      %p49 = scmp.ne.s32.totalorder %s38, %s39
      %p50 = scmp.eq.s32.totalorder %s18, 0
      %p51 = por %p49, %p50
      %p52 = scmp.ne.s32.totalorder %s38, %s39
      %p53 = scmp.eq.s32.totalorder %s19, 1
      %p54 = por %p52, %p53
      %p56 = scmp.ne.s32.totalorder %s39, %s55
      %p57 = scmp.eq.s32.totalorder %s19, 0
      %p58 = por %p56, %p57
      %s59 = ssub.s32 %s20, %s32
      %s60 = ssub.s32 %s21, %s28
      %s61 = sor.u32 %s59, %s60
      %p62 = scmp.eq.s32.totalorder %s61, 0
      %s64 = sadd.s32 %s63, 1
      %s65 = scalar_select %p62, %s63, %s64
      %p68 = pneg %p62
      %p69 = scmp.eq.s32.totalorder %s13, 1
      %p70 = por %p68, %p69
      %p71 = scmp.ne.s32.totalorder %s63, %s66
      %p72 = scmp.eq.s32.totalorder %s13, 0
      %p73 = por %p71, %p72
      %p74 = scmp.ne.s32.totalorder %s63, %s66
      %p75 = scmp.eq.s32.totalorder %s18, 1
      %p76 = por %p74, %p75
      %p77 = scmp.ne.s32.totalorder %s66, %s67
      %p78 = scmp.eq.s32.totalorder %s18, 0
      %p79 = por %p77, %p78
      %p80 = scmp.ne.s32.totalorder %s66, %s67
      %p81 = scmp.eq.s32.totalorder %s19, 1
      %p82 = por %p80, %p81
      %p84 = scmp.ne.s32.totalorder %s67, %s83
      %p85 = scmp.eq.s32.totalorder %s19, 0
      %p86 = por %p84, %p85
      %s87 = ssub.s32 %s20, %s32
      %s88 = ssub.s32 %s21, %s28
      %s89 = sor.u32 %s87, %s88
      %p90 = scmp.eq.s32.totalorder %s89, 0
      %s92 = sadd.s32 %s91, 1
      %s93 = scalar_select %p90, %s91, %s92
      %p96 = pneg %p90
      %p97 = scmp.eq.s32.totalorder %s13, 1
      %p98 = por %p96, %p97
      %p99 = scmp.ne.s32.totalorder %s91, %s94
      %p100 = scmp.eq.s32.totalorder %s13, 0
      %p101 = por %p99, %p100
      %p102 = scmp.ne.s32.totalorder %s91, %s94
      %p103 = scmp.eq.s32.totalorder %s18, 1
      %p104 = por %p102, %p103
      %p105 = scmp.ne.s32.totalorder %s94, %s95
      %p106 = scmp.eq.s32.totalorder %s18, 0
      %p107 = por %p105, %p106
      %p108 = scmp.ne.s32.totalorder %s94, %s95
      %p109 = scmp.eq.s32.totalorder %s19, 1
      %p110 = por %p108, %p109
      %p112 = scmp.ne.s32.totalorder %s95, %s111
      %p113 = scmp.eq.s32.totalorder %s19, 0
      %p114 = por %p112, %p113
      %s115 = ssub.s32 %s21, %s28
      %p116 = scmp.eq.s32.totalorder %s115, 0
      %s118 = sadd.s32 %s117, 1
      %s119 = scalar_select %p116, %s117, %s118
      %p122 = pneg %p116
      %p123 = scmp.eq.s32.totalorder %s13, 1
      %p124 = por %p122, %p123
      %p125 = scmp.ne.s32.totalorder %s117, %s120
      %p126 = scmp.eq.s32.totalorder %s13, 0
      %p127 = por %p125, %p126
      %p128 = scmp.ne.s32.totalorder %s117, %s120
      %p129 = scmp.eq.s32.totalorder %s18, 1
      %p130 = por %p128, %p129
      %p131 = scmp.ne.s32.totalorder %s120, %s121
      %p132 = scmp.eq.s32.totalorder %s18, 0
      %p133 = por %p131, %p132
      %p134 = scmp.ne.s32.totalorder %s120, %s121
      %p135 = scmp.eq.s32.totalorder %s19, 1
      %p136 = por %p134, %p135
      %p138 = scmp.ne.s32.totalorder %s121, %s137
      %p139 = scmp.eq.s32.totalorder %s19, 0
      %p140 = por %p138, %p139
      %s141 = ssub.s32 %s20, %s32
      %p142 = scmp.eq.s32.totalorder %s141, 0
      %s144 = sadd.s32 %s143, 1
      %s145 = scalar_select %p142, %s143, %s144
      %p148 = pneg %p142
      %p149 = scmp.eq.s32.totalorder %s13, 1
      %p150 = por %p148, %p149
      %p151 = scmp.ne.s32.totalorder %s143, %s146
      %p152 = scmp.eq.s32.totalorder %s13, 0
      %p153 = por %p151, %p152
      %p154 = scmp.ne.s32.totalorder %s143, %s146
      %p155 = scmp.eq.s32.totalorder %s18, 1
      %p156 = por %p154, %p155
      %p157 = scmp.ne.s32.totalorder %s146, %s147
      %p158 = scmp.eq.s32.totalorder %s18, 0
      %p159 = por %p157, %p158
      %p160 = scmp.ne.s32.totalorder %s146, %s147
      %p161 = scmp.eq.s32.totalorder %s19, 1
      %p162 = por %p160, %p161
      %p164 = scmp.ne.s32.totalorder %s147, %s163
      %p165 = scmp.eq.s32.totalorder %s19, 0
      %p166 = por %p164, %p165
      %p167 = scmp.le.s32.totalorder 1, %s13
      %p168 = scmp.lt.s32.totalorder %s13, 3
      %p169 = pnand %p167, %p168
      %p170 = pneg %p169
      // Predicated region
      $region9: #{tpu_custom_call.1} parent=5 // pred_check
        _
      $region10: #{tpu_custom_call.1} parent=5 // pred_check_branch
        %172 = sbr.rel (%p169) target = $region12
      $region11: #{tpu_custom_call.1} parent=5 // pred_region
        %s173 = ssub.s32 %s13, 1
        // Predicated region
        $region13: #{tpu_custom_call.1} parent=11 // pred_check
          %p174 = pneg %p51
        $region14: #{tpu_custom_call.1} parent=11 // pred_check_branch
          %176 = sbr.rel (%p174) target = $region16
        $region15: #{tpu_custom_call.1} parent=11 // pred_region
          %p177 = scmp.lt.s32.totalorder %s23, 0
          %s178 = scalar_select %p177, %s23, 0
          %s179 = scalar_lea.vmem %s0, %s178
        $region16: #{tpu_custom_call.1} parent=11 // pred_fallthru
          _
        // Predicated region
        $region17: #{tpu_custom_call.1} parent=11 // pred_check
          %p180 = pneg %p133
        $region18: #{tpu_custom_call.1} parent=11 // pred_check_branch
          %182 = sbr.rel (%p180) target = $region20
        $region19: #{tpu_custom_call.1} parent=11 // pred_region
          %p183 = scmp.lt.s32.totalorder %s23, 0
          %s184 = scalar_select %p183, %s23, 0
          %s185 = smul.addr %s184, 8
          %s186 = scalar_lea.vmem %s3, %s185
        $region20: #{tpu_custom_call.1} parent=11 // pred_fallthru
          _
      $region12: #{tpu_custom_call.1} parent=5 // pred_fallthru
        _
      %p187 = scmp.lt.s32.totalorder %s13, 2
      // Predicated region
      $region21: #{tpu_custom_call.1} parent=5 // pred_check
        %p188 = pneg %p187
      $region22: #{tpu_custom_call.1} parent=5 // pred_check_branch
        %190 = sbr.rel (%p188) target = $region24
      $region23: #{tpu_custom_call.1} parent=5 // pred_region
        // Predicated region
        $region25: #{tpu_custom_call.1} parent=23 // pred_check
          %p191 = pneg %p73
        $region26: #{tpu_custom_call.1} parent=23 // pred_check_branch
          %193 = sbr.rel (%p191) target = $region28
        $region27: #{tpu_custom_call.1} parent=23 // pred_region
          %s194 = smul.u32 8, %s20
          %p195 = scmp.lt.s32.totalorder %s194, 15
          %s196 = scalar_select %p195, %s194, 15
          %p197 = scmp.lt.s32.totalorder %s21, 0
          %s198 = scalar_select %p197, %s21, 0
          %s199 = smul.addr %s196, 2
          %s200 = sadd.s32 %s198, %s199
          %s201 = smul.addr %s200, 4
          %s202 = scalar_lea.vmem %s1, %s201
          %s203 = smul.u32 8, %s20
        $region28: #{tpu_custom_call.1} parent=23 // pred_fallthru
          _
        // Predicated region
        $region29: #{tpu_custom_call.1} parent=23 // pred_check
          %p204 = pneg %p101
        $region30: #{tpu_custom_call.1} parent=23 // pred_check_branch
          %206 = sbr.rel (%p204) target = $region32
        $region31: #{tpu_custom_call.1} parent=23 // pred_region
          %s207 = smul.u32 8, %s20
          %p208 = scmp.lt.s32.totalorder %s207, 15
          %s209 = scalar_select %p208, %s207, 15
          %p210 = scmp.lt.s32.totalorder %s21, 0
          %s211 = scalar_select %p210, %s21, 0
          %s212 = smul.addr %s209, 2
          %s213 = sadd.s32 %s211, %s212
          %s214 = smul.addr %s213, 2
          %s215 = scalar_lea.vmem %s2, %s214
          %s216 = smul.u32 8, %s20
        $region32: #{tpu_custom_call.1} parent=23 // pred_fallthru
          _
      $region24: #{tpu_custom_call.1} parent=5 // pred_fallthru
        _
      %p217 = scmp.le.s32.totalorder 1, %s13
      %p218 = scmp.lt.s32.totalorder %s13, 3
      %p219 = pnand %p217, %p218
      %p220 = pneg %p219
      // Predicated region
      $region33: #{tpu_custom_call.1} parent=5 // pred_check
        _
      $region34: #{tpu_custom_call.1} parent=5 // pred_check_branch
        %222 = sbr.rel (%p219) target = $region36
      $region35: #{tpu_custom_call.1} parent=5 // pred_region
        %s223 = ssub.s32 %s13, 1
        %p224 = scmp.lt.s32.totalorder %s23, 0
        %s225 = scalar_select %p224, %s23, 0
        %s226 = scalar_lea.vmem %s0, %s225
        %p227 = pneg %p51
        %p228 = pneg %p48
        %s229 = smul.u32 8, %s22
        %p230 = scmp.lt.s32.totalorder %s229, 15
        %s231 = scalar_select %p230, %s229, 15
        %p232 = scmp.lt.s32.totalorder %s23, 0
        %s233 = scalar_select %p232, %s23, 0
        %s234 = smul.addr %s231, 2
        %s235 = sadd.s32 %s233, %s234
        %s236 = smul.addr %s235, 4
        %s237 = scalar_lea.vmem %s1, %s236
        %p238 = pneg %p79
        %p239 = pneg %p76
        %s240 = smul.u32 8, %s22
        %p241 = scmp.lt.s32.totalorder %s240, 15
        %s242 = scalar_select %p241, %s240, 15
        %p243 = scmp.lt.s32.totalorder %s23, 0
        %s244 = scalar_select %p243, %s23, 0
        %s245 = smul.addr %s242, 2
        %s246 = sadd.s32 %s244, %s245
        %s247 = smul.addr %s246, 2
        %s248 = scalar_lea.vmem %s2, %s247
        %p249 = pneg %p107
        %p250 = pneg %p104
        %p251 = scmp.lt.s32.totalorder %s23, 0
        %s252 = scalar_select %p251, %s23, 0
        %s253 = smul.addr %s252, 8
        %s254 = scalar_lea.vmem %s3, %s253
        %p255 = pneg %p133
        %p256 = pneg %p130
        %p257 = pneg %p159
        %p258 = pneg %p156
        %s259 = sand.u32 %s146, 1
        %s260 = scalar_lea.sflag [#allocation3], %s259
        %s261 = sand.u32 %s146, 1
        %s262 = smul.addr %s261, 8
        %s263 = scalar_lea.vmem [#allocation2], %s262
        %p264 = scmp.lt.s32.totalorder %s23, 0
        %s265 = scalar_select %p264, %s23, 0
        %s266 = scalar_lea.vmem %s0, %s265
        %s267 = smul.u32 8, %s22
        %p268 = scmp.lt.s32.totalorder %s267, 15
        %s269 = scalar_select %p268, %s267, 15
        %p270 = scmp.lt.s32.totalorder %s23, 0
        %s271 = scalar_select %p270, %s23, 0
        %s272 = smul.addr %s269, 2
        %s273 = sadd.s32 %s271, %s272
        %s274 = smul.addr %s273, 4
        %s275 = scalar_lea.vmem %s1, %s274
        %s276 = smul.u32 8, %s22
        %s277 = smul.u32 8, %s22
        %p278 = scmp.lt.s32.totalorder %s277, 15
        %s279 = scalar_select %p278, %s277, 15
        %p280 = scmp.lt.s32.totalorder %s23, 0
        %s281 = scalar_select %p280, %s23, 0
        %s282 = smul.addr %s279, 2
        %s283 = sadd.s32 %s281, %s282
        %s284 = smul.addr %s283, 2
        %s285 = scalar_lea.vmem %s2, %s284
        %s286 = smul.u32 8, %s22
        %p287 = scmp.lt.s32.totalorder %s23, 0
        %s288 = scalar_select %p287, %s23, 0
        %s289 = smul.addr %s288, 8
        %s290 = scalar_lea.vmem %s3, %s289
        %v291 = vld [vmem:[%s266] sm:$0x1]
        %v292 = vld [vmem:[%s275] sm:$0xf]
        %v293 = vld [vmem:[%s275 + $0x4] sm:$0xf]
        %v294 = vld [vmem:[%s275 + $0x8] sm:$0xf]
        %v295 = vld [vmem:[%s275 + $0xc] sm:$0xf]
        %v296 = vld [vmem:[%s275 + $0x10] sm:$0xf]
        %v297 = vld [vmem:[%s275 + $0x14] sm:$0xf]
        %v298 = vld [vmem:[%s275 + $0x18] sm:$0xf]
        %v299 = vld [vmem:[%s275 + $0x1c] sm:$0xf]
        %v300 = vld [vmem:[%s275 + $0x20] sm:$0xf]
        %v301 = vld [vmem:[%s275 + $0x24] sm:$0xf]
        %v302 = vld [vmem:[%s275 + $0x28] sm:$0xf]
        %v303 = vld [vmem:[%s275 + $0x2c] sm:$0xf]
        %v304 = vld [vmem:[%s275 + $0x30] sm:$0xf]
        %v305 = vld [vmem:[%s275 + $0x34] sm:$0xf]
        %v306 = vld [vmem:[%s275 + $0x38] sm:$0xf]
        %v307 = vld [vmem:[%s275 + $0x3c] sm:$0xf]
        %v308 = vunpack.c.l.bf16 %v292
        %v309 = vunpack.c.l.bf16 %v293
        %v310 = vunpack.c.l.bf16 %v294
        %v311 = vunpack.c.l.bf16 %v295
        %v312 = vunpack.c.l.bf16 %v296
        %v313 = vunpack.c.l.bf16 %v297
        %v314 = vunpack.c.l.bf16 %v298
        %v315 = vunpack.c.l.bf16 %v299
        %v316 = vunpack.c.l.bf16 %v300
        %v317 = vunpack.c.l.bf16 %v301
        %v318 = vunpack.c.l.bf16 %v302
        %v319 = vunpack.c.l.bf16 %v303
        %v320 = vunpack.c.l.bf16 %v304
        %v321 = vunpack.c.l.bf16 %v305
        %v322 = vunpack.c.l.bf16 %v306
        %v323 = vunpack.c.l.bf16 %v307
        %v324 = vld [vmem:[%s285] sm:$0x3]
        %v325 = vld [vmem:[%s285 + $0x2] sm:$0x3]
        %v326 = vld [vmem:[%s285 + $0x4] sm:$0x3]
        %v327 = vld [vmem:[%s285 + $0x6] sm:$0x3]
        %v328 = vld [vmem:[%s285 + $0x8] sm:$0x3]
        %v329 = vld [vmem:[%s285 + $0xa] sm:$0x3]
        %v330 = vld [vmem:[%s285 + $0xc] sm:$0x3]
        %v331 = vld [vmem:[%s285 + $0xe] sm:$0x3]
        %v332 = vld [vmem:[%s285 + $0x10] sm:$0x3]
        %v333 = vld [vmem:[%s285 + $0x12] sm:$0x3]
        %v334 = vld [vmem:[%s285 + $0x14] sm:$0x3]
        %v335 = vld [vmem:[%s285 + $0x16] sm:$0x3]
        %v336 = vld [vmem:[%s285 + $0x18] sm:$0x3]
        %v337 = vld [vmem:[%s285 + $0x1a] sm:$0x3]
        %v338 = vld [vmem:[%s285 + $0x1c] sm:$0x3]
        %v339 = vld [vmem:[%s285 + $0x1e] sm:$0x3]
        %v340 = vunpack.c.0.s8 %v324
        %v341 = vunpack.c.0.s8 %v325
        %v342 = vunpack.c.0.s8 %v326
        %v343 = vunpack.c.0.s8 %v327
        %v344 = vunpack.c.0.s8 %v328
        %v345 = vunpack.c.0.s8 %v329
        %v346 = vunpack.c.0.s8 %v330
        %v347 = vunpack.c.0.s8 %v331
        %v348 = vunpack.c.0.s8 %v332
        %v349 = vunpack.c.0.s8 %v333
        %v350 = vunpack.c.0.s8 %v334
        %v351 = vunpack.c.0.s8 %v335
        %v352 = vunpack.c.0.s8 %v336
        %v353 = vunpack.c.0.s8 %v337
        %v354 = vunpack.c.0.s8 %v338
        %v355 = vunpack.c.0.s8 %v339
        %v356 = vcvt.s32.f32 %v340
        %v357 = vcvt.s32.f32 %v341
        %v358 = vcvt.s32.f32 %v342
        %v359 = vcvt.s32.f32 %v343
        %v360 = vcvt.s32.f32 %v344
        %v361 = vcvt.s32.f32 %v345
        %v362 = vcvt.s32.f32 %v346
        %v363 = vcvt.s32.f32 %v347
        %v364 = vcvt.s32.f32 %v348
        %v365 = vcvt.s32.f32 %v349
        %v366 = vcvt.s32.f32 %v350
        %v367 = vcvt.s32.f32 %v351
        %v368 = vcvt.s32.f32 %v352
        %v369 = vcvt.s32.f32 %v353
        %v370 = vcvt.s32.f32 %v354
        %v371 = vcvt.s32.f32 %v355
        %v372 = vld [vmem:[%s290] sm:$0xff]
        %v373 = vld [vmem:[%s290 + $0x8] sm:$0xff]
        %s374 = scalar_lea.vmem %s290, 16
        %v375 = vld [vmem:[%s374] sm:$0xff]
        %v376 = vld [vmem:[%s374 + $0x8] sm:$0xff]
        %s377 = scalar_lea.vmem %s290, 32
        %v378 = vld [vmem:[%s377] sm:$0xff]
        %v379 = vld [vmem:[%s377 + $0x8] sm:$0xff]
        %vm380 = vcmp.lt.f32.partialorder %v356, 0.5
        %vm381 = vcmp.lt.f32.partialorder %v357, 0.5
        %vm382 = vcmp.lt.f32.partialorder %v358, 0.5
        %vm383 = vcmp.lt.f32.partialorder %v359, 0.5
        %vm384 = vcmp.lt.f32.partialorder %v360, 0.5
        %vm385 = vcmp.lt.f32.partialorder %v361, 0.5
        %vm386 = vcmp.lt.f32.partialorder %v362, 0.5
        %vm387 = vcmp.lt.f32.partialorder %v363, 0.5
        %vm388 = vcmp.lt.f32.partialorder %v364, 0.5
        %vm389 = vcmp.lt.f32.partialorder %v365, 0.5
        %vm390 = vcmp.lt.f32.partialorder %v366, 0.5
        %vm391 = vcmp.lt.f32.partialorder %v367, 0.5
        %vm392 = vcmp.lt.f32.partialorder %v368, 0.5
        %vm393 = vcmp.lt.f32.partialorder %v369, 0.5
        %vm394 = vcmp.lt.f32.partialorder %v370, 0.5
        %vm395 = vcmp.lt.f32.partialorder %v371, 0.5
        %vm396 = vcmp.lt.f32.partialorder %v356, 1.5
        %vm397 = vcmp.lt.f32.partialorder %v357, 1.5
        %vm398 = vcmp.lt.f32.partialorder %v358, 1.5
        %vm399 = vcmp.lt.f32.partialorder %v359, 1.5
        %vm400 = vcmp.lt.f32.partialorder %v360, 1.5
        %vm401 = vcmp.lt.f32.partialorder %v361, 1.5
        %vm402 = vcmp.lt.f32.partialorder %v362, 1.5
        %vm403 = vcmp.lt.f32.partialorder %v363, 1.5
        %vm404 = vcmp.lt.f32.partialorder %v364, 1.5
        %vm405 = vcmp.lt.f32.partialorder %v365, 1.5
        %vm406 = vcmp.lt.f32.partialorder %v366, 1.5
        %vm407 = vcmp.lt.f32.partialorder %v367, 1.5
        %vm408 = vcmp.lt.f32.partialorder %v368, 1.5
        %vm409 = vcmp.lt.f32.partialorder %v369, 1.5
        %vm410 = vcmp.lt.f32.partialorder %v370, 1.5
        %vm411 = vcmp.lt.f32.partialorder %v371, 1.5
        %v412 = vsel %vm396, %v375, %v378
        %v413 = vsel %vm397, %v376, %v379
        %v414 = vsel %vm398, %v375, %v378
        %v415 = vsel %vm399, %v376, %v379
        %v416 = vsel %vm400, %v375, %v378
        %v417 = vsel %vm401, %v376, %v379
        %v418 = vsel %vm402, %v375, %v378
        %v419 = vsel %vm403, %v376, %v379
        %v420 = vsel %vm404, %v375, %v378
        %v421 = vsel %vm405, %v376, %v379
        %v422 = vsel %vm406, %v375, %v378
        %v423 = vsel %vm407, %v376, %v379
        %v424 = vsel %vm408, %v375, %v378
        %v425 = vsel %vm409, %v376, %v379
        %v426 = vsel %vm410, %v375, %v378
        %v427 = vsel %vm411, %v376, %v379
        %v428 = vsel %vm380, %v372, %v412
        %v429 = vsel %vm381, %v373, %v413
        %v430 = vsel %vm382, %v372, %v414
        %v431 = vsel %vm383, %v373, %v415
        %v432 = vsel %vm384, %v372, %v416
        %v433 = vsel %vm385, %v373, %v417
        %v434 = vsel %vm386, %v372, %v418
        %v435 = vsel %vm387, %v373, %v419
        %v436 = vsel %vm388, %v372, %v420
        %v437 = vsel %vm389, %v373, %v421
        %v438 = vsel %vm390, %v372, %v422
        %v439 = vsel %vm391, %v373, %v423
        %v440 = vsel %vm392, %v372, %v424
        %v441 = vsel %vm393, %v373, %v425
        %v442 = vsel %vm394, %v372, %v426
        %v443 = vsel %vm395, %v373, %v427
        %v444 = vmul.f32 %v308, %v308
        %v445 = vmul.f32 %v309, %v309
        %v446 = vmul.f32 %v310, %v310
        %v447 = vmul.f32 %v311, %v311
        %v448 = vmul.f32 %v312, %v312
        %v449 = vmul.f32 %v313, %v313
        %v450 = vmul.f32 %v314, %v314
        %v451 = vmul.f32 %v315, %v315
        %v452 = vmul.f32 %v316, %v316
        %v453 = vmul.f32 %v317, %v317
        %v454 = vmul.f32 %v318, %v318
        %v455 = vmul.f32 %v319, %v319
        %v456 = vmul.f32 %v320, %v320
        %v457 = vmul.f32 %v321, %v321
        %v458 = vmul.f32 %v322, %v322
        %v459 = vmul.f32 %v323, %v323
        %vm460 = vcmask 64512
        %v461 = vsel %vm460, %v444, 0.0
        %v462 = vsel %vm460, %v445, 0.0
        %v463 = vadd.f32 %v461, %v462
        %v464 = vrot.slane %v463, 4
        %v465 = vadd.f32 %v463, %v464
        %v466 = vrot.slane %v465, 2
        %v467 = vadd.f32 %v465, %v466
        %v468 = vrot.slane %v467, 1
        %v469 = vadd.f32 %v467, %v468
        %v470 = vsel %vm460, %v446, 0.0
        %v471 = vsel %vm460, %v447, 0.0
        %v472 = vadd.f32 %v470, %v471
        %v473 = vrot.slane %v472, 4
        %v474 = vadd.f32 %v472, %v473
        %v475 = vrot.slane %v474, 2
        %v476 = vadd.f32 %v474, %v475
        %v477 = vrot.slane %v476, 1
        %v478 = vadd.f32 %v476, %v477
        %v479 = vsel %vm460, %v448, 0.0
        %v480 = vsel %vm460, %v449, 0.0
        %v481 = vadd.f32 %v479, %v480
        %v482 = vrot.slane %v481, 4
        %v483 = vadd.f32 %v481, %v482
        %v484 = vrot.slane %v483, 2
        %v485 = vadd.f32 %v483, %v484
        %v486 = vrot.slane %v485, 1
        %v487 = vadd.f32 %v485, %v486
        %v488 = vsel %vm460, %v450, 0.0
        %v489 = vsel %vm460, %v451, 0.0
        %v490 = vadd.f32 %v488, %v489
        %v491 = vrot.slane %v490, 4
        %v492 = vadd.f32 %v490, %v491
        %v493 = vrot.slane %v492, 2
        %v494 = vadd.f32 %v492, %v493
        %v495 = vrot.slane %v494, 1
        %v496 = vadd.f32 %v494, %v495
        %v497 = vsel %vm460, %v452, 0.0
        %v498 = vsel %vm460, %v453, 0.0
        %v499 = vadd.f32 %v497, %v498
        %v500 = vrot.slane %v499, 4
        %v501 = vadd.f32 %v499, %v500
        %v502 = vrot.slane %v501, 2
        %v503 = vadd.f32 %v501, %v502
        %v504 = vrot.slane %v503, 1
        %v505 = vadd.f32 %v503, %v504
        %v506 = vsel %vm460, %v454, 0.0
        %v507 = vsel %vm460, %v455, 0.0
        %v508 = vadd.f32 %v506, %v507
        %v509 = vrot.slane %v508, 4
        %v510 = vadd.f32 %v508, %v509
        %v511 = vrot.slane %v510, 2
        %v512 = vadd.f32 %v510, %v511
        %v513 = vrot.slane %v512, 1
        %v514 = vadd.f32 %v512, %v513
        %v515 = vsel %vm460, %v456, 0.0
        %v516 = vsel %vm460, %v457, 0.0
        %v517 = vadd.f32 %v515, %v516
        %v518 = vrot.slane %v517, 4
        %v519 = vadd.f32 %v517, %v518
        %v520 = vrot.slane %v519, 2
        %v521 = vadd.f32 %v519, %v520
        %v522 = vrot.slane %v521, 1
        %v523 = vadd.f32 %v521, %v522
        %v524 = vsel %vm460, %v458, 0.0
        %v525 = vsel %vm460, %v459, 0.0
        %v526 = vadd.f32 %v524, %v525
        %v527 = vrot.slane %v526, 4
        %v528 = vadd.f32 %v526, %v527
        %v529 = vrot.slane %v528, 2
        %v530 = vadd.f32 %v528, %v529
        %v531 = vrot.slane %v530, 1
        %v532 = vadd.f32 %v530, %v531
        %v533 = vmul.f32 %v428, %v428
        %v534 = vmul.f32 %v429, %v429
        %v535 = vmul.f32 %v430, %v430
        %v536 = vmul.f32 %v431, %v431
        %v537 = vmul.f32 %v432, %v432
        %v538 = vmul.f32 %v433, %v433
        %v539 = vmul.f32 %v434, %v434
        %v540 = vmul.f32 %v435, %v435
        %v541 = vmul.f32 %v436, %v436
        %v542 = vmul.f32 %v437, %v437
        %v543 = vmul.f32 %v438, %v438
        %v544 = vmul.f32 %v439, %v439
        %v545 = vmul.f32 %v440, %v440
        %v546 = vmul.f32 %v441, %v441
        %v547 = vmul.f32 %v442, %v442
        %v548 = vmul.f32 %v443, %v443
        %v549 = vsel %vm460, %v533, 0.0
        %v550 = vsel %vm460, %v534, 0.0
        %v551 = vadd.f32 %v549, %v550
        %v552 = vrot.slane %v551, 4
        %v553 = vadd.f32 %v551, %v552
        %v554 = vrot.slane %v553, 2
        %v555 = vadd.f32 %v553, %v554
        %v556 = vrot.slane %v555, 1
        %v557 = vadd.f32 %v555, %v556
        %v558 = vsel %vm460, %v535, 0.0
        %v559 = vsel %vm460, %v536, 0.0
        %v560 = vadd.f32 %v558, %v559
        %v561 = vrot.slane %v560, 4
        %v562 = vadd.f32 %v560, %v561
        %v563 = vrot.slane %v562, 2
        %v564 = vadd.f32 %v562, %v563
        %v565 = vrot.slane %v564, 1
        %v566 = vadd.f32 %v564, %v565
        %v567 = vsel %vm460, %v537, 0.0
        %v568 = vsel %vm460, %v538, 0.0
        %v569 = vadd.f32 %v567, %v568
        %v570 = vrot.slane %v569, 4
        %v571 = vadd.f32 %v569, %v570
        %v572 = vrot.slane %v571, 2
        %v573 = vadd.f32 %v571, %v572
        %v574 = vrot.slane %v573, 1
        %v575 = vadd.f32 %v573, %v574
        %v576 = vsel %vm460, %v539, 0.0
        %v577 = vsel %vm460, %v540, 0.0
        %v578 = vadd.f32 %v576, %v577
        %v579 = vrot.slane %v578, 4
        %v580 = vadd.f32 %v578, %v579
        %v581 = vrot.slane %v580, 2
        %v582 = vadd.f32 %v580, %v581
        %v583 = vrot.slane %v582, 1
        %v584 = vadd.f32 %v582, %v583
        %v585 = vsel %vm460, %v541, 0.0
        %v586 = vsel %vm460, %v542, 0.0
        %v587 = vadd.f32 %v585, %v586
        %v588 = vrot.slane %v587, 4
        %v589 = vadd.f32 %v587, %v588
        %v590 = vrot.slane %v589, 2
        %v591 = vadd.f32 %v589, %v590
        %v592 = vrot.slane %v591, 1
        %v593 = vadd.f32 %v591, %v592
        %v594 = vsel %vm460, %v543, 0.0
        %v595 = vsel %vm460, %v544, 0.0
        %v596 = vadd.f32 %v594, %v595
        %v597 = vrot.slane %v596, 4
        %v598 = vadd.f32 %v596, %v597
        %v599 = vrot.slane %v598, 2
        %v600 = vadd.f32 %v598, %v599
        %v601 = vrot.slane %v600, 1
        %v602 = vadd.f32 %v600, %v601
        %v603 = vsel %vm460, %v545, 0.0
        %v604 = vsel %vm460, %v546, 0.0
        %v605 = vadd.f32 %v603, %v604
        %v606 = vrot.slane %v605, 4
        %v607 = vadd.f32 %v605, %v606
        %v608 = vrot.slane %v607, 2
        %v609 = vadd.f32 %v607, %v608
        %v610 = vrot.slane %v609, 1
        %v611 = vadd.f32 %v609, %v610
        %v612 = vsel %vm460, %v547, 0.0
        %v613 = vsel %vm460, %v548, 0.0
        %v614 = vadd.f32 %v612, %v613
        %v615 = vrot.slane %v614, 4
        %v616 = vadd.f32 %v614, %v615
        %v617 = vrot.slane %v616, 2
        %v618 = vadd.f32 %v616, %v617
        %v619 = vrot.slane %v618, 1
        %v620 = vadd.f32 %v618, %v619
        %v621 = vmul.f32 %v291, %v291
        %v623 = vlaneseq
        %v624 = vshrl.u32 %v623, 7
        %v625 = vsub.s32 0, %v624
        %v626 = vrot.slane %v621, %v625
        %vm636 = vcmask 1041409
        %v637 = vsel %vm636, %v478, %v469
        %vm638 = vcmask 1042434
        %v639 = vsel %vm638, %v487, %v637
        %vm640 = vcmask 1043459
        %v641 = vsel %vm640, %v496, %v639
        %vm642 = vcmask 1044484
        %v643 = vsel %vm642, %v505, %v641
        %vm644 = vcmask 1045509
        %v645 = vsel %vm644, %v514, %v643
        %vm646 = vcmask 1046534
        %v647 = vsel %vm646, %v523, %v645
        %vm648 = vcmask 1047559
        %v649 = vsel %vm648, %v532, %v647
        %v651 = vmul.f32 %v626, %v649
        %v652 = vmax.f32 %v651, 1e-24
        %v653 = vrsqrt.pop %v652
        %v655 = vlaneseq
        %v656 = vshrl.u32 %v655, 7
        %v657 = vsub.s32 0, %v656
        %v658 = vrot.slane %v291, %v657
        %v660 = vmul.f32 %v658, %v653
        %v661 = vmax.f32 %v557, 1e-24
        %v662 = vmax.f32 %v566, 1e-24
        %v663 = vmax.f32 %v575, 1e-24
        %v664 = vmax.f32 %v584, 1e-24
        %v665 = vmax.f32 %v593, 1e-24
        %v666 = vmax.f32 %v602, 1e-24
        %v667 = vmax.f32 %v611, 1e-24
        %v668 = vmax.f32 %v620, 1e-24
        %v669 = vrsqrt.pop %v661
        %v670 = vrsqrt.pop %v662
        %v671 = vrsqrt.pop %v663
        %v672 = vrsqrt.pop %v664
        %v673 = vrsqrt.pop %v665
        %v674 = vrsqrt.pop %v666
        %v675 = vrsqrt.pop %v667
        %v676 = vrsqrt.pop %v668
        %v678 = vcombine.high %v660, %v660
        %v680 = vunpack.c.l.s4 1966171168
        %v681 = vunpack.c.0.s8 %v680
        %v682 = vlaneseq
        %v683 = vshrl.u32 %v682, 7
        %v684 = vsub.s32 %v681, %v683
        %v685 = vrot.slane %v660, %v684
        %v687 = vunpack.c.l.s4 1966171168
        %v688 = vunpack.c.0.s8 %v687
        %v689 = vlaneseq
        %v690 = vshrl.u32 %v689, 7
        %v691 = vsub.s32 %v688, %v690
        %v692 = vrot.slane %v678, %v691
        %v693 = vcombine.high %v685, %v685
        %v694 = vcombine.high %v692, %v692
        %v696 = vunpack.c.l.s4 1966171168
        %v697 = vunpack.c.0.s8 %v696
        %v698 = vlaneseq
        %v699 = vshrl.u32 %v698, 7
        %v700 = vsub.s32 %v697, %v699
        %v701 = vrot.slane %v685, %v700
        %v703 = vunpack.c.l.s4 1966171168
        %v704 = vunpack.c.0.s8 %v703
        %v705 = vlaneseq
        %v706 = vshrl.u32 %v705, 7
        %v707 = vsub.s32 %v704, %v706
        %v708 = vrot.slane %v692, %v707
        %v710 = vunpack.c.l.s4 1966171168
        %v711 = vunpack.c.0.s8 %v710
        %v712 = vlaneseq
        %v713 = vshrl.u32 %v712, 7
        %v714 = vsub.s32 %v711, %v713
        %v715 = vrot.slane %v693, %v714
        %v717 = vunpack.c.l.s4 1966171168
        %v718 = vunpack.c.0.s8 %v717
        %v719 = vlaneseq
        %v720 = vshrl.u32 %v719, 7
        %v721 = vsub.s32 %v718, %v720
        %v722 = vrot.slane %v694, %v721
        %v723 = vcombine.high %v701, %v701
        %v724 = vcombine.high %v708, %v708
        %v725 = vcombine.high %v715, %v715
        %v726 = vcombine.high %v722, %v722
        %v727 = vlaneseq
        %v728 = vshrl.u32 %v727, 7
        %v729 = vsub.s32 0, %v728
        %v730 = vrot.slane %v701, %v729
        %v731 = vlaneseq
        %v732 = vshrl.u32 %v731, 7
        %v733 = vsub.s32 0, %v732
        %v734 = vrot.slane %v715, %v733
        %v735 = vlaneseq
        %v736 = vshrl.u32 %v735, 7
        %v737 = vsub.s32 0, %v736
        %v738 = vrot.slane %v723, %v737
        %v739 = vlaneseq
        %v740 = vshrl.u32 %v739, 7
        %v741 = vsub.s32 0, %v740
        %v742 = vrot.slane %v725, %v741
        %v743 = vlaneseq
        %v744 = vshrl.u32 %v743, 7
        %v745 = vsub.s32 0, %v744
        %v746 = vrot.slane %v708, %v745
        %v747 = vlaneseq
        %v748 = vshrl.u32 %v747, 7
        %v749 = vsub.s32 0, %v748
        %v750 = vrot.slane %v722, %v749
        %v751 = vlaneseq
        %v752 = vshrl.u32 %v751, 7
        %v753 = vsub.s32 0, %v752
        %v754 = vrot.slane %v724, %v753
        %v755 = vlaneseq
        %v756 = vshrl.u32 %v755, 7
        %v757 = vsub.s32 0, %v756
        %v758 = vrot.slane %v726, %v757
        %v767 = vmul.f32 %v308, %v730
        %v768 = vmul.f32 %v309, %v730
        %v769 = vmul.f32 %v310, %v734
        %v770 = vmul.f32 %v311, %v734
        %v771 = vmul.f32 %v312, %v738
        %v772 = vmul.f32 %v313, %v738
        %v773 = vmul.f32 %v314, %v742
        %v774 = vmul.f32 %v315, %v742
        %v775 = vmul.f32 %v316, %v746
        %v776 = vmul.f32 %v317, %v746
        %v777 = vmul.f32 %v318, %v750
        %v778 = vmul.f32 %v319, %v750
        %v779 = vmul.f32 %v320, %v754
        %v780 = vmul.f32 %v321, %v754
        %v781 = vmul.f32 %v322, %v758
        %v782 = vmul.f32 %v323, %v758
        %v783 = vmul.f32 %v428, %v669
        %v784 = vmul.f32 %v429, %v669
        %v785 = vmul.f32 %v430, %v670
        %v786 = vmul.f32 %v431, %v670
        %v787 = vmul.f32 %v432, %v671
        %v788 = vmul.f32 %v433, %v671
        %v789 = vmul.f32 %v434, %v672
        %v790 = vmul.f32 %v435, %v672
        %v791 = vmul.f32 %v436, %v673
        %v792 = vmul.f32 %v437, %v673
        %v793 = vmul.f32 %v438, %v674
        %v794 = vmul.f32 %v439, %v674
        %v795 = vmul.f32 %v440, %v675
        %v796 = vmul.f32 %v441, %v675
        %v797 = vmul.f32 %v442, %v676
        %v798 = vmul.f32 %v443, %v676
        %v799 = vadd.f32 %v767, %v783
        %v800 = vadd.f32 %v768, %v784
        %v801 = vadd.f32 %v769, %v785
        %v802 = vadd.f32 %v770, %v786
        %v803 = vadd.f32 %v771, %v787
        %v804 = vadd.f32 %v772, %v788
        %v805 = vadd.f32 %v773, %v789
        %v806 = vadd.f32 %v774, %v790
        %v807 = vadd.f32 %v775, %v791
        %v808 = vadd.f32 %v776, %v792
        %v809 = vadd.f32 %v777, %v793
        %v810 = vadd.f32 %v778, %v794
        %v811 = vadd.f32 %v779, %v795
        %v812 = vadd.f32 %v780, %v796
        %v813 = vadd.f32 %v781, %v797
        %v814 = vadd.f32 %v782, %v798
        %v815 = vsel %vm460, %v799, 0.0
        %816 = vadd.xlane.f32.xlu0 %v815
        %v817 = vpop.xlane.xlu0 %816
        %v818 = vsel %vm460, %v800, 0.0
        %819 = vadd.xlane.f32.xlu0 %v818
        %v820 = vpop.xlane.xlu0 %819
        %v821 = vsel %vm460, %v801, 0.0
        %822 = vadd.xlane.f32.xlu0 %v821
        %v823 = vpop.xlane.xlu0 %822
        %v824 = vsel %vm460, %v802, 0.0
        %825 = vadd.xlane.f32.xlu0 %v824
        %v826 = vpop.xlane.xlu0 %825
        %v827 = vsel %vm460, %v803, 0.0
        %828 = vadd.xlane.f32.xlu0 %v827
        %v829 = vpop.xlane.xlu0 %828
        %v830 = vsel %vm460, %v804, 0.0
        %831 = vadd.xlane.f32.xlu0 %v830
        %v832 = vpop.xlane.xlu0 %831
        %v833 = vsel %vm460, %v805, 0.0
        %834 = vadd.xlane.f32.xlu0 %v833
        %v835 = vpop.xlane.xlu0 %834
        %v836 = vsel %vm460, %v806, 0.0
        %837 = vadd.xlane.f32.xlu0 %v836
        %v838 = vpop.xlane.xlu0 %837
        %v839 = vsel %vm460, %v807, 0.0
        %840 = vadd.xlane.f32.xlu0 %v839
        %v841 = vpop.xlane.xlu0 %840
        %v842 = vsel %vm460, %v808, 0.0
        %843 = vadd.xlane.f32.xlu0 %v842
        %v844 = vpop.xlane.xlu0 %843
        %v845 = vsel %vm460, %v809, 0.0
        %846 = vadd.xlane.f32.xlu0 %v845
        %v847 = vpop.xlane.xlu0 %846
        %v848 = vsel %vm460, %v810, 0.0
        %849 = vadd.xlane.f32.xlu0 %v848
        %v850 = vpop.xlane.xlu0 %849
        %v851 = vsel %vm460, %v811, 0.0
        %852 = vadd.xlane.f32.xlu0 %v851
        %v853 = vpop.xlane.xlu0 %852
        %v854 = vsel %vm460, %v812, 0.0
        %855 = vadd.xlane.f32.xlu0 %v854
        %v856 = vpop.xlane.xlu0 %855
        %v857 = vsel %vm460, %v813, 0.0
        %858 = vadd.xlane.f32.xlu0 %v857
        %v859 = vpop.xlane.xlu0 %858
        %v860 = vsel %vm460, %v814, 0.0
        %861 = vadd.xlane.f32.xlu0 %v860
        %v862 = vpop.xlane.xlu0 %861
        %p863 = scmp.eq.s32.totalorder %s23, 0
        // Predicated region
        $region37: #{tpu_custom_call.1} parent=35 // pred_check
          %p864 = pneg %p863
        $region38: #{tpu_custom_call.1} parent=35 // pred_check_branch
          %866 = sbr.rel (%p864) target = $region40
        $region39: #{tpu_custom_call.1} parent=35 // pred_region
          %v883 = vlaneseq
          %v884 = vand.u32 %v883, 127
          %v885 = vlaneseq
          %v886 = vshrl.u32 %v885, 7
          %v887 = vsub.s32 %v884, %v886
          %v888 = vrot.slane %v817, %v887
          %v889 = vadd.s32 %v884, 4294967288
          %v890 = vlaneseq
          %v891 = vshrl.u32 %v890, 7
          %v892 = vsub.s32 %v889, %v891
          %v893 = vrot.slane %v820, %v892
          %vm894 = vcmask 130112
          %v895 = vsel %vm894, %v893, %v888
          %v896 = vlaneseq
          %v897 = vshrl.u32 %v896, 7
          %v898 = vsub.s32 %v884, %v897
          %v899 = vrot.slane %v823, %v898
          %v900 = vlaneseq
          %v901 = vshrl.u32 %v900, 7
          %v902 = vsub.s32 %v889, %v901
          %v903 = vrot.slane %v826, %v902
          %v904 = vsel %vm894, %v903, %v899
          %v905 = vlaneseq
          %v906 = vshrl.u32 %v905, 7
          %v907 = vsub.s32 %v884, %v906
          %v908 = vrot.slane %v829, %v907
          %v909 = vlaneseq
          %v910 = vshrl.u32 %v909, 7
          %v911 = vsub.s32 %v889, %v910
          %v912 = vrot.slane %v832, %v911
          %v913 = vsel %vm894, %v912, %v908
          %v914 = vlaneseq
          %v915 = vshrl.u32 %v914, 7
          %v916 = vsub.s32 %v884, %v915
          %v917 = vrot.slane %v835, %v916
          %v918 = vlaneseq
          %v919 = vshrl.u32 %v918, 7
          %v920 = vsub.s32 %v889, %v919
          %v921 = vrot.slane %v838, %v920
          %v922 = vsel %vm894, %v921, %v917
          %v923 = vlaneseq
          %v924 = vshrl.u32 %v923, 7
          %v925 = vsub.s32 %v884, %v924
          %v926 = vrot.slane %v841, %v925
          %v927 = vlaneseq
          %v928 = vshrl.u32 %v927, 7
          %v929 = vsub.s32 %v889, %v928
          %v930 = vrot.slane %v844, %v929
          %v931 = vsel %vm894, %v930, %v926
          %v932 = vlaneseq
          %v933 = vshrl.u32 %v932, 7
          %v934 = vsub.s32 %v884, %v933
          %v935 = vrot.slane %v847, %v934
          %v936 = vlaneseq
          %v937 = vshrl.u32 %v936, 7
          %v938 = vsub.s32 %v889, %v937
          %v939 = vrot.slane %v850, %v938
          %v940 = vsel %vm894, %v939, %v935
          %v941 = vlaneseq
          %v942 = vshrl.u32 %v941, 7
          %v943 = vsub.s32 %v884, %v942
          %v944 = vrot.slane %v853, %v943
          %v945 = vlaneseq
          %v946 = vshrl.u32 %v945, 7
          %v947 = vsub.s32 %v889, %v946
          %v948 = vrot.slane %v856, %v947
          %v949 = vsel %vm894, %v948, %v944
          %v950 = vlaneseq
          %v951 = vshrl.u32 %v950, 7
          %v952 = vsub.s32 %v884, %v951
          %v953 = vrot.slane %v859, %v952
          %v954 = vlaneseq
          %v955 = vshrl.u32 %v954, 7
          %v956 = vsub.s32 %v889, %v955
          %v957 = vrot.slane %v862, %v956
          %v958 = vsel %vm894, %v957, %v953
          %v959 = vsel %vm636, %v904, %v895
          %v960 = vsel %vm638, %v913, %v959
          %v961 = vsel %vm640, %v922, %v960
          %v962 = vsel %vm642, %v931, %v961
          %v963 = vsel %vm644, %v940, %v962
          %v964 = vsel %vm646, %v949, %v963
          %v965 = vsel %vm648, %v958, %v964
          %vm967 = vcmask 130048
          %968 = vst.msk [vmem:[%s263] sm:$0xff] %vm967, %v965
        $region40: #{tpu_custom_call.1} parent=35 // pred_fallthru
          _
        %p969 = scmp.gt.s32.totalorder %s23, 0
        // Predicated region
        $region41: #{tpu_custom_call.1} parent=35 // pred_check
          %p970 = pneg %p969
        $region42: #{tpu_custom_call.1} parent=35 // pred_check_branch
          %972 = sbr.rel (%p970) target = $region44
        $region43: #{tpu_custom_call.1} parent=35 // pred_region
          %v973 = vld [vmem:[%s263] sm:$0xff]
          %v990 = vlaneseq
          %v991 = vand.u32 %v990, 127
          %v992 = vlaneseq
          %v993 = vshrl.u32 %v992, 7
          %v994 = vsub.s32 %v991, %v993
          %v995 = vrot.slane %v817, %v994
          %v996 = vadd.s32 %v991, 4294967288
          %v997 = vlaneseq
          %v998 = vshrl.u32 %v997, 7
          %v999 = vsub.s32 %v996, %v998
          %v1000 = vrot.slane %v820, %v999
          %vm1001 = vcmask 130112
          %v1002 = vsel %vm1001, %v1000, %v995
          %v1003 = vlaneseq
          %v1004 = vshrl.u32 %v1003, 7
          %v1005 = vsub.s32 %v991, %v1004
          %v1006 = vrot.slane %v823, %v1005
          %v1007 = vlaneseq
          %v1008 = vshrl.u32 %v1007, 7
          %v1009 = vsub.s32 %v996, %v1008
          %v1010 = vrot.slane %v826, %v1009
          %v1011 = vsel %vm1001, %v1010, %v1006
          %v1012 = vlaneseq
          %v1013 = vshrl.u32 %v1012, 7
          %v1014 = vsub.s32 %v991, %v1013
          %v1015 = vrot.slane %v829, %v1014
          %v1016 = vlaneseq
          %v1017 = vshrl.u32 %v1016, 7
          %v1018 = vsub.s32 %v996, %v1017
          %v1019 = vrot.slane %v832, %v1018
          %v1020 = vsel %vm1001, %v1019, %v1015
          %v1021 = vlaneseq
          %v1022 = vshrl.u32 %v1021, 7
          %v1023 = vsub.s32 %v991, %v1022
          %v1024 = vrot.slane %v835, %v1023
          %v1025 = vlaneseq
          %v1026 = vshrl.u32 %v1025, 7
          %v1027 = vsub.s32 %v996, %v1026
          %v1028 = vrot.slane %v838, %v1027
          %v1029 = vsel %vm1001, %v1028, %v1024
          %v1030 = vlaneseq
          %v1031 = vshrl.u32 %v1030, 7
          %v1032 = vsub.s32 %v991, %v1031
          %v1033 = vrot.slane %v841, %v1032
          %v1034 = vlaneseq
          %v1035 = vshrl.u32 %v1034, 7
          %v1036 = vsub.s32 %v996, %v1035
          %v1037 = vrot.slane %v844, %v1036
          %v1038 = vsel %vm1001, %v1037, %v1033
          %v1039 = vlaneseq
          %v1040 = vshrl.u32 %v1039, 7
          %v1041 = vsub.s32 %v991, %v1040
          %v1042 = vrot.slane %v847, %v1041
          %v1043 = vlaneseq
          %v1044 = vshrl.u32 %v1043, 7
          %v1045 = vsub.s32 %v996, %v1044
          %v1046 = vrot.slane %v850, %v1045
          %v1047 = vsel %vm1001, %v1046, %v1042
          %v1048 = vlaneseq
          %v1049 = vshrl.u32 %v1048, 7
          %v1050 = vsub.s32 %v991, %v1049
          %v1051 = vrot.slane %v853, %v1050
          %v1052 = vlaneseq
          %v1053 = vshrl.u32 %v1052, 7
          %v1054 = vsub.s32 %v996, %v1053
          %v1055 = vrot.slane %v856, %v1054
          %v1056 = vsel %vm1001, %v1055, %v1051
          %v1057 = vlaneseq
          %v1058 = vshrl.u32 %v1057, 7
          %v1059 = vsub.s32 %v991, %v1058
          %v1060 = vrot.slane %v859, %v1059
          %v1061 = vlaneseq
          %v1062 = vshrl.u32 %v1061, 7
          %v1063 = vsub.s32 %v996, %v1062
          %v1064 = vrot.slane %v862, %v1063
          %v1065 = vsel %vm1001, %v1064, %v1060
          %v1066 = vsel %vm636, %v1011, %v1002
          %v1067 = vsel %vm638, %v1020, %v1066
          %v1068 = vsel %vm640, %v1029, %v1067
          %v1069 = vsel %vm642, %v1038, %v1068
          %v1070 = vsel %vm644, %v1047, %v1069
          %v1071 = vsel %vm646, %v1056, %v1070
          %v1072 = vsel %vm648, %v1065, %v1071
          %v1074 = vadd.f32 %v973, %v1072
          %vm1075 = vcmask 130048
          %1076 = vst.msk [vmem:[%s263] sm:$0xff] %vm1075, %v1074
        $region44: #{tpu_custom_call.1} parent=35 // pred_fallthru
          _
        %s1077 = sand.u32 %s146, 1
        %s1078 = scalar_lea.sflag [#allocation3], %s1077
        %s1079 = sand.u32 %s146, 1
        %s1080 = smul.addr %s1079, 8
        %s1081 = scalar_lea.vmem [#allocation2], %s1080
        // Predicated region
        $region45: #{tpu_custom_call.1} parent=35 // pred_check
          %p1082 = pneg %p156
        $region46: #{tpu_custom_call.1} parent=35 // pred_check_branch
          %1084 = sbr.rel (%p1082) target = $region48
        $region47: #{tpu_custom_call.1} parent=35 // pred_region
          %s1086 = ssub.s32 128, 128
          %1087 = vsyncadd %s1078, %s1086
          %s1088 = smul.addr %s22, 128
          %s1089 = scalar_lea.hbm %s4, %s1088
          %s1091 = sshll.u32 %s1081, 4
          %s1092 = int_to_ptr.vmem [resolvable:$true] %s1091
          %1094 = dma.vmem_to_hbm [thread:$0]  %s1092, 128, %s1089, %s1078
        $region48: #{tpu_custom_call.1} parent=35 // pred_fallthru
          _
      $region36: #{tpu_custom_call.1} parent=5 // pred_fallthru
        _
      %p1095 = scmp.le.s32.totalorder 2, %s13
      // Predicated region
      $region49: #{tpu_custom_call.1} parent=5 // pred_check
        %p1096 = pneg %p1095
      $region50: #{tpu_custom_call.1} parent=5 // pred_check_branch
        %1098 = sbr.rel (%p1096) target = $region52
      $region51: #{tpu_custom_call.1} parent=5 // pred_region
        %s1099 = ssub.s32 %s13, 2
        // Predicated region
        $region53: #{tpu_custom_call.1} parent=51 // pred_check
          %p1100 = pneg %p162
        $region54: #{tpu_custom_call.1} parent=51 // pred_check_branch
          %1102 = sbr.rel (%p1100) target = $region56
        $region55: #{tpu_custom_call.1} parent=51 // pred_region
          %s1103 = sand.u32 %s147, 1
          %s1104 = scalar_lea.sflag [#allocation3], %s1103
          %s1105 = sand.u32 %s147, 1
          %s1106 = smul.addr %s1105, 8
          %s1107 = scalar_lea.vmem [#allocation2], %s1106
          %1108 = dma.done %s1104, 128
        $region56: #{tpu_custom_call.1} parent=51 // pred_fallthru
          _
      $region52: #{tpu_custom_call.1} parent=5 // pred_fallthru
        _
    $region6: #{tpu_custom_call.1} parent=1 // loop_footer
      %s17 = sadd.s32 1, %s13
    $region7: #{tpu_custom_call.1} parent=1 // loop_footer_branch
      %12 = sbr.rel target = $region3
    $region8: #{tpu_custom_call.1} parent=1 // loop_exit
      _
    %1109 = vsyncpa [#allocation3], 1
    %s1110 = scalar_lea.sflag [#allocation3], 1
    %1111 = vsyncpa %s1110, 1

// kernel: tpu_custom_call.1
$region0: #{tpu_custom_call.1}
  #allocation0 [shape = 'u32[]', space=smem, size = 0x4, offset = 0x4, fixed_abs, tag = 'smem constant byte address 0x4 - core index']
  #allocation1 [shape = 'u32[144,128]{1,0:T(1,128)}', space=vmem, size = 0x12000, scoped, tag = 'internal scratch']
  %s0 = inlined_call_operand.vmem [shape: f32[1,8], index: 0, kind: input, shape index: {}]
  %s1 = inlined_call_operand.vmem [shape: bf16[16,16,8], index: 1, kind: input, shape index: {}]
  %s2 = inlined_call_operand.vmem [shape: s8[16,16,8], index: 2, kind: input, shape index: {}]
  %s3 = inlined_call_operand.vmem [shape: f32[3,16,8], index: 3, kind: input, shape index: {}]
  %s4 = inlined_call_operand.hbm [shape: f32[16,16], index: 4, kind: output, shape index: {}]
  %s5 = sld [smem:[#allocation0]]
  $region57: #{tpu_custom_call.1} parent=0
    _
  %s7 = ssub.s32 1, %s5
  %s8 = scalar_select 0, %s7, %s5
  $region1: #{tpu_custom_call.1} parent=0
    #allocation2 [shape = 'u8[8192]{0}', space=vmem, size = 0x2000, scoped, tag = 'output window, operand 0']
    #allocation3 [shape = 's32[2]{0}', space=sflag, size = 0x8, scoped, tag = 'scoped memory for tpu_custom_call.1']
    %9 = vsyncpa [#allocation3], 0
    %s10 = scalar_lea.sflag [#allocation3], 1
    %11 = vsyncpa %s10, 0
    loop: start=0, step=1, limit=4
    $region2: #{tpu_custom_call.1} parent=1 // loop_pre_header
      _
    $region3: #{tpu_custom_call.1} parent=1 // loop_header
      %s13 = sphi 0, %s17
      %p14 = scmp.ge.s32.totalorder %s13, 4
      %s20 = sphi 0, %s32
      %s21 = sphi 0, %s28
      %s22 = sphi 0, %s20
      %s23 = sphi 0, %s21
      %s24 = sphi 0, %s22
      %s25 = sphi 0, %s23
      %s35 = sphi 0, %s37
      %s38 = sphi 0, %s35
      %s39 = sphi 0, %s38
      %s55 = sphi 0, %s39
      %s63 = sphi 0, %s65
      %s66 = sphi 0, %s63
      %s67 = sphi 0, %s66
      %s83 = sphi 0, %s67
      %s91 = sphi 0, %s93
      %s94 = sphi 0, %s91
      %s95 = sphi 0, %s94
      %s111 = sphi 0, %s95
      %s117 = sphi 0, %s119
      %s120 = sphi 0, %s117
      %s121 = sphi 0, %s120
      %s137 = sphi 0, %s121
      %s143 = sphi 0, %s145
      %s146 = sphi 0, %s143
      %s147 = sphi 0, %s146
      %s163 = sphi 0, %s147
    $region4: #{tpu_custom_call.1} parent=1 // loop_header_branch
      %16 = sbr.rel (%p14) target = $region8
    $region5: #{tpu_custom_call.1} parent=1 // loop_body
      %s18 = ssub.s32 %s13, 1
      %s19 = ssub.s32 %s13, 2
      %s26 = sadd.s32 1, %s21
      %p27 = scmp.ge.s32.totalorder %s26, 1
      %s28 = scalar_select %p27, 0, %s26
      %s29 = sadd.s32 1, %s20
      %s30 = scalar_select %p27, %s29, %s20
      %p31 = scmp.ge.s32.totalorder %s30, 2
      %s32 = scalar_select %p31, 0, %s30
      %s33 = ssub.s32 %s21, %s28
      %p34 = scmp.eq.s32.totalorder %s33, 0
      %s36 = sadd.s32 %s35, 1
      %s37 = scalar_select %p34, %s35, %s36
      %p40 = pneg %p34
      %p41 = scmp.eq.s32.totalorder %s13, 1
      %p42 = por %p40, %p41
      %p43 = scmp.ne.s32.totalorder %s35, %s38
      %p44 = scmp.eq.s32.totalorder %s13, 0
      %p45 = por %p43, %p44
      %p46 = scmp.ne.s32.totalorder %s35, %s38
      %p47 = scmp.eq.s32.totalorder %s18, 1
      %p48 = por %p46, %p47
      %p49 = scmp.ne.s32.totalorder %s38, %s39
      %p50 = scmp.eq.s32.totalorder %s18, 0
      %p51 = por %p49, %p50
      %p52 = scmp.ne.s32.totalorder %s38, %s39
      %p53 = scmp.eq.s32.totalorder %s19, 1
      %p54 = por %p52, %p53
      %p56 = scmp.ne.s32.totalorder %s39, %s55
      %p57 = scmp.eq.s32.totalorder %s19, 0
      %p58 = por %p56, %p57
      %s59 = ssub.s32 %s20, %s32
      %s60 = ssub.s32 %s21, %s28
      %s61 = sor.u32 %s59, %s60
      %p62 = scmp.eq.s32.totalorder %s61, 0
      %s64 = sadd.s32 %s63, 1
      %s65 = scalar_select %p62, %s63, %s64
      %p68 = pneg %p62
      %p69 = scmp.eq.s32.totalorder %s13, 1
      %p70 = por %p68, %p69
      %p71 = scmp.ne.s32.totalorder %s63, %s66
      %p72 = scmp.eq.s32.totalorder %s13, 0
      %p73 = por %p71, %p72
      %p74 = scmp.ne.s32.totalorder %s63, %s66
      %p75 = scmp.eq.s32.totalorder %s18, 1
      %p76 = por %p74, %p75
      %p77 = scmp.ne.s32.totalorder %s66, %s67
      %p78 = scmp.eq.s32.totalorder %s18, 0
      %p79 = por %p77, %p78
      %p80 = scmp.ne.s32.totalorder %s66, %s67
      %p81 = scmp.eq.s32.totalorder %s19, 1
      %p82 = por %p80, %p81
      %p84 = scmp.ne.s32.totalorder %s67, %s83
      %p85 = scmp.eq.s32.totalorder %s19, 0
      %p86 = por %p84, %p85
      %s87 = ssub.s32 %s20, %s32
      %s88 = ssub.s32 %s21, %s28
      %s89 = sor.u32 %s87, %s88
      %p90 = scmp.eq.s32.totalorder %s89, 0
      %s92 = sadd.s32 %s91, 1
      %s93 = scalar_select %p90, %s91, %s92
      %p96 = pneg %p90
      %p97 = scmp.eq.s32.totalorder %s13, 1
      %p98 = por %p96, %p97
      %p99 = scmp.ne.s32.totalorder %s91, %s94
      %p100 = scmp.eq.s32.totalorder %s13, 0
      %p101 = por %p99, %p100
      %p102 = scmp.ne.s32.totalorder %s91, %s94
      %p103 = scmp.eq.s32.totalorder %s18, 1
      %p104 = por %p102, %p103
      %p105 = scmp.ne.s32.totalorder %s94, %s95
      %p106 = scmp.eq.s32.totalorder %s18, 0
      %p107 = por %p105, %p106
      %p108 = scmp.ne.s32.totalorder %s94, %s95
      %p109 = scmp.eq.s32.totalorder %s19, 1
      %p110 = por %p108, %p109
      %p112 = scmp.ne.s32.totalorder %s95, %s111
      %p113 = scmp.eq.s32.totalorder %s19, 0
      %p114 = por %p112, %p113
      %s115 = ssub.s32 %s21, %s28
      %p116 = scmp.eq.s32.totalorder %s115, 0
      %s118 = sadd.s32 %s117, 1
      %s119 = scalar_select %p116, %s117, %s118
      %p122 = pneg %p116
      %p123 = scmp.eq.s32.totalorder %s13, 1
      %p124 = por %p122, %p123
      %p125 = scmp.ne.s32.totalorder %s117, %s120
      %p126 = scmp.eq.s32.totalorder %s13, 0
      %p127 = por %p125, %p126
      %p128 = scmp.ne.s32.totalorder %s117, %s120
      %p129 = scmp.eq.s32.totalorder %s18, 1
      %p130 = por %p128, %p129
      %p131 = scmp.ne.s32.totalorder %s120, %s121
      %p132 = scmp.eq.s32.totalorder %s18, 0
      %p133 = por %p131, %p132
      %p134 = scmp.ne.s32.totalorder %s120, %s121
      %p135 = scmp.eq.s32.totalorder %s19, 1
      %p136 = por %p134, %p135
      %p138 = scmp.ne.s32.totalorder %s121, %s137
      %p139 = scmp.eq.s32.totalorder %s19, 0
      %p140 = por %p138, %p139
      %s141 = ssub.s32 %s20, %s32
      %p142 = scmp.eq.s32.totalorder %s141, 0
      %s144 = sadd.s32 %s143, 1
      %s145 = scalar_select %p142, %s143, %s144
      %p148 = pneg %p142
      %p149 = scmp.eq.s32.totalorder %s13, 1
      %p150 = por %p148, %p149
      %p151 = scmp.ne.s32.totalorder %s143, %s146
      %p152 = scmp.eq.s32.totalorder %s13, 0
      %p153 = por %p151, %p152
      %p154 = scmp.ne.s32.totalorder %s143, %s146
      %p155 = scmp.eq.s32.totalorder %s18, 1
      %p156 = por %p154, %p155
      %p157 = scmp.ne.s32.totalorder %s146, %s147
      %p158 = scmp.eq.s32.totalorder %s18, 0
      %p159 = por %p157, %p158
      %p160 = scmp.ne.s32.totalorder %s146, %s147
      %p161 = scmp.eq.s32.totalorder %s19, 1
      %p162 = por %p160, %p161
      %p164 = scmp.ne.s32.totalorder %s147, %s163
      %p165 = scmp.eq.s32.totalorder %s19, 0
      %p166 = por %p164, %p165
      %p167 = scmp.le.s32.totalorder 1, %s13
      %p168 = scmp.lt.s32.totalorder %s13, 3
      %p169 = pnand %p167, %p168
      %p170 = pneg %p169
      // Predicated region
      $region9: #{tpu_custom_call.1} parent=5 // pred_check
        _
      $region10: #{tpu_custom_call.1} parent=5 // pred_check_branch
        %172 = sbr.rel (%p169) target = $region12
      $region11: #{tpu_custom_call.1} parent=5 // pred_region
        %s173 = ssub.s32 %s13, 1
        // Predicated region
        $region13: #{tpu_custom_call.1} parent=11 // pred_check
          %p174 = pneg %p51
        $region14: #{tpu_custom_call.1} parent=11 // pred_check_branch
          %176 = sbr.rel (%p174) target = $region16
        $region15: #{tpu_custom_call.1} parent=11 // pred_region
          %p177 = scmp.lt.s32.totalorder %s23, 0
          %s178 = scalar_select %p177, %s23, 0
          %s179 = scalar_lea.vmem %s0, %s178
        $region16: #{tpu_custom_call.1} parent=11 // pred_fallthru
          _
        // Predicated region
        $region17: #{tpu_custom_call.1} parent=11 // pred_check
          %p180 = pneg %p133
        $region18: #{tpu_custom_call.1} parent=11 // pred_check_branch
          %182 = sbr.rel (%p180) target = $region20
        $region19: #{tpu_custom_call.1} parent=11 // pred_region
          %p183 = scmp.lt.s32.totalorder %s23, 0
          %s184 = scalar_select %p183, %s23, 0
          %s185 = smul.addr %s184, 8
          %s186 = scalar_lea.vmem %s3, %s185
        $region20: #{tpu_custom_call.1} parent=11 // pred_fallthru
          _
      $region12: #{tpu_custom_call.1} parent=5 // pred_fallthru
        _
      %p187 = scmp.lt.s32.totalorder %s13, 2
      // Predicated region
      $region21: #{tpu_custom_call.1} parent=5 // pred_check
        %p188 = pneg %p187
      $region22: #{tpu_custom_call.1} parent=5 // pred_check_branch
        %190 = sbr.rel (%p188) target = $region24
      $region23: #{tpu_custom_call.1} parent=5 // pred_region
        // Predicated region
        $region25: #{tpu_custom_call.1} parent=23 // pred_check
          %p191 = pneg %p73
        $region26: #{tpu_custom_call.1} parent=23 // pred_check_branch
          %193 = sbr.rel (%p191) target = $region28
        $region27: #{tpu_custom_call.1} parent=23 // pred_region
          %s194 = smul.u32 8, %s20
          %p195 = scmp.lt.s32.totalorder %s194, 15
          %s196 = scalar_select %p195, %s194, 15
          %p197 = scmp.lt.s32.totalorder %s21, 0
          %s198 = scalar_select %p197, %s21, 0
          %s199 = smul.addr %s196, 2
          %s200 = sadd.s32 %s198, %s199
          %s201 = smul.addr %s200, 4
          %s202 = scalar_lea.vmem %s1, %s201
          %s203 = smul.u32 8, %s20
        $region28: #{tpu_custom_call.1} parent=23 // pred_fallthru
          _
        // Predicated region
        $region29: #{tpu_custom_call.1} parent=23 // pred_check
          %p204 = pneg %p101
        $region30: #{tpu_custom_call.1} parent=23 // pred_check_branch
          %206 = sbr.rel (%p204) target = $region32
        $region31: #{tpu_custom_call.1} parent=23 // pred_region
          %s207 = smul.u32 8, %s20
          %p208 = scmp.lt.s32.totalorder %s207, 15
          %s209 = scalar_select %p208, %s207, 15
          %p210 = scmp.lt.s32.totalorder %s21, 0
          %s211 = scalar_select %p210, %s21, 0
          %s212 = smul.addr %s209, 2
          %s213 = sadd.s32 %s211, %s212
          %s214 = smul.addr %s213, 2
          %s215 = scalar_lea.vmem %s2, %s214
          %s216 = smul.u32 8, %s20
        $region32: #{tpu_custom_call.1} parent=23 // pred_fallthru
          _
      $region24: #{tpu_custom_call.1} parent=5 // pred_fallthru
        _
      %p217 = scmp.le.s32.totalorder 1, %s13
      %p218 = scmp.lt.s32.totalorder %s13, 3
      %p219 = pnand %p217, %p218
      %p220 = pneg %p219
      // Predicated region
      $region33: #{tpu_custom_call.1} parent=5 // pred_check
        _
      $region34: #{tpu_custom_call.1} parent=5 // pred_check_branch
        %222 = sbr.rel (%p219) target = $region36
      $region35: #{tpu_custom_call.1} parent=5 // pred_region
        %s223 = ssub.s32 %s13, 1
        %p224 = scmp.lt.s32.totalorder %s23, 0
        %s225 = scalar_select %p224, %s23, 0
        %s226 = scalar_lea.vmem %s0, %s225
        %p227 = pneg %p51
        %p228 = pneg %p48
        %s229 = smul.u32 8, %s22
        %p230 = scmp.lt.s32.totalorder %s229, 15
        %s231 = scalar_select %p230, %s229, 15
        %p232 = scmp.lt.s32.totalorder %s23, 0
        %s233 = scalar_select %p232, %s23, 0
        %s234 = smul.addr %s231, 2
        %s235 = sadd.s32 %s233, %s234
        %s236 = smul.addr %s235, 4
        %s237 = scalar_lea.vmem %s1, %s236
        %p238 = pneg %p79
        %p239 = pneg %p76
        %s240 = smul.u32 8, %s22
        %p241 = scmp.lt.s32.totalorder %s240, 15
        %s242 = scalar_select %p241, %s240, 15
        %p243 = scmp.lt.s32.totalorder %s23, 0
        %s244 = scalar_select %p243, %s23, 0
        %s245 = smul.addr %s242, 2
        %s246 = sadd.s32 %s244, %s245
        %s247 = smul.addr %s246, 2
        %s248 = scalar_lea.vmem %s2, %s247
        %p249 = pneg %p107
        %p250 = pneg %p104
        %p251 = scmp.lt.s32.totalorder %s23, 0
        %s252 = scalar_select %p251, %s23, 0
        %s253 = smul.addr %s252, 8
        %s254 = scalar_lea.vmem %s3, %s253
        %p255 = pneg %p133
        %p256 = pneg %p130
        %p257 = pneg %p159
        %p258 = pneg %p156
        %s259 = sand.u32 %s146, 1
        %s260 = scalar_lea.sflag [#allocation3], %s259
        %s261 = sand.u32 %s146, 1
        %s262 = smul.addr %s261, 8
        %s263 = scalar_lea.vmem [#allocation2], %s262
        %p264 = scmp.lt.s32.totalorder %s23, 0
        %s265 = scalar_select %p264, %s23, 0
        %s266 = scalar_lea.vmem %s0, %s265
        %s267 = smul.u32 8, %s22
        %p268 = scmp.lt.s32.totalorder %s267, 15
        %s269 = scalar_select %p268, %s267, 15
        %p270 = scmp.lt.s32.totalorder %s23, 0
        %s271 = scalar_select %p270, %s23, 0
        %s272 = smul.addr %s269, 2
        %s273 = sadd.s32 %s271, %s272
        %s274 = smul.addr %s273, 4
        %s275 = scalar_lea.vmem %s1, %s274
        %s276 = smul.u32 8, %s22
        %s277 = smul.u32 8, %s22
        %p278 = scmp.lt.s32.totalorder %s277, 15
        %s279 = scalar_select %p278, %s277, 15
        %p280 = scmp.lt.s32.totalorder %s23, 0
        %s281 = scalar_select %p280, %s23, 0
        %s282 = smul.addr %s279, 2
        %s283 = sadd.s32 %s281, %s282
        %s284 = smul.addr %s283, 2
        %s285 = scalar_lea.vmem %s2, %s284
        %s286 = smul.u32 8, %s22
        %p287 = scmp.lt.s32.totalorder %s23, 0
        %s288 = scalar_select %p287, %s23, 0
        %s289 = smul.addr %s288, 8
        %s290 = scalar_lea.vmem %s3, %s289
        %v291 = vld [vmem:[%s266] sm:$0x1]
        %v292 = vld [vmem:[%s275] sm:$0xf]
        %v293 = vld [vmem:[%s275 + $0x4] sm:$0xf]
        %v294 = vld [vmem:[%s275 + $0x8] sm:$0xf]
        %v295 = vld [vmem:[%s275 + $0xc] sm:$0xf]
        %v296 = vld [vmem:[%s275 + $0x10] sm:$0xf]
        %v297 = vld [vmem:[%s275 + $0x14] sm:$0xf]
        %v298 = vld [vmem:[%s275 + $0x18] sm:$0xf]
        %v299 = vld [vmem:[%s275 + $0x1c] sm:$0xf]
        %v300 = vld [vmem:[%s275 + $0x20] sm:$0xf]
        %v301 = vld [vmem:[%s275 + $0x24] sm:$0xf]
        %v302 = vld [vmem:[%s275 + $0x28] sm:$0xf]
        %v303 = vld [vmem:[%s275 + $0x2c] sm:$0xf]
        %v304 = vld [vmem:[%s275 + $0x30] sm:$0xf]
        %v305 = vld [vmem:[%s275 + $0x34] sm:$0xf]
        %v306 = vld [vmem:[%s275 + $0x38] sm:$0xf]
        %v307 = vld [vmem:[%s275 + $0x3c] sm:$0xf]
        %v308 = vunpack.c.l.bf16 %v292
        %v309 = vunpack.c.l.bf16 %v293
        %v310 = vunpack.c.l.bf16 %v294
        %v311 = vunpack.c.l.bf16 %v295
        %v312 = vunpack.c.l.bf16 %v296
        %v313 = vunpack.c.l.bf16 %v297
        %v314 = vunpack.c.l.bf16 %v298
        %v315 = vunpack.c.l.bf16 %v299
        %v316 = vunpack.c.l.bf16 %v300
        %v317 = vunpack.c.l.bf16 %v301
        %v318 = vunpack.c.l.bf16 %v302
        %v319 = vunpack.c.l.bf16 %v303
        %v320 = vunpack.c.l.bf16 %v304
        %v321 = vunpack.c.l.bf16 %v305
        %v322 = vunpack.c.l.bf16 %v306
        %v323 = vunpack.c.l.bf16 %v307
        %v324 = vld [vmem:[%s285] sm:$0x3]
        %v325 = vld [vmem:[%s285 + $0x2] sm:$0x3]
        %v326 = vld [vmem:[%s285 + $0x4] sm:$0x3]
        %v327 = vld [vmem:[%s285 + $0x6] sm:$0x3]
        %v328 = vld [vmem:[%s285 + $0x8] sm:$0x3]
        %v329 = vld [vmem:[%s285 + $0xa] sm:$0x3]
        %v330 = vld [vmem:[%s285 + $0xc] sm:$0x3]
        %v331 = vld [vmem:[%s285 + $0xe] sm:$0x3]
        %v332 = vld [vmem:[%s285 + $0x10] sm:$0x3]
        %v333 = vld [vmem:[%s285 + $0x12] sm:$0x3]
        %v334 = vld [vmem:[%s285 + $0x14] sm:$0x3]
        %v335 = vld [vmem:[%s285 + $0x16] sm:$0x3]
        %v336 = vld [vmem:[%s285 + $0x18] sm:$0x3]
        %v337 = vld [vmem:[%s285 + $0x1a] sm:$0x3]
        %v338 = vld [vmem:[%s285 + $0x1c] sm:$0x3]
        %v339 = vld [vmem:[%s285 + $0x1e] sm:$0x3]
        %v340 = vunpack.c.0.s8 %v324
        %v341 = vunpack.c.0.s8 %v325
        %v342 = vunpack.c.0.s8 %v326
        %v343 = vunpack.c.0.s8 %v327
        %v344 = vunpack.c.0.s8 %v328
        %v345 = vunpack.c.0.s8 %v329
        %v346 = vunpack.c.0.s8 %v330
        %v347 = vunpack.c.0.s8 %v331
        %v348 = vunpack.c.0.s8 %v332
        %v349 = vunpack.c.0.s8 %v333
        %v350 = vunpack.c.0.s8 %v334
        %v351 = vunpack.c.0.s8 %v335
        %v352 = vunpack.c.0.s8 %v336
        %v353 = vunpack.c.0.s8 %v337
        %v354 = vunpack.c.0.s8 %v338
        %v355 = vunpack.c.0.s8 %v339
        %v356 = vcvt.s32.f32 %v340
        %v357 = vcvt.s32.f32 %v341
        %v358 = vcvt.s32.f32 %v342
        %v359 = vcvt.s32.f32 %v343
        %v360 = vcvt.s32.f32 %v344
        %v361 = vcvt.s32.f32 %v345
        %v362 = vcvt.s32.f32 %v346
        %v363 = vcvt.s32.f32 %v347
        %v364 = vcvt.s32.f32 %v348
        %v365 = vcvt.s32.f32 %v349
        %v366 = vcvt.s32.f32 %v350
        %v367 = vcvt.s32.f32 %v351
        %v368 = vcvt.s32.f32 %v352
        %v369 = vcvt.s32.f32 %v353
        %v370 = vcvt.s32.f32 %v354
        %v371 = vcvt.s32.f32 %v355
        %v372 = vld [vmem:[%s290] sm:$0xff]
        %v373 = vld [vmem:[%s290 + $0x8] sm:$0xff]
        %s374 = scalar_lea.vmem %s290, 16
        %v375 = vld [vmem:[%s374] sm:$0xff]
        %v376 = vld [vmem:[%s374 + $0x8] sm:$0xff]
        %s377 = scalar_lea.vmem %s290, 32
        %v378 = vld [vmem:[%s377] sm:$0xff]
        %v379 = vld [vmem:[%s377 + $0x8] sm:$0xff]
        %vm380 = vcmp.lt.f32.partialorder %v356, 0.5
        %vm381 = vcmp.lt.f32.partialorder %v357, 0.5
        %vm382 = vcmp.lt.f32.partialorder %v358, 0.5
        %vm383 = vcmp.lt.f32.partialorder %v359, 0.5
        %vm384 = vcmp.lt.f32.partialorder %v360, 0.5
        %vm385 = vcmp.lt.f32.partialorder %v361, 0.5
        %vm386 = vcmp.lt.f32.partialorder %v362, 0.5
        %vm387 = vcmp.lt.f32.partialorder %v363, 0.5
        %vm388 = vcmp.lt.f32.partialorder %v364, 0.5
        %vm389 = vcmp.lt.f32.partialorder %v365, 0.5
        %vm390 = vcmp.lt.f32.partialorder %v366, 0.5
        %vm391 = vcmp.lt.f32.partialorder %v367, 0.5
        %vm392 = vcmp.lt.f32.partialorder %v368, 0.5
        %vm393 = vcmp.lt.f32.partialorder %v369, 0.5
        %vm394 = vcmp.lt.f32.partialorder %v370, 0.5
        %vm395 = vcmp.lt.f32.partialorder %v371, 0.5
        %vm396 = vcmp.lt.f32.partialorder %v356, 1.5
        %vm397 = vcmp.lt.f32.partialorder %v357, 1.5
        %vm398 = vcmp.lt.f32.partialorder %v358, 1.5
        %vm399 = vcmp.lt.f32.partialorder %v359, 1.5
        %vm400 = vcmp.lt.f32.partialorder %v360, 1.5
        %vm401 = vcmp.lt.f32.partialorder %v361, 1.5
        %vm402 = vcmp.lt.f32.partialorder %v362, 1.5
        %vm403 = vcmp.lt.f32.partialorder %v363, 1.5
        %vm404 = vcmp.lt.f32.partialorder %v364, 1.5
        %vm405 = vcmp.lt.f32.partialorder %v365, 1.5
        %vm406 = vcmp.lt.f32.partialorder %v366, 1.5
        %vm407 = vcmp.lt.f32.partialorder %v367, 1.5
        %vm408 = vcmp.lt.f32.partialorder %v368, 1.5
        %vm409 = vcmp.lt.f32.partialorder %v369, 1.5
        %vm410 = vcmp.lt.f32.partialorder %v370, 1.5
        %vm411 = vcmp.lt.f32.partialorder %v371, 1.5
        %v412 = vsel %vm396, %v375, %v378
        %v413 = vsel %vm397, %v376, %v379
        %v414 = vsel %vm398, %v375, %v378
        %v415 = vsel %vm399, %v376, %v379
        %v416 = vsel %vm400, %v375, %v378
        %v417 = vsel %vm401, %v376, %v379
        %v418 = vsel %vm402, %v375, %v378
        %v419 = vsel %vm403, %v376, %v379
        %v420 = vsel %vm404, %v375, %v378
        %v421 = vsel %vm405, %v376, %v379
        %v422 = vsel %vm406, %v375, %v378
        %v423 = vsel %vm407, %v376, %v379
        %v424 = vsel %vm408, %v375, %v378
        %v425 = vsel %vm409, %v376, %v379
        %v426 = vsel %vm410, %v375, %v378
        %v427 = vsel %vm411, %v376, %v379
        %v428 = vsel %vm380, %v372, %v412
        %v429 = vsel %vm381, %v373, %v413
        %v430 = vsel %vm382, %v372, %v414
        %v431 = vsel %vm383, %v373, %v415
        %v432 = vsel %vm384, %v372, %v416
        %v433 = vsel %vm385, %v373, %v417
        %v434 = vsel %vm386, %v372, %v418
        %v435 = vsel %vm387, %v373, %v419
        %v436 = vsel %vm388, %v372, %v420
        %v437 = vsel %vm389, %v373, %v421
        %v438 = vsel %vm390, %v372, %v422
        %v439 = vsel %vm391, %v373, %v423
        %v440 = vsel %vm392, %v372, %v424
        %v441 = vsel %vm393, %v373, %v425
        %v442 = vsel %vm394, %v372, %v426
        %v443 = vsel %vm395, %v373, %v427
        %v444 = vmul.f32 %v308, %v308
        %v445 = vmul.f32 %v309, %v309
        %v446 = vmul.f32 %v310, %v310
        %v447 = vmul.f32 %v311, %v311
        %v448 = vmul.f32 %v312, %v312
        %v449 = vmul.f32 %v313, %v313
        %v450 = vmul.f32 %v314, %v314
        %v451 = vmul.f32 %v315, %v315
        %v452 = vmul.f32 %v316, %v316
        %v453 = vmul.f32 %v317, %v317
        %v454 = vmul.f32 %v318, %v318
        %v455 = vmul.f32 %v319, %v319
        %v456 = vmul.f32 %v320, %v320
        %v457 = vmul.f32 %v321, %v321
        %v458 = vmul.f32 %v322, %v322
        %v459 = vmul.f32 %v323, %v323
        %vm460 = vcmask 64512
        %v461 = vsel %vm460, %v444, 0.0
        %v462 = vsel %vm460, %v445, 0.0
        %v463 = vadd.f32 %v461, %v462
        %v464 = vrot.slane %v463, 4
        %v465 = vadd.f32 %v463, %v464
        %v466 = vrot.slane %v465, 2
        %v467 = vadd.f32 %v465, %v466
        %v468 = vrot.slane %v467, 1
        %v469 = vadd.f32 %v467, %v468
        %v470 = vsel %vm460, %v446, 0.0
        %v471 = vsel %vm460, %v447, 0.0
        %v472 = vadd.f32 %v470, %v471
        %v473 = vrot.slane %v472, 4
        %v474 = vadd.f32 %v472, %v473
        %v475 = vrot.slane %v474, 2
        %v476 = vadd.f32 %v474, %v475
        %v477 = vrot.slane %v476, 1
        %v478 = vadd.f32 %v476, %v477
        %v479 = vsel %vm460, %v448, 0.0
        %v480 = vsel %vm460, %v449, 0.0
        %v481 = vadd.f32 %v479, %v480
        %v482 = vrot.slane %v481, 4
        %v483 = vadd.f32 %v481, %v482
        %v484 = vrot.slane %v483, 2
        %v485 = vadd.f32 %v483, %v484
        %v486 = vrot.slane %v485, 1
        %v487 = vadd.f32 %v485, %v486
        %v488 = vsel %vm460, %v450, 0.0
        %v489 = vsel %vm460, %v451, 0.0
        %v490 = vadd.f32 %v488, %v489
        %v491 = vrot.slane %v490, 4
        %v492 = vadd.f32 %v490, %v491
        %v493 = vrot.slane %v492, 2
        %v494 = vadd.f32 %v492, %v493
        %v495 = vrot.slane %v494, 1
        %v496 = vadd.f32 %v494, %v495
        %v497 = vsel %vm460, %v452, 0.0
        %v498 = vsel %vm460, %v453, 0.0
        %v499 = vadd.f32 %v497, %v498
        %v500 = vrot.slane %v499, 4
        %v501 = vadd.f32 %v499, %v500
        %v502 = vrot.slane %v501, 2
        %v503 = vadd.f32 %v501, %v502
        %v504 = vrot.slane %v503, 1
        %v505 = vadd.f32 %v503, %v504
        %v506 = vsel %vm460, %v454, 0.0
        %v507 = vsel %vm460, %v455, 0.0
        %v508 = vadd.f32 %v506, %v507
        %v509 = vrot.slane %v508, 4
        %v510 = vadd.f32 %v508, %v509
        %v511 = vrot.slane %v510, 2
        %v512 = vadd.f32 %v510, %v511
        %v513 = vrot.slane %v512, 1
        %v514 = vadd.f32 %v512, %v513
        %v515 = vsel %vm460, %v456, 0.0
        %v516 = vsel %vm460, %v457, 0.0
        %v517 = vadd.f32 %v515, %v516
        %v518 = vrot.slane %v517, 4
        %v519 = vadd.f32 %v517, %v518
        %v520 = vrot.slane %v519, 2
        %v521 = vadd.f32 %v519, %v520
        %v522 = vrot.slane %v521, 1
        %v523 = vadd.f32 %v521, %v522
        %v524 = vsel %vm460, %v458, 0.0
        %v525 = vsel %vm460, %v459, 0.0
        %v526 = vadd.f32 %v524, %v525
        %v527 = vrot.slane %v526, 4
        %v528 = vadd.f32 %v526, %v527
        %v529 = vrot.slane %v528, 2
        %v530 = vadd.f32 %v528, %v529
        %v531 = vrot.slane %v530, 1
        %v532 = vadd.f32 %v530, %v531
        %v533 = vmul.f32 %v428, %v428
        %v534 = vmul.f32 %v429, %v429
        %v535 = vmul.f32 %v430, %v430
        %v536 = vmul.f32 %v431, %v431
        %v537 = vmul.f32 %v432, %v432
        %v538 = vmul.f32 %v433, %v433
        %v539 = vmul.f32 %v434, %v434
        %v540 = vmul.f32 %v435, %v435
        %v541 = vmul.f32 %v436, %v436
        %v542 = vmul.f32 %v437, %v437
        %v543 = vmul.f32 %v438, %v438
        %v544 = vmul.f32 %v439, %v439
        %v545 = vmul.f32 %v440, %v440
        %v546 = vmul.f32 %v441, %v441
        %v547 = vmul.f32 %v442, %v442
        %v548 = vmul.f32 %v443, %v443
        %v549 = vsel %vm460, %v533, 0.0
        %v550 = vsel %vm460, %v534, 0.0
        %v551 = vadd.f32 %v549, %v550
        %v552 = vrot.slane %v551, 4
        %v553 = vadd.f32 %v551, %v552
        %v554 = vrot.slane %v553, 2
        %v555 = vadd.f32 %v553, %v554
        %v556 = vrot.slane %v555, 1
        %v557 = vadd.f32 %v555, %v556
        %v558 = vsel %vm460, %v535, 0.0
        %v559 = vsel %vm460, %v536, 0.0
        %v560 = vadd.f32 %v558, %v559
        %v561 = vrot.slane %v560, 4
        %v562 = vadd.f32 %v560, %v561
        %v563 = vrot.slane %v562, 2
        %v564 = vadd.f32 %v562, %v563
        %v565 = vrot.slane %v564, 1
        %v566 = vadd.f32 %v564, %v565
        %v567 = vsel %vm460, %v537, 0.0
        %v568 = vsel %vm460, %v538, 0.0
        %v569 = vadd.f32 %v567, %v568
        %v570 = vrot.slane %v569, 4
        %v571 = vadd.f32 %v569, %v570
        %v572 = vrot.slane %v571, 2
        %v573 = vadd.f32 %v571, %v572
        %v574 = vrot.slane %v573, 1
        %v575 = vadd.f32 %v573, %v574
        %v576 = vsel %vm460, %v539, 0.0
        %v577 = vsel %vm460, %v540, 0.0
        %v578 = vadd.f32 %v576, %v577
        %v579 = vrot.slane %v578, 4
        %v580 = vadd.f32 %v578, %v579
        %v581 = vrot.slane %v580, 2
        %v582 = vadd.f32 %v580, %v581
        %v583 = vrot.slane %v582, 1
        %v584 = vadd.f32 %v582, %v583
        %v585 = vsel %vm460, %v541, 0.0
        %v586 = vsel %vm460, %v542, 0.0
        %v587 = vadd.f32 %v585, %v586
        %v588 = vrot.slane %v587, 4
        %v589 = vadd.f32 %v587, %v588
        %v590 = vrot.slane %v589, 2
        %v591 = vadd.f32 %v589, %v590
        %v592 = vrot.slane %v591, 1
        %v593 = vadd.f32 %v591, %v592
        %v594 = vsel %vm460, %v543, 0.0
        %v595 = vsel %vm460, %v544, 0.0
        %v596 = vadd.f32 %v594, %v595
        %v597 = vrot.slane %v596, 4
        %v598 = vadd.f32 %v596, %v597
        %v599 = vrot.slane %v598, 2
        %v600 = vadd.f32 %v598, %v599
        %v601 = vrot.slane %v600, 1
        %v602 = vadd.f32 %v600, %v601
        %v603 = vsel %vm460, %v545, 0.0
        %v604 = vsel %vm460, %v546, 0.0
        %v605 = vadd.f32 %v603, %v604
        %v606 = vrot.slane %v605, 4
        %v607 = vadd.f32 %v605, %v606
        %v608 = vrot.slane %v607, 2
        %v609 = vadd.f32 %v607, %v608
        %v610 = vrot.slane %v609, 1
        %v611 = vadd.f32 %v609, %v610
        %v612 = vsel %vm460, %v547, 0.0
        %v613 = vsel %vm460, %v548, 0.0
        %v614 = vadd.f32 %v612, %v613
        %v615 = vrot.slane %v614, 4
        %v616 = vadd.f32 %v614, %v615
        %v617 = vrot.slane %v616, 2
        %v618 = vadd.f32 %v616, %v617
        %v619 = vrot.slane %v618, 1
        %v620 = vadd.f32 %v618, %v619
        %v621 = vmul.f32 %v291, %v291
        %v623 = vlaneseq
        %v624 = vshrl.u32 %v623, 7
        %v625 = vsub.s32 0, %v624
        %v626 = vrot.slane %v621, %v625
        %vm636 = vcmask 1041409
        %v637 = vsel %vm636, %v478, %v469
        %vm638 = vcmask 1042434
        %v639 = vsel %vm638, %v487, %v637
        %vm640 = vcmask 1043459
        %v641 = vsel %vm640, %v496, %v639
        %vm642 = vcmask 1044484
        %v643 = vsel %vm642, %v505, %v641
        %vm644 = vcmask 1045509
        %v645 = vsel %vm644, %v514, %v643
        %vm646 = vcmask 1046534
        %v647 = vsel %vm646, %v523, %v645
        %vm648 = vcmask 1047559
        %v649 = vsel %vm648, %v532, %v647
        %v651 = vmul.f32 %v626, %v649
        %v652 = vmax.f32 %v651, 1e-24
        %v653 = vrsqrt.pop %v652
        %v655 = vlaneseq
        %v656 = vshrl.u32 %v655, 7
        %v657 = vsub.s32 0, %v656
        %v658 = vrot.slane %v291, %v657
        %v660 = vmul.f32 %v658, %v653
        %v661 = vmax.f32 %v557, 1e-24
        %v662 = vmax.f32 %v566, 1e-24
        %v663 = vmax.f32 %v575, 1e-24
        %v664 = vmax.f32 %v584, 1e-24
        %v665 = vmax.f32 %v593, 1e-24
        %v666 = vmax.f32 %v602, 1e-24
        %v667 = vmax.f32 %v611, 1e-24
        %v668 = vmax.f32 %v620, 1e-24
        %v669 = vrsqrt.pop %v661
        %v670 = vrsqrt.pop %v662
        %v671 = vrsqrt.pop %v663
        %v672 = vrsqrt.pop %v664
        %v673 = vrsqrt.pop %v665
        %v674 = vrsqrt.pop %v666
        %v675 = vrsqrt.pop %v667
        %v676 = vrsqrt.pop %v668
        %v678 = vcombine.high %v660, %v660
        %v680 = vunpack.c.l.s4 1966171168
        %v681 = vunpack.c.0.s8 %v680
        %v682 = vlaneseq
        %v683 = vshrl.u32 %v682, 7
        %v684 = vsub.s32 %v681, %v683
        %v685 = vrot.slane %v660, %v684
        %v687 = vunpack.c.l.s4 1966171168
        %v688 = vunpack.c.0.s8 %v687
        %v689 = vlaneseq
        %v690 = vshrl.u32 %v689, 7
        %v691 = vsub.s32 %v688, %v690
        %v692 = vrot.slane %v678, %v691
        %v693 = vcombine.high %v685, %v685
        %v694 = vcombine.high %v692, %v692
        %v696 = vunpack.c.l.s4 1966171168
        %v697 = vunpack.c.0.s8 %v696
        %v698 = vlaneseq
        %v699 = vshrl.u32 %v698, 7
        %v700 = vsub.s32 %v697, %v699
        %v701 = vrot.slane %v685, %v700
        %v703 = vunpack.c.l.s4 1966171168
        %v704 = vunpack.c.0.s8 %v703
        %v705 = vlaneseq
        %v706 = vshrl.u32 %v705, 7
        %v707 = vsub.s32 %v704, %v706
        %v708 = vrot.slane %v692, %v707
        %v710 = vunpack.c.l.s4 1966171168
        %v711 = vunpack.c.0.s8 %v710
        %v712 = vlaneseq
        %v713 = vshrl.u32 %v712, 7
        %v714 = vsub.s32 %v711, %v713
        %v715 = vrot.slane %v693, %v714
        %v717 = vunpack.c.l.s4 1966171168
        %v718 = vunpack.c.0.s8 %v717
        %v719 = vlaneseq
        %v720 = vshrl.u32 %v719, 7
        %v721 = vsub.s32 %v718, %v720
        %v722 = vrot.slane %v694, %v721
        %v723 = vcombine.high %v701, %v701
        %v724 = vcombine.high %v708, %v708
        %v725 = vcombine.high %v715, %v715
        %v726 = vcombine.high %v722, %v722
        %v727 = vlaneseq
        %v728 = vshrl.u32 %v727, 7
        %v729 = vsub.s32 0, %v728
        %v730 = vrot.slane %v701, %v729
        %v731 = vlaneseq
        %v732 = vshrl.u32 %v731, 7
        %v733 = vsub.s32 0, %v732
        %v734 = vrot.slane %v715, %v733
        %v735 = vlaneseq
        %v736 = vshrl.u32 %v735, 7
        %v737 = vsub.s32 0, %v736
        %v738 = vrot.slane %v723, %v737
        %v739 = vlaneseq
        %v740 = vshrl.u32 %v739, 7
        %v741 = vsub.s32 0, %v740
        %v742 = vrot.slane %v725, %v741
        %v743 = vlaneseq
        %v744 = vshrl.u32 %v743, 7
        %v745 = vsub.s32 0, %v744
        %v746 = vrot.slane %v708, %v745
        %v747 = vlaneseq
        %v748 = vshrl.u32 %v747, 7
        %v749 = vsub.s32 0, %v748
        %v750 = vrot.slane %v722, %v749
        %v751 = vlaneseq
        %v752 = vshrl.u32 %v751, 7
        %v753 = vsub.s32 0, %v752
        %v754 = vrot.slane %v724, %v753
        %v755 = vlaneseq
        %v756 = vshrl.u32 %v755, 7
        %v757 = vsub.s32 0, %v756
        %v758 = vrot.slane %v726, %v757
        %v767 = vmul.f32 %v308, %v730
        %v768 = vmul.f32 %v309, %v730
        %v769 = vmul.f32 %v310, %v734
        %v770 = vmul.f32 %v311, %v734
        %v771 = vmul.f32 %v312, %v738
        %v772 = vmul.f32 %v313, %v738
        %v773 = vmul.f32 %v314, %v742
        %v774 = vmul.f32 %v315, %v742
        %v775 = vmul.f32 %v316, %v746
        %v776 = vmul.f32 %v317, %v746
        %v777 = vmul.f32 %v318, %v750
        %v778 = vmul.f32 %v319, %v750
        %v779 = vmul.f32 %v320, %v754
        %v780 = vmul.f32 %v321, %v754
        %v781 = vmul.f32 %v322, %v758
        %v782 = vmul.f32 %v323, %v758
        %v783 = vmul.f32 %v428, %v669
        %v784 = vmul.f32 %v429, %v669
        %v785 = vmul.f32 %v430, %v670
        %v786 = vmul.f32 %v431, %v670
        %v787 = vmul.f32 %v432, %v671
        %v788 = vmul.f32 %v433, %v671
        %v789 = vmul.f32 %v434, %v672
        %v790 = vmul.f32 %v435, %v672
        %v791 = vmul.f32 %v436, %v673
        %v792 = vmul.f32 %v437, %v673
        %v793 = vmul.f32 %v438, %v674
        %v794 = vmul.f32 %v439, %v674
        %v795 = vmul.f32 %v440, %v675
        %v796 = vmul.f32 %v441, %v675
        %v797 = vmul.f32 %v442, %v676
        %v798 = vmul.f32 %v443, %v676
        %v799 = vadd.f32 %v767, %v783
        %v800 = vadd.f32 %v768, %v784
        %v801 = vadd.f32 %v769, %v785
        %v802 = vadd.f32 %v770, %v786
        %v803 = vadd.f32 %v771, %v787
        %v804 = vadd.f32 %v772, %v788
        %v805 = vadd.f32 %v773, %v789
        %v806 = vadd.f32 %v774, %v790
        %v807 = vadd.f32 %v775, %v791
        %v808 = vadd.f32 %v776, %v792
        %v809 = vadd.f32 %v777, %v793
        %v810 = vadd.f32 %v778, %v794
        %v811 = vadd.f32 %v779, %v795
        %v812 = vadd.f32 %v780, %v796
        %v813 = vadd.f32 %v781, %v797
        %v814 = vadd.f32 %v782, %v798
        %v815 = vsel %vm460, %v799, 0.0
        %816 = vadd.xlane.f32.xlu0 %v815
        %v817 = vpop.xlane.xlu0 %816
        %v818 = vsel %vm460, %v800, 0.0
        %819 = vadd.xlane.f32.xlu0 %v818
        %v820 = vpop.xlane.xlu0 %819
        %v821 = vsel %vm460, %v801, 0.0
        %822 = vadd.xlane.f32.xlu0 %v821
        %v823 = vpop.xlane.xlu0 %822
        %v824 = vsel %vm460, %v802, 0.0
        %825 = vadd.xlane.f32.xlu0 %v824
        %v826 = vpop.xlane.xlu0 %825
        %v827 = vsel %vm460, %v803, 0.0
        %828 = vadd.xlane.f32.xlu0 %v827
        %v829 = vpop.xlane.xlu0 %828
        %v830 = vsel %vm460, %v804, 0.0
        %831 = vadd.xlane.f32.xlu0 %v830
        %v832 = vpop.xlane.xlu0 %831
        %v833 = vsel %vm460, %v805, 0.0
        %834 = vadd.xlane.f32.xlu0 %v833
        %v835 = vpop.xlane.xlu0 %834
        %v836 = vsel %vm460, %v806, 0.0
        %837 = vadd.xlane.f32.xlu0 %v836
        %v838 = vpop.xlane.xlu0 %837
        %v839 = vsel %vm460, %v807, 0.0
        %840 = vadd.xlane.f32.xlu0 %v839
        %v841 = vpop.xlane.xlu0 %840
        %v842 = vsel %vm460, %v808, 0.0
        %843 = vadd.xlane.f32.xlu0 %v842
        %v844 = vpop.xlane.xlu0 %843
        %v845 = vsel %vm460, %v809, 0.0
        %846 = vadd.xlane.f32.xlu0 %v845
        %v847 = vpop.xlane.xlu0 %846
        %v848 = vsel %vm460, %v810, 0.0
        %849 = vadd.xlane.f32.xlu0 %v848
        %v850 = vpop.xlane.xlu0 %849
        %v851 = vsel %vm460, %v811, 0.0
        %852 = vadd.xlane.f32.xlu0 %v851
        %v853 = vpop.xlane.xlu0 %852
        %v854 = vsel %vm460, %v812, 0.0
        %855 = vadd.xlane.f32.xlu0 %v854
        %v856 = vpop.xlane.xlu0 %855
        %v857 = vsel %vm460, %v813, 0.0
        %858 = vadd.xlane.f32.xlu0 %v857
        %v859 = vpop.xlane.xlu0 %858
        %v860 = vsel %vm460, %v814, 0.0
        %861 = vadd.xlane.f32.xlu0 %v860
        %v862 = vpop.xlane.xlu0 %861
        %p863 = scmp.eq.s32.totalorder %s23, 0
        // Predicated region
        $region37: #{tpu_custom_call.1} parent=35 // pred_check
          %p864 = pneg %p863
        $region38: #{tpu_custom_call.1} parent=35 // pred_check_branch
          %866 = sbr.rel (%p864) target = $region40
        $region39: #{tpu_custom_call.1} parent=35 // pred_region
          %v883 = vlaneseq
          %v884 = vand.u32 %v883, 127
          %v885 = vlaneseq
          %v886 = vshrl.u32 %v885, 7
          %v887 = vsub.s32 %v884, %v886
          %v888 = vrot.slane %v817, %v887
          %v889 = vadd.s32 %v884, 4294967288
          %v890 = vlaneseq
          %v891 = vshrl.u32 %v890, 7
          %v892 = vsub.s32 %v889, %v891
          %v893 = vrot.slane %v820, %v892
          %vm894 = vcmask 130112
          %v895 = vsel %vm894, %v893, %v888
          %v896 = vlaneseq
          %v897 = vshrl.u32 %v896, 7
          %v898 = vsub.s32 %v884, %v897
          %v899 = vrot.slane %v823, %v898
          %v900 = vlaneseq
          %v901 = vshrl.u32 %v900, 7
          %v902 = vsub.s32 %v889, %v901
          %v903 = vrot.slane %v826, %v902
          %v904 = vsel %vm894, %v903, %v899
          %v905 = vlaneseq
          %v906 = vshrl.u32 %v905, 7
          %v907 = vsub.s32 %v884, %v906
          %v908 = vrot.slane %v829, %v907
          %v909 = vlaneseq
          %v910 = vshrl.u32 %v909, 7
          %v911 = vsub.s32 %v889, %v910
          %v912 = vrot.slane %v832, %v911
          %v913 = vsel %vm894, %v912, %v908
          %v914 = vlaneseq
          %v915 = vshrl.u32 %v914, 7
          %v916 = vsub.s32 %v884, %v915
          %v917 = vrot.slane %v835, %v916
          %v918 = vlaneseq
          %v919 = vshrl.u32 %v918, 7
          %v920 = vsub.s32 %v889, %v919
          %v921 = vrot.slane %v838, %v920
          %v922 = vsel %vm894, %v921, %v917
          %v923 = vlaneseq
          %v924 = vshrl.u32 %v923, 7
          %v925 = vsub.s32 %v884, %v924
          %v926 = vrot.slane %v841, %v925
          %v927 = vlaneseq
          %v928 = vshrl.u32 %v927, 7
          %v929 = vsub.s32 %v889, %v928
          %v930 = vrot.slane %v844, %v929
          %v931 = vsel %vm894, %v930, %v926
          %v932 = vlaneseq
          %v933 = vshrl.u32 %v932, 7
          %v934 = vsub.s32 %v884, %v933
          %v935 = vrot.slane %v847, %v934
          %v936 = vlaneseq
          %v937 = vshrl.u32 %v936, 7
          %v938 = vsub.s32 %v889, %v937
          %v939 = vrot.slane %v850, %v938
          %v940 = vsel %vm894, %v939, %v935
          %v941 = vlaneseq
          %v942 = vshrl.u32 %v941, 7
          %v943 = vsub.s32 %v884, %v942
          %v944 = vrot.slane %v853, %v943
          %v945 = vlaneseq
          %v946 = vshrl.u32 %v945, 7
          %v947 = vsub.s32 %v889, %v946
          %v948 = vrot.slane %v856, %v947
          %v949 = vsel %vm894, %v948, %v944
          %v950 = vlaneseq
          %v951 = vshrl.u32 %v950, 7
          %v952 = vsub.s32 %v884, %v951
          %v953 = vrot.slane %v859, %v952
          %v954 = vlaneseq
          %v955 = vshrl.u32 %v954, 7
          %v956 = vsub.s32 %v889, %v955
          %v957 = vrot.slane %v862, %v956
          %v958 = vsel %vm894, %v957, %v953
          %v959 = vsel %vm636, %v904, %v895
          %v960 = vsel %vm638, %v913, %v959
          %v961 = vsel %vm640, %v922, %v960
          %v962 = vsel %vm642, %v931, %v961
          %v963 = vsel %vm644, %v940, %v962
          %v964 = vsel %vm646, %v949, %v963
          %v965 = vsel %vm648, %v958, %v964
          %vm967 = vcmask 130048
          %968 = vst.msk [vmem:[%s263] sm:$0xff] %vm967, %v965
        $region40: #{tpu_custom_call.1} parent=35 // pred_fallthru
          _
        %p969 = scmp.gt.s32.totalorder %s23, 0
        // Predicated region
        $region41: #{tpu_custom_call.1} parent=35 // pred_check
          %p970 = pneg %p969
        $region42: #{tpu_custom_call.1} parent=35 // pred_check_branch
          %972 = sbr.rel (%p970) target = $region44
        $region43: #{tpu_custom_call.1} parent=35 // pred_region
          %v973 = vld [vmem:[%s263] sm:$0xff]
          %v990 = vlaneseq
          %v991 = vand.u32 %v990, 127
          %v992 = vlaneseq
          %v993 = vshrl.u32 %v992, 7
          %v994 = vsub.s32 %v991, %v993
          %v995 = vrot.slane %v817, %v994
          %v996 = vadd.s32 %v991, 4294967288
          %v997 = vlaneseq
          %v998 = vshrl.u32 %v997, 7
          %v999 = vsub.s32 %v996, %v998
          %v1000 = vrot.slane %v820, %v999
          %vm1001 = vcmask 130112
          %v1002 = vsel %vm1001, %v1000, %v995
          %v1003 = vlaneseq
          %v1004 = vshrl.u32 %v1003, 7
          %v1005 = vsub.s32 %v991, %v1004
          %v1006 = vrot.slane %v823, %v1005
          %v1007 = vlaneseq
          %v1008 = vshrl.u32 %v1007, 7
          %v1009 = vsub.s32 %v996, %v1008
          %v1010 = vrot.slane %v826, %v1009
          %v1011 = vsel %vm1001, %v1010, %v1006
          %v1012 = vlaneseq
          %v1013 = vshrl.u32 %v1012, 7
          %v1014 = vsub.s32 %v991, %v1013
          %v1015 = vrot.slane %v829, %v1014
          %v1016 = vlaneseq
          %v1017 = vshrl.u32 %v1016, 7
          %v1018 = vsub.s32 %v996, %v1017
          %v1019 = vrot.slane %v832, %v1018
          %v1020 = vsel %vm1001, %v1019, %v1015
          %v1021 = vlaneseq
          %v1022 = vshrl.u32 %v1021, 7
          %v1023 = vsub.s32 %v991, %v1022
          %v1024 = vrot.slane %v835, %v1023
          %v1025 = vlaneseq
          %v1026 = vshrl.u32 %v1025, 7
          %v1027 = vsub.s32 %v996, %v1026
          %v1028 = vrot.slane %v838, %v1027
          %v1029 = vsel %vm1001, %v1028, %v1024
          %v1030 = vlaneseq
          %v1031 = vshrl.u32 %v1030, 7
          %v1032 = vsub.s32 %v991, %v1031
          %v1033 = vrot.slane %v841, %v1032
          %v1034 = vlaneseq
          %v1035 = vshrl.u32 %v1034, 7
          %v1036 = vsub.s32 %v996, %v1035
          %v1037 = vrot.slane %v844, %v1036
          %v1038 = vsel %vm1001, %v1037, %v1033
          %v1039 = vlaneseq
          %v1040 = vshrl.u32 %v1039, 7
          %v1041 = vsub.s32 %v991, %v1040
          %v1042 = vrot.slane %v847, %v1041
          %v1043 = vlaneseq
          %v1044 = vshrl.u32 %v1043, 7
          %v1045 = vsub.s32 %v996, %v1044
          %v1046 = vrot.slane %v850, %v1045
          %v1047 = vsel %vm1001, %v1046, %v1042
          %v1048 = vlaneseq
          %v1049 = vshrl.u32 %v1048, 7
          %v1050 = vsub.s32 %v991, %v1049
          %v1051 = vrot.slane %v853, %v1050
          %v1052 = vlaneseq
          %v1053 = vshrl.u32 %v1052, 7
          %v1054 = vsub.s32 %v996, %v1053
          %v1055 = vrot.slane %v856, %v1054
          %v1056 = vsel %vm1001, %v1055, %v1051
          %v1057 = vlaneseq
          %v1058 = vshrl.u32 %v1057, 7
          %v1059 = vsub.s32 %v991, %v1058
          %v1060 = vrot.slane %v859, %v1059
          %v1061 = vlaneseq
          %v1062 = vshrl.u32 %v1061, 7
          %v1063 = vsub.s32 %v996, %v1062
          %v1064 = vrot.slane %v862, %v1063
          %v1065 = vsel %vm1001, %v1064, %v1060
          %v1066 = vsel %vm636, %v1011, %v1002
          %v1067 = vsel %vm638, %v1020, %v1066
          %v1068 = vsel %vm640, %v1029, %v1067
          %v1069 = vsel %vm642, %v1038, %v1068
          %v1070 = vsel %vm644, %v1047, %v1069
          %v1071 = vsel %vm646, %v1056, %v1070
          %v1072 = vsel %vm648, %v1065, %v1071
          %v1074 = vadd.f32 %v973, %v1072
          %vm1075 = vcmask 130048
          %1076 = vst.msk [vmem:[%s263] sm:$0xff] %vm1075, %v1074
        $region44: #{tpu_custom_call.1} parent=35 // pred_fallthru
          _
        %s1077 = sand.u32 %s146, 1
        %s1078 = scalar_lea.sflag [#allocation3], %s1077
        %s1079 = sand.u32 %s146, 1
        %s1080 = smul.addr %s1079, 8
        %s1081 = scalar_lea.vmem [#allocation2], %s1080
        // Predicated region
        $region45: #{tpu_custom_call.1} parent=35 // pred_check
          %p1082 = pneg %p156
        $region46: #{tpu_custom_call.1} parent=35 // pred_check_branch
          %1084 = sbr.rel (%p1082) target = $region48
        $region47: #{tpu_custom_call.1} parent=35 // pred_region
          %s1086 = ssub.s32 128, 128
          %1087 = vsyncadd %s1078, %s1086
          %s1088 = smul.addr %s22, 128
          %s1089 = scalar_lea.hbm %s4, %s1088
          %s1091 = sshll.u32 %s1081, 4
          %s1092 = int_to_ptr.vmem [resolvable:$true] %s1091
          %1094 = dma.vmem_to_hbm [thread:$0]  %s1092, 128, %s1089, %s1078
        $region48: #{tpu_custom_call.1} parent=35 // pred_fallthru
          _
      $region36: #{tpu_custom_call.1} parent=5 // pred_fallthru
        _
      %p1095 = scmp.le.s32.totalorder 2, %s13
      // Predicated region
      $region49: #{tpu_custom_call.1} parent=5 // pred_check
        %p1096 = pneg %p1095
      $region50: #{tpu_custom_call.1} parent=5 // pred_check_branch
        %1098 = sbr.rel (%p1096) target = $region52
      $region51: #{tpu_custom_call.1} parent=5 // pred_region
        %s1099 = ssub.s32 %s13, 2
        // Predicated region
        $region53: #{tpu_custom_call.1} parent=51 // pred_check
          %p1100 = pneg %p162
        $region54: #{tpu_custom_call.1} parent=51 // pred_check_branch
          %1102 = sbr.rel (%p1100) target = $region56
        $region55: #{tpu_custom_call.1} parent=51 // pred_region
          %s1103 = sand.u32 %s147, 1
          %s1104 = scalar_lea.sflag [#allocation3], %s1103
          %s1105 = sand.u32 %s147, 1
          %s1106 = smul.addr %s1105, 8
          %s1107 = scalar_lea.vmem [#allocation2], %s1106
          %1108 = dma.done %s1104, 128
        $region56: #{tpu_custom_call.1} parent=51 // pred_fallthru
          _
      $region52: #{tpu_custom_call.1} parent=5 // pred_fallthru
        _
    $region6: #{tpu_custom_call.1} parent=1 // loop_footer
      %s17 = sadd.s32 1, %s13
    $region7: #{tpu_custom_call.1} parent=1 // loop_footer_branch
      %12 = sbr.rel target = $region3
    $region8: #{tpu_custom_call.1} parent=1 // loop_exit
      _
    %1109 = vsyncpa [#allocation3], 1
    %s1110 = scalar_lea.sflag [#allocation3], 1
    %1111 = vsyncpa %s1110, 1

// kernel: tpu_custom_call.1
$region0: #{tpu_custom_call.1}
  #allocation0 [shape = 'u32[]', space=smem, size = 0x4, offset = 0x4, fixed_abs, tag = 'smem constant byte address 0x4 - core index']
  #allocation1 [shape = 'u32[144,128]{1,0:T(1,128)}', space=vmem, size = 0x12000, scoped, tag = 'internal scratch']
  %s0 = inlined_call_operand.vmem [shape: f32[1,8], index: 0, kind: input, shape index: {}]
  %s1 = inlined_call_operand.vmem [shape: bf16[16,16,8], index: 1, kind: input, shape index: {}]
  %s2 = inlined_call_operand.vmem [shape: bf16[16,16,8], index: 2, kind: input, shape index: {}]
  %s3 = inlined_call_operand.vmem [shape: f32[3,16,8], index: 3, kind: input, shape index: {}]
  %s4 = inlined_call_operand.hbm [shape: f32[16,16], index: 4, kind: output, shape index: {}]
  %s5 = sld [smem:[#allocation0]]
  $region57: #{tpu_custom_call.1} parent=0
    _
  %s7 = ssub.s32 1, %s5
  %s8 = scalar_select 0, %s7, %s5
  $region1: #{tpu_custom_call.1} parent=0
    #allocation2 [shape = 'u8[8192]{0}', space=vmem, size = 0x2000, scoped, tag = 'output window, operand 0']
    #allocation3 [shape = 's32[2]{0}', space=sflag, size = 0x8, scoped, tag = 'scoped memory for tpu_custom_call.1']
    %9 = vsyncpa [#allocation3], 0
    %s10 = scalar_lea.sflag [#allocation3], 1
    %11 = vsyncpa %s10, 0
    loop: start=0, step=1, limit=4
    $region2: #{tpu_custom_call.1} parent=1 // loop_pre_header
      _
    $region3: #{tpu_custom_call.1} parent=1 // loop_header
      %s13 = sphi 0, %s17
      %p14 = scmp.ge.s32.totalorder %s13, 4
      %s20 = sphi 0, %s32
      %s21 = sphi 0, %s28
      %s22 = sphi 0, %s20
      %s23 = sphi 0, %s21
      %s24 = sphi 0, %s22
      %s25 = sphi 0, %s23
      %s35 = sphi 0, %s37
      %s38 = sphi 0, %s35
      %s39 = sphi 0, %s38
      %s55 = sphi 0, %s39
      %s63 = sphi 0, %s65
      %s66 = sphi 0, %s63
      %s67 = sphi 0, %s66
      %s83 = sphi 0, %s67
      %s91 = sphi 0, %s93
      %s94 = sphi 0, %s91
      %s95 = sphi 0, %s94
      %s111 = sphi 0, %s95
      %s117 = sphi 0, %s119
      %s120 = sphi 0, %s117
      %s121 = sphi 0, %s120
      %s137 = sphi 0, %s121
      %s143 = sphi 0, %s145
      %s146 = sphi 0, %s143
      %s147 = sphi 0, %s146
      %s163 = sphi 0, %s147
    $region4: #{tpu_custom_call.1} parent=1 // loop_header_branch
      %16 = sbr.rel (%p14) target = $region8
    $region5: #{tpu_custom_call.1} parent=1 // loop_body
      %s18 = ssub.s32 %s13, 1
      %s19 = ssub.s32 %s13, 2
      %s26 = sadd.s32 1, %s21
      %p27 = scmp.ge.s32.totalorder %s26, 1
      %s28 = scalar_select %p27, 0, %s26
      %s29 = sadd.s32 1, %s20
      %s30 = scalar_select %p27, %s29, %s20
      %p31 = scmp.ge.s32.totalorder %s30, 2
      %s32 = scalar_select %p31, 0, %s30
      %s33 = ssub.s32 %s21, %s28
      %p34 = scmp.eq.s32.totalorder %s33, 0
      %s36 = sadd.s32 %s35, 1
      %s37 = scalar_select %p34, %s35, %s36
      %p40 = pneg %p34
      %p41 = scmp.eq.s32.totalorder %s13, 1
      %p42 = por %p40, %p41
      %p43 = scmp.ne.s32.totalorder %s35, %s38
      %p44 = scmp.eq.s32.totalorder %s13, 0
      %p45 = por %p43, %p44
      %p46 = scmp.ne.s32.totalorder %s35, %s38
      %p47 = scmp.eq.s32.totalorder %s18, 1
      %p48 = por %p46, %p47
      %p49 = scmp.ne.s32.totalorder %s38, %s39
      %p50 = scmp.eq.s32.totalorder %s18, 0
      %p51 = por %p49, %p50
      %p52 = scmp.ne.s32.totalorder %s38, %s39
      %p53 = scmp.eq.s32.totalorder %s19, 1
      %p54 = por %p52, %p53
      %p56 = scmp.ne.s32.totalorder %s39, %s55
      %p57 = scmp.eq.s32.totalorder %s19, 0
      %p58 = por %p56, %p57
      %s59 = ssub.s32 %s20, %s32
      %s60 = ssub.s32 %s21, %s28
      %s61 = sor.u32 %s59, %s60
      %p62 = scmp.eq.s32.totalorder %s61, 0
      %s64 = sadd.s32 %s63, 1
      %s65 = scalar_select %p62, %s63, %s64
      %p68 = pneg %p62
      %p69 = scmp.eq.s32.totalorder %s13, 1
      %p70 = por %p68, %p69
      %p71 = scmp.ne.s32.totalorder %s63, %s66
      %p72 = scmp.eq.s32.totalorder %s13, 0
      %p73 = por %p71, %p72
      %p74 = scmp.ne.s32.totalorder %s63, %s66
      %p75 = scmp.eq.s32.totalorder %s18, 1
      %p76 = por %p74, %p75
      %p77 = scmp.ne.s32.totalorder %s66, %s67
      %p78 = scmp.eq.s32.totalorder %s18, 0
      %p79 = por %p77, %p78
      %p80 = scmp.ne.s32.totalorder %s66, %s67
      %p81 = scmp.eq.s32.totalorder %s19, 1
      %p82 = por %p80, %p81
      %p84 = scmp.ne.s32.totalorder %s67, %s83
      %p85 = scmp.eq.s32.totalorder %s19, 0
      %p86 = por %p84, %p85
      %s87 = ssub.s32 %s20, %s32
      %s88 = ssub.s32 %s21, %s28
      %s89 = sor.u32 %s87, %s88
      %p90 = scmp.eq.s32.totalorder %s89, 0
      %s92 = sadd.s32 %s91, 1
      %s93 = scalar_select %p90, %s91, %s92
      %p96 = pneg %p90
      %p97 = scmp.eq.s32.totalorder %s13, 1
      %p98 = por %p96, %p97
      %p99 = scmp.ne.s32.totalorder %s91, %s94
      %p100 = scmp.eq.s32.totalorder %s13, 0
      %p101 = por %p99, %p100
      %p102 = scmp.ne.s32.totalorder %s91, %s94
      %p103 = scmp.eq.s32.totalorder %s18, 1
      %p104 = por %p102, %p103
      %p105 = scmp.ne.s32.totalorder %s94, %s95
      %p106 = scmp.eq.s32.totalorder %s18, 0
      %p107 = por %p105, %p106
      %p108 = scmp.ne.s32.totalorder %s94, %s95
      %p109 = scmp.eq.s32.totalorder %s19, 1
      %p110 = por %p108, %p109
      %p112 = scmp.ne.s32.totalorder %s95, %s111
      %p113 = scmp.eq.s32.totalorder %s19, 0
      %p114 = por %p112, %p113
      %s115 = ssub.s32 %s21, %s28
      %p116 = scmp.eq.s32.totalorder %s115, 0
      %s118 = sadd.s32 %s117, 1
      %s119 = scalar_select %p116, %s117, %s118
      %p122 = pneg %p116
      %p123 = scmp.eq.s32.totalorder %s13, 1
      %p124 = por %p122, %p123
      %p125 = scmp.ne.s32.totalorder %s117, %s120
      %p126 = scmp.eq.s32.totalorder %s13, 0
      %p127 = por %p125, %p126
      %p128 = scmp.ne.s32.totalorder %s117, %s120
      %p129 = scmp.eq.s32.totalorder %s18, 1
      %p130 = por %p128, %p129
      %p131 = scmp.ne.s32.totalorder %s120, %s121
      %p132 = scmp.eq.s32.totalorder %s18, 0
      %p133 = por %p131, %p132
      %p134 = scmp.ne.s32.totalorder %s120, %s121
      %p135 = scmp.eq.s32.totalorder %s19, 1
      %p136 = por %p134, %p135
      %p138 = scmp.ne.s32.totalorder %s121, %s137
      %p139 = scmp.eq.s32.totalorder %s19, 0
      %p140 = por %p138, %p139
      %s141 = ssub.s32 %s20, %s32
      %p142 = scmp.eq.s32.totalorder %s141, 0
      %s144 = sadd.s32 %s143, 1
      %s145 = scalar_select %p142, %s143, %s144
      %p148 = pneg %p142
      %p149 = scmp.eq.s32.totalorder %s13, 1
      %p150 = por %p148, %p149
      %p151 = scmp.ne.s32.totalorder %s143, %s146
      %p152 = scmp.eq.s32.totalorder %s13, 0
      %p153 = por %p151, %p152
      %p154 = scmp.ne.s32.totalorder %s143, %s146
      %p155 = scmp.eq.s32.totalorder %s18, 1
      %p156 = por %p154, %p155
      %p157 = scmp.ne.s32.totalorder %s146, %s147
      %p158 = scmp.eq.s32.totalorder %s18, 0
      %p159 = por %p157, %p158
      %p160 = scmp.ne.s32.totalorder %s146, %s147
      %p161 = scmp.eq.s32.totalorder %s19, 1
      %p162 = por %p160, %p161
      %p164 = scmp.ne.s32.totalorder %s147, %s163
      %p165 = scmp.eq.s32.totalorder %s19, 0
      %p166 = por %p164, %p165
      %p167 = scmp.le.s32.totalorder 1, %s13
      %p168 = scmp.lt.s32.totalorder %s13, 3
      %p169 = pnand %p167, %p168
      %p170 = pneg %p169
      // Predicated region
      $region9: #{tpu_custom_call.1} parent=5 // pred_check
        _
      $region10: #{tpu_custom_call.1} parent=5 // pred_check_branch
        %172 = sbr.rel (%p169) target = $region12
      $region11: #{tpu_custom_call.1} parent=5 // pred_region
        %s173 = ssub.s32 %s13, 1
        // Predicated region
        $region13: #{tpu_custom_call.1} parent=11 // pred_check
          %p174 = pneg %p51
        $region14: #{tpu_custom_call.1} parent=11 // pred_check_branch
          %176 = sbr.rel (%p174) target = $region16
        $region15: #{tpu_custom_call.1} parent=11 // pred_region
          %p177 = scmp.lt.s32.totalorder %s23, 0
          %s178 = scalar_select %p177, %s23, 0
          %s179 = scalar_lea.vmem %s0, %s178
        $region16: #{tpu_custom_call.1} parent=11 // pred_fallthru
          _
        // Predicated region
        $region17: #{tpu_custom_call.1} parent=11 // pred_check
          %p180 = pneg %p133
        $region18: #{tpu_custom_call.1} parent=11 // pred_check_branch
          %182 = sbr.rel (%p180) target = $region20
        $region19: #{tpu_custom_call.1} parent=11 // pred_region
          %p183 = scmp.lt.s32.totalorder %s23, 0
          %s184 = scalar_select %p183, %s23, 0
          %s185 = smul.addr %s184, 8
          %s186 = scalar_lea.vmem %s3, %s185
        $region20: #{tpu_custom_call.1} parent=11 // pred_fallthru
          _
      $region12: #{tpu_custom_call.1} parent=5 // pred_fallthru
        _
      %p187 = scmp.lt.s32.totalorder %s13, 2
      // Predicated region
      $region21: #{tpu_custom_call.1} parent=5 // pred_check
        %p188 = pneg %p187
      $region22: #{tpu_custom_call.1} parent=5 // pred_check_branch
        %190 = sbr.rel (%p188) target = $region24
      $region23: #{tpu_custom_call.1} parent=5 // pred_region
        // Predicated region
        $region25: #{tpu_custom_call.1} parent=23 // pred_check
          %p191 = pneg %p73
        $region26: #{tpu_custom_call.1} parent=23 // pred_check_branch
          %193 = sbr.rel (%p191) target = $region28
        $region27: #{tpu_custom_call.1} parent=23 // pred_region
          %s194 = smul.u32 8, %s20
          %p195 = scmp.lt.s32.totalorder %s194, 15
          %s196 = scalar_select %p195, %s194, 15
          %p197 = scmp.lt.s32.totalorder %s21, 0
          %s198 = scalar_select %p197, %s21, 0
          %s199 = smul.addr %s196, 2
          %s200 = sadd.s32 %s198, %s199
          %s201 = smul.addr %s200, 4
          %s202 = scalar_lea.vmem %s1, %s201
          %s203 = smul.u32 8, %s20
        $region28: #{tpu_custom_call.1} parent=23 // pred_fallthru
          _
        // Predicated region
        $region29: #{tpu_custom_call.1} parent=23 // pred_check
          %p204 = pneg %p101
        $region30: #{tpu_custom_call.1} parent=23 // pred_check_branch
          %206 = sbr.rel (%p204) target = $region32
        $region31: #{tpu_custom_call.1} parent=23 // pred_region
          %s207 = smul.u32 8, %s20
          %p208 = scmp.lt.s32.totalorder %s207, 15
          %s209 = scalar_select %p208, %s207, 15
          %p210 = scmp.lt.s32.totalorder %s21, 0
          %s211 = scalar_select %p210, %s21, 0
          %s212 = smul.addr %s209, 2
          %s213 = sadd.s32 %s211, %s212
          %s214 = smul.addr %s213, 4
          %s215 = scalar_lea.vmem %s2, %s214
          %s216 = smul.u32 8, %s20
        $region32: #{tpu_custom_call.1} parent=23 // pred_fallthru
          _
      $region24: #{tpu_custom_call.1} parent=5 // pred_fallthru
        _
      %p217 = scmp.le.s32.totalorder 1, %s13
      %p218 = scmp.lt.s32.totalorder %s13, 3
      %p219 = pnand %p217, %p218
      %p220 = pneg %p219
      // Predicated region
      $region33: #{tpu_custom_call.1} parent=5 // pred_check
        _
      $region34: #{tpu_custom_call.1} parent=5 // pred_check_branch
        %222 = sbr.rel (%p219) target = $region36
      $region35: #{tpu_custom_call.1} parent=5 // pred_region
        %s223 = ssub.s32 %s13, 1
        %p224 = scmp.lt.s32.totalorder %s23, 0
        %s225 = scalar_select %p224, %s23, 0
        %s226 = scalar_lea.vmem %s0, %s225
        %p227 = pneg %p51
        %p228 = pneg %p48
        %s229 = smul.u32 8, %s22
        %p230 = scmp.lt.s32.totalorder %s229, 15
        %s231 = scalar_select %p230, %s229, 15
        %p232 = scmp.lt.s32.totalorder %s23, 0
        %s233 = scalar_select %p232, %s23, 0
        %s234 = smul.addr %s231, 2
        %s235 = sadd.s32 %s233, %s234
        %s236 = smul.addr %s235, 4
        %s237 = scalar_lea.vmem %s1, %s236
        %p238 = pneg %p79
        %p239 = pneg %p76
        %s240 = smul.u32 8, %s22
        %p241 = scmp.lt.s32.totalorder %s240, 15
        %s242 = scalar_select %p241, %s240, 15
        %p243 = scmp.lt.s32.totalorder %s23, 0
        %s244 = scalar_select %p243, %s23, 0
        %s245 = smul.addr %s242, 2
        %s246 = sadd.s32 %s244, %s245
        %s247 = smul.addr %s246, 4
        %s248 = scalar_lea.vmem %s2, %s247
        %p249 = pneg %p107
        %p250 = pneg %p104
        %p251 = scmp.lt.s32.totalorder %s23, 0
        %s252 = scalar_select %p251, %s23, 0
        %s253 = smul.addr %s252, 8
        %s254 = scalar_lea.vmem %s3, %s253
        %p255 = pneg %p133
        %p256 = pneg %p130
        %p257 = pneg %p159
        %p258 = pneg %p156
        %s259 = sand.u32 %s146, 1
        %s260 = scalar_lea.sflag [#allocation3], %s259
        %s261 = sand.u32 %s146, 1
        %s262 = smul.addr %s261, 8
        %s263 = scalar_lea.vmem [#allocation2], %s262
        %p264 = scmp.lt.s32.totalorder %s23, 0
        %s265 = scalar_select %p264, %s23, 0
        %s266 = scalar_lea.vmem %s0, %s265
        %s267 = smul.u32 8, %s22
        %p268 = scmp.lt.s32.totalorder %s267, 15
        %s269 = scalar_select %p268, %s267, 15
        %p270 = scmp.lt.s32.totalorder %s23, 0
        %s271 = scalar_select %p270, %s23, 0
        %s272 = smul.addr %s269, 2
        %s273 = sadd.s32 %s271, %s272
        %s274 = smul.addr %s273, 4
        %s275 = scalar_lea.vmem %s1, %s274
        %s276 = smul.u32 8, %s22
        %s277 = smul.u32 8, %s22
        %p278 = scmp.lt.s32.totalorder %s277, 15
        %s279 = scalar_select %p278, %s277, 15
        %p280 = scmp.lt.s32.totalorder %s23, 0
        %s281 = scalar_select %p280, %s23, 0
        %s282 = smul.addr %s279, 2
        %s283 = sadd.s32 %s281, %s282
        %s284 = smul.addr %s283, 4
        %s285 = scalar_lea.vmem %s2, %s284
        %s286 = smul.u32 8, %s22
        %p287 = scmp.lt.s32.totalorder %s23, 0
        %s288 = scalar_select %p287, %s23, 0
        %s289 = smul.addr %s288, 8
        %s290 = scalar_lea.vmem %s3, %s289
        %v291 = vld [vmem:[%s266] sm:$0x1]
        %v292 = vld [vmem:[%s275] sm:$0xf]
        %v293 = vld [vmem:[%s275 + $0x4] sm:$0xf]
        %v294 = vld [vmem:[%s275 + $0x8] sm:$0xf]
        %v295 = vld [vmem:[%s275 + $0xc] sm:$0xf]
        %v296 = vld [vmem:[%s275 + $0x10] sm:$0xf]
        %v297 = vld [vmem:[%s275 + $0x14] sm:$0xf]
        %v298 = vld [vmem:[%s275 + $0x18] sm:$0xf]
        %v299 = vld [vmem:[%s275 + $0x1c] sm:$0xf]
        %v300 = vld [vmem:[%s275 + $0x20] sm:$0xf]
        %v301 = vld [vmem:[%s275 + $0x24] sm:$0xf]
        %v302 = vld [vmem:[%s275 + $0x28] sm:$0xf]
        %v303 = vld [vmem:[%s275 + $0x2c] sm:$0xf]
        %v304 = vld [vmem:[%s275 + $0x30] sm:$0xf]
        %v305 = vld [vmem:[%s275 + $0x34] sm:$0xf]
        %v306 = vld [vmem:[%s275 + $0x38] sm:$0xf]
        %v307 = vld [vmem:[%s275 + $0x3c] sm:$0xf]
        %v308 = vunpack.c.l.bf16 %v292
        %v309 = vunpack.c.l.bf16 %v293
        %v310 = vunpack.c.l.bf16 %v294
        %v311 = vunpack.c.l.bf16 %v295
        %v312 = vunpack.c.l.bf16 %v296
        %v313 = vunpack.c.l.bf16 %v297
        %v314 = vunpack.c.l.bf16 %v298
        %v315 = vunpack.c.l.bf16 %v299
        %v316 = vunpack.c.l.bf16 %v300
        %v317 = vunpack.c.l.bf16 %v301
        %v318 = vunpack.c.l.bf16 %v302
        %v319 = vunpack.c.l.bf16 %v303
        %v320 = vunpack.c.l.bf16 %v304
        %v321 = vunpack.c.l.bf16 %v305
        %v322 = vunpack.c.l.bf16 %v306
        %v323 = vunpack.c.l.bf16 %v307
        %v324 = vld [vmem:[%s285] sm:$0xf]
        %v325 = vld [vmem:[%s285 + $0x4] sm:$0xf]
        %v326 = vld [vmem:[%s285 + $0x8] sm:$0xf]
        %v327 = vld [vmem:[%s285 + $0xc] sm:$0xf]
        %v328 = vld [vmem:[%s285 + $0x10] sm:$0xf]
        %v329 = vld [vmem:[%s285 + $0x14] sm:$0xf]
        %v330 = vld [vmem:[%s285 + $0x18] sm:$0xf]
        %v331 = vld [vmem:[%s285 + $0x1c] sm:$0xf]
        %v332 = vld [vmem:[%s285 + $0x20] sm:$0xf]
        %v333 = vld [vmem:[%s285 + $0x24] sm:$0xf]
        %v334 = vld [vmem:[%s285 + $0x28] sm:$0xf]
        %v335 = vld [vmem:[%s285 + $0x2c] sm:$0xf]
        %v336 = vld [vmem:[%s285 + $0x30] sm:$0xf]
        %v337 = vld [vmem:[%s285 + $0x34] sm:$0xf]
        %v338 = vld [vmem:[%s285 + $0x38] sm:$0xf]
        %v339 = vld [vmem:[%s285 + $0x3c] sm:$0xf]
        %v340 = vunpack.c.l.bf16 %v324
        %v341 = vunpack.c.l.bf16 %v325
        %v342 = vunpack.c.l.bf16 %v326
        %v343 = vunpack.c.l.bf16 %v327
        %v344 = vunpack.c.l.bf16 %v328
        %v345 = vunpack.c.l.bf16 %v329
        %v346 = vunpack.c.l.bf16 %v330
        %v347 = vunpack.c.l.bf16 %v331
        %v348 = vunpack.c.l.bf16 %v332
        %v349 = vunpack.c.l.bf16 %v333
        %v350 = vunpack.c.l.bf16 %v334
        %v351 = vunpack.c.l.bf16 %v335
        %v352 = vunpack.c.l.bf16 %v336
        %v353 = vunpack.c.l.bf16 %v337
        %v354 = vunpack.c.l.bf16 %v338
        %v355 = vunpack.c.l.bf16 %v339
        %v356 = vld [vmem:[%s290] sm:$0xff]
        %v357 = vld [vmem:[%s290 + $0x8] sm:$0xff]
        %s358 = scalar_lea.vmem %s290, 16
        %v359 = vld [vmem:[%s358] sm:$0xff]
        %v360 = vld [vmem:[%s358 + $0x8] sm:$0xff]
        %s361 = scalar_lea.vmem %s290, 32
        %v362 = vld [vmem:[%s361] sm:$0xff]
        %v363 = vld [vmem:[%s361 + $0x8] sm:$0xff]
        %vm364 = vcmp.lt.f32.partialorder %v340, 0.5
        %vm365 = vcmp.lt.f32.partialorder %v341, 0.5
        %vm366 = vcmp.lt.f32.partialorder %v342, 0.5
        %vm367 = vcmp.lt.f32.partialorder %v343, 0.5
        %vm368 = vcmp.lt.f32.partialorder %v344, 0.5
        %vm369 = vcmp.lt.f32.partialorder %v345, 0.5
        %vm370 = vcmp.lt.f32.partialorder %v346, 0.5
        %vm371 = vcmp.lt.f32.partialorder %v347, 0.5
        %vm372 = vcmp.lt.f32.partialorder %v348, 0.5
        %vm373 = vcmp.lt.f32.partialorder %v349, 0.5
        %vm374 = vcmp.lt.f32.partialorder %v350, 0.5
        %vm375 = vcmp.lt.f32.partialorder %v351, 0.5
        %vm376 = vcmp.lt.f32.partialorder %v352, 0.5
        %vm377 = vcmp.lt.f32.partialorder %v353, 0.5
        %vm378 = vcmp.lt.f32.partialorder %v354, 0.5
        %vm379 = vcmp.lt.f32.partialorder %v355, 0.5
        %vm380 = vcmp.lt.f32.partialorder %v340, 1.5
        %vm381 = vcmp.lt.f32.partialorder %v341, 1.5
        %vm382 = vcmp.lt.f32.partialorder %v342, 1.5
        %vm383 = vcmp.lt.f32.partialorder %v343, 1.5
        %vm384 = vcmp.lt.f32.partialorder %v344, 1.5
        %vm385 = vcmp.lt.f32.partialorder %v345, 1.5
        %vm386 = vcmp.lt.f32.partialorder %v346, 1.5
        %vm387 = vcmp.lt.f32.partialorder %v347, 1.5
        %vm388 = vcmp.lt.f32.partialorder %v348, 1.5
        %vm389 = vcmp.lt.f32.partialorder %v349, 1.5
        %vm390 = vcmp.lt.f32.partialorder %v350, 1.5
        %vm391 = vcmp.lt.f32.partialorder %v351, 1.5
        %vm392 = vcmp.lt.f32.partialorder %v352, 1.5
        %vm393 = vcmp.lt.f32.partialorder %v353, 1.5
        %vm394 = vcmp.lt.f32.partialorder %v354, 1.5
        %vm395 = vcmp.lt.f32.partialorder %v355, 1.5
        %v396 = vsel %vm380, %v359, %v362
        %v397 = vsel %vm381, %v360, %v363
        %v398 = vsel %vm382, %v359, %v362
        %v399 = vsel %vm383, %v360, %v363
        %v400 = vsel %vm384, %v359, %v362
        %v401 = vsel %vm385, %v360, %v363
        %v402 = vsel %vm386, %v359, %v362
        %v403 = vsel %vm387, %v360, %v363
        %v404 = vsel %vm388, %v359, %v362
        %v405 = vsel %vm389, %v360, %v363
        %v406 = vsel %vm390, %v359, %v362
        %v407 = vsel %vm391, %v360, %v363
        %v408 = vsel %vm392, %v359, %v362
        %v409 = vsel %vm393, %v360, %v363
        %v410 = vsel %vm394, %v359, %v362
        %v411 = vsel %vm395, %v360, %v363
        %v412 = vsel %vm364, %v356, %v396
        %v413 = vsel %vm365, %v357, %v397
        %v414 = vsel %vm366, %v356, %v398
        %v415 = vsel %vm367, %v357, %v399
        %v416 = vsel %vm368, %v356, %v400
        %v417 = vsel %vm369, %v357, %v401
        %v418 = vsel %vm370, %v356, %v402
        %v419 = vsel %vm371, %v357, %v403
        %v420 = vsel %vm372, %v356, %v404
        %v421 = vsel %vm373, %v357, %v405
        %v422 = vsel %vm374, %v356, %v406
        %v423 = vsel %vm375, %v357, %v407
        %v424 = vsel %vm376, %v356, %v408
        %v425 = vsel %vm377, %v357, %v409
        %v426 = vsel %vm378, %v356, %v410
        %v427 = vsel %vm379, %v357, %v411
        %v428 = vmul.f32 %v308, %v308
        %v429 = vmul.f32 %v309, %v309
        %v430 = vmul.f32 %v310, %v310
        %v431 = vmul.f32 %v311, %v311
        %v432 = vmul.f32 %v312, %v312
        %v433 = vmul.f32 %v313, %v313
        %v434 = vmul.f32 %v314, %v314
        %v435 = vmul.f32 %v315, %v315
        %v436 = vmul.f32 %v316, %v316
        %v437 = vmul.f32 %v317, %v317
        %v438 = vmul.f32 %v318, %v318
        %v439 = vmul.f32 %v319, %v319
        %v440 = vmul.f32 %v320, %v320
        %v441 = vmul.f32 %v321, %v321
        %v442 = vmul.f32 %v322, %v322
        %v443 = vmul.f32 %v323, %v323
        %vm444 = vcmask 64512
        %v445 = vsel %vm444, %v428, 0.0
        %v446 = vsel %vm444, %v429, 0.0
        %v447 = vadd.f32 %v445, %v446
        %v448 = vrot.slane %v447, 4
        %v449 = vadd.f32 %v447, %v448
        %v450 = vrot.slane %v449, 2
        %v451 = vadd.f32 %v449, %v450
        %v452 = vrot.slane %v451, 1
        %v453 = vadd.f32 %v451, %v452
        %v454 = vsel %vm444, %v430, 0.0
        %v455 = vsel %vm444, %v431, 0.0
        %v456 = vadd.f32 %v454, %v455
        %v457 = vrot.slane %v456, 4
        %v458 = vadd.f32 %v456, %v457
        %v459 = vrot.slane %v458, 2
        %v460 = vadd.f32 %v458, %v459
        %v461 = vrot.slane %v460, 1
        %v462 = vadd.f32 %v460, %v461
        %v463 = vsel %vm444, %v432, 0.0
        %v464 = vsel %vm444, %v433, 0.0
        %v465 = vadd.f32 %v463, %v464
        %v466 = vrot.slane %v465, 4
        %v467 = vadd.f32 %v465, %v466
        %v468 = vrot.slane %v467, 2
        %v469 = vadd.f32 %v467, %v468
        %v470 = vrot.slane %v469, 1
        %v471 = vadd.f32 %v469, %v470
        %v472 = vsel %vm444, %v434, 0.0
        %v473 = vsel %vm444, %v435, 0.0
        %v474 = vadd.f32 %v472, %v473
        %v475 = vrot.slane %v474, 4
        %v476 = vadd.f32 %v474, %v475
        %v477 = vrot.slane %v476, 2
        %v478 = vadd.f32 %v476, %v477
        %v479 = vrot.slane %v478, 1
        %v480 = vadd.f32 %v478, %v479
        %v481 = vsel %vm444, %v436, 0.0
        %v482 = vsel %vm444, %v437, 0.0
        %v483 = vadd.f32 %v481, %v482
        %v484 = vrot.slane %v483, 4
        %v485 = vadd.f32 %v483, %v484
        %v486 = vrot.slane %v485, 2
        %v487 = vadd.f32 %v485, %v486
        %v488 = vrot.slane %v487, 1
        %v489 = vadd.f32 %v487, %v488
        %v490 = vsel %vm444, %v438, 0.0
        %v491 = vsel %vm444, %v439, 0.0
        %v492 = vadd.f32 %v490, %v491
        %v493 = vrot.slane %v492, 4
        %v494 = vadd.f32 %v492, %v493
        %v495 = vrot.slane %v494, 2
        %v496 = vadd.f32 %v494, %v495
        %v497 = vrot.slane %v496, 1
        %v498 = vadd.f32 %v496, %v497
        %v499 = vsel %vm444, %v440, 0.0
        %v500 = vsel %vm444, %v441, 0.0
        %v501 = vadd.f32 %v499, %v500
        %v502 = vrot.slane %v501, 4
        %v503 = vadd.f32 %v501, %v502
        %v504 = vrot.slane %v503, 2
        %v505 = vadd.f32 %v503, %v504
        %v506 = vrot.slane %v505, 1
        %v507 = vadd.f32 %v505, %v506
        %v508 = vsel %vm444, %v442, 0.0
        %v509 = vsel %vm444, %v443, 0.0
        %v510 = vadd.f32 %v508, %v509
        %v511 = vrot.slane %v510, 4
        %v512 = vadd.f32 %v510, %v511
        %v513 = vrot.slane %v512, 2
        %v514 = vadd.f32 %v512, %v513
        %v515 = vrot.slane %v514, 1
        %v516 = vadd.f32 %v514, %v515
        %v517 = vmul.f32 %v412, %v412
        %v518 = vmul.f32 %v413, %v413
        %v519 = vmul.f32 %v414, %v414
        %v520 = vmul.f32 %v415, %v415
        %v521 = vmul.f32 %v416, %v416
        %v522 = vmul.f32 %v417, %v417
        %v523 = vmul.f32 %v418, %v418
        %v524 = vmul.f32 %v419, %v419
        %v525 = vmul.f32 %v420, %v420
        %v526 = vmul.f32 %v421, %v421
        %v527 = vmul.f32 %v422, %v422
        %v528 = vmul.f32 %v423, %v423
        %v529 = vmul.f32 %v424, %v424
        %v530 = vmul.f32 %v425, %v425
        %v531 = vmul.f32 %v426, %v426
        %v532 = vmul.f32 %v427, %v427
        %v533 = vsel %vm444, %v517, 0.0
        %v534 = vsel %vm444, %v518, 0.0
        %v535 = vadd.f32 %v533, %v534
        %v536 = vrot.slane %v535, 4
        %v537 = vadd.f32 %v535, %v536
        %v538 = vrot.slane %v537, 2
        %v539 = vadd.f32 %v537, %v538
        %v540 = vrot.slane %v539, 1
        %v541 = vadd.f32 %v539, %v540
        %v542 = vsel %vm444, %v519, 0.0
        %v543 = vsel %vm444, %v520, 0.0
        %v544 = vadd.f32 %v542, %v543
        %v545 = vrot.slane %v544, 4
        %v546 = vadd.f32 %v544, %v545
        %v547 = vrot.slane %v546, 2
        %v548 = vadd.f32 %v546, %v547
        %v549 = vrot.slane %v548, 1
        %v550 = vadd.f32 %v548, %v549
        %v551 = vsel %vm444, %v521, 0.0
        %v552 = vsel %vm444, %v522, 0.0
        %v553 = vadd.f32 %v551, %v552
        %v554 = vrot.slane %v553, 4
        %v555 = vadd.f32 %v553, %v554
        %v556 = vrot.slane %v555, 2
        %v557 = vadd.f32 %v555, %v556
        %v558 = vrot.slane %v557, 1
        %v559 = vadd.f32 %v557, %v558
        %v560 = vsel %vm444, %v523, 0.0
        %v561 = vsel %vm444, %v524, 0.0
        %v562 = vadd.f32 %v560, %v561
        %v563 = vrot.slane %v562, 4
        %v564 = vadd.f32 %v562, %v563
        %v565 = vrot.slane %v564, 2
        %v566 = vadd.f32 %v564, %v565
        %v567 = vrot.slane %v566, 1
        %v568 = vadd.f32 %v566, %v567
        %v569 = vsel %vm444, %v525, 0.0
        %v570 = vsel %vm444, %v526, 0.0
        %v571 = vadd.f32 %v569, %v570
        %v572 = vrot.slane %v571, 4
        %v573 = vadd.f32 %v571, %v572
        %v574 = vrot.slane %v573, 2
        %v575 = vadd.f32 %v573, %v574
        %v576 = vrot.slane %v575, 1
        %v577 = vadd.f32 %v575, %v576
        %v578 = vsel %vm444, %v527, 0.0
        %v579 = vsel %vm444, %v528, 0.0
        %v580 = vadd.f32 %v578, %v579
        %v581 = vrot.slane %v580, 4
        %v582 = vadd.f32 %v580, %v581
        %v583 = vrot.slane %v582, 2
        %v584 = vadd.f32 %v582, %v583
        %v585 = vrot.slane %v584, 1
        %v586 = vadd.f32 %v584, %v585
        %v587 = vsel %vm444, %v529, 0.0
        %v588 = vsel %vm444, %v530, 0.0
        %v589 = vadd.f32 %v587, %v588
        %v590 = vrot.slane %v589, 4
        %v591 = vadd.f32 %v589, %v590
        %v592 = vrot.slane %v591, 2
        %v593 = vadd.f32 %v591, %v592
        %v594 = vrot.slane %v593, 1
        %v595 = vadd.f32 %v593, %v594
        %v596 = vsel %vm444, %v531, 0.0
        %v597 = vsel %vm444, %v532, 0.0
        %v598 = vadd.f32 %v596, %v597
        %v599 = vrot.slane %v598, 4
        %v600 = vadd.f32 %v598, %v599
        %v601 = vrot.slane %v600, 2
        %v602 = vadd.f32 %v600, %v601
        %v603 = vrot.slane %v602, 1
        %v604 = vadd.f32 %v602, %v603
        %v605 = vmul.f32 %v291, %v291
        %v607 = vlaneseq
        %v608 = vshrl.u32 %v607, 7
        %v609 = vsub.s32 0, %v608
        %v610 = vrot.slane %v605, %v609
        %vm620 = vcmask 1041409
        %v621 = vsel %vm620, %v462, %v453
        %vm622 = vcmask 1042434
        %v623 = vsel %vm622, %v471, %v621
        %vm624 = vcmask 1043459
        %v625 = vsel %vm624, %v480, %v623
        %vm626 = vcmask 1044484
        %v627 = vsel %vm626, %v489, %v625
        %vm628 = vcmask 1045509
        %v629 = vsel %vm628, %v498, %v627
        %vm630 = vcmask 1046534
        %v631 = vsel %vm630, %v507, %v629
        %vm632 = vcmask 1047559
        %v633 = vsel %vm632, %v516, %v631
        %v635 = vmul.f32 %v610, %v633
        %v636 = vmax.f32 %v635, 1e-24
        %v637 = vrsqrt.pop %v636
        %v639 = vlaneseq
        %v640 = vshrl.u32 %v639, 7
        %v641 = vsub.s32 0, %v640
        %v642 = vrot.slane %v291, %v641
        %v644 = vmul.f32 %v642, %v637
        %v645 = vmax.f32 %v541, 1e-24
        %v646 = vmax.f32 %v550, 1e-24
        %v647 = vmax.f32 %v559, 1e-24
        %v648 = vmax.f32 %v568, 1e-24
        %v649 = vmax.f32 %v577, 1e-24
        %v650 = vmax.f32 %v586, 1e-24
        %v651 = vmax.f32 %v595, 1e-24
        %v652 = vmax.f32 %v604, 1e-24
        %v653 = vrsqrt.pop %v645
        %v654 = vrsqrt.pop %v646
        %v655 = vrsqrt.pop %v647
        %v656 = vrsqrt.pop %v648
        %v657 = vrsqrt.pop %v649
        %v658 = vrsqrt.pop %v650
        %v659 = vrsqrt.pop %v651
        %v660 = vrsqrt.pop %v652
        %v662 = vcombine.high %v644, %v644
        %v664 = vunpack.c.l.s4 1966171168
        %v665 = vunpack.c.0.s8 %v664
        %v666 = vlaneseq
        %v667 = vshrl.u32 %v666, 7
        %v668 = vsub.s32 %v665, %v667
        %v669 = vrot.slane %v644, %v668
        %v671 = vunpack.c.l.s4 1966171168
        %v672 = vunpack.c.0.s8 %v671
        %v673 = vlaneseq
        %v674 = vshrl.u32 %v673, 7
        %v675 = vsub.s32 %v672, %v674
        %v676 = vrot.slane %v662, %v675
        %v677 = vcombine.high %v669, %v669
        %v678 = vcombine.high %v676, %v676
        %v680 = vunpack.c.l.s4 1966171168
        %v681 = vunpack.c.0.s8 %v680
        %v682 = vlaneseq
        %v683 = vshrl.u32 %v682, 7
        %v684 = vsub.s32 %v681, %v683
        %v685 = vrot.slane %v669, %v684
        %v687 = vunpack.c.l.s4 1966171168
        %v688 = vunpack.c.0.s8 %v687
        %v689 = vlaneseq
        %v690 = vshrl.u32 %v689, 7
        %v691 = vsub.s32 %v688, %v690
        %v692 = vrot.slane %v676, %v691
        %v694 = vunpack.c.l.s4 1966171168
        %v695 = vunpack.c.0.s8 %v694
        %v696 = vlaneseq
        %v697 = vshrl.u32 %v696, 7
        %v698 = vsub.s32 %v695, %v697
        %v699 = vrot.slane %v677, %v698
        %v701 = vunpack.c.l.s4 1966171168
        %v702 = vunpack.c.0.s8 %v701
        %v703 = vlaneseq
        %v704 = vshrl.u32 %v703, 7
        %v705 = vsub.s32 %v702, %v704
        %v706 = vrot.slane %v678, %v705
        %v707 = vcombine.high %v685, %v685
        %v708 = vcombine.high %v692, %v692
        %v709 = vcombine.high %v699, %v699
        %v710 = vcombine.high %v706, %v706
        %v711 = vlaneseq
        %v712 = vshrl.u32 %v711, 7
        %v713 = vsub.s32 0, %v712
        %v714 = vrot.slane %v685, %v713
        %v715 = vlaneseq
        %v716 = vshrl.u32 %v715, 7
        %v717 = vsub.s32 0, %v716
        %v718 = vrot.slane %v699, %v717
        %v719 = vlaneseq
        %v720 = vshrl.u32 %v719, 7
        %v721 = vsub.s32 0, %v720
        %v722 = vrot.slane %v707, %v721
        %v723 = vlaneseq
        %v724 = vshrl.u32 %v723, 7
        %v725 = vsub.s32 0, %v724
        %v726 = vrot.slane %v709, %v725
        %v727 = vlaneseq
        %v728 = vshrl.u32 %v727, 7
        %v729 = vsub.s32 0, %v728
        %v730 = vrot.slane %v692, %v729
        %v731 = vlaneseq
        %v732 = vshrl.u32 %v731, 7
        %v733 = vsub.s32 0, %v732
        %v734 = vrot.slane %v706, %v733
        %v735 = vlaneseq
        %v736 = vshrl.u32 %v735, 7
        %v737 = vsub.s32 0, %v736
        %v738 = vrot.slane %v708, %v737
        %v739 = vlaneseq
        %v740 = vshrl.u32 %v739, 7
        %v741 = vsub.s32 0, %v740
        %v742 = vrot.slane %v710, %v741
        %v751 = vmul.f32 %v308, %v714
        %v752 = vmul.f32 %v309, %v714
        %v753 = vmul.f32 %v310, %v718
        %v754 = vmul.f32 %v311, %v718
        %v755 = vmul.f32 %v312, %v722
        %v756 = vmul.f32 %v313, %v722
        %v757 = vmul.f32 %v314, %v726
        %v758 = vmul.f32 %v315, %v726
        %v759 = vmul.f32 %v316, %v730
        %v760 = vmul.f32 %v317, %v730
        %v761 = vmul.f32 %v318, %v734
        %v762 = vmul.f32 %v319, %v734
        %v763 = vmul.f32 %v320, %v738
        %v764 = vmul.f32 %v321, %v738
        %v765 = vmul.f32 %v322, %v742
        %v766 = vmul.f32 %v323, %v742
        %v767 = vmul.f32 %v412, %v653
        %v768 = vmul.f32 %v413, %v653
        %v769 = vmul.f32 %v414, %v654
        %v770 = vmul.f32 %v415, %v654
        %v771 = vmul.f32 %v416, %v655
        %v772 = vmul.f32 %v417, %v655
        %v773 = vmul.f32 %v418, %v656
        %v774 = vmul.f32 %v419, %v656
        %v775 = vmul.f32 %v420, %v657
        %v776 = vmul.f32 %v421, %v657
        %v777 = vmul.f32 %v422, %v658
        %v778 = vmul.f32 %v423, %v658
        %v779 = vmul.f32 %v424, %v659
        %v780 = vmul.f32 %v425, %v659
        %v781 = vmul.f32 %v426, %v660
        %v782 = vmul.f32 %v427, %v660
        %v783 = vadd.f32 %v751, %v767
        %v784 = vadd.f32 %v752, %v768
        %v785 = vadd.f32 %v753, %v769
        %v786 = vadd.f32 %v754, %v770
        %v787 = vadd.f32 %v755, %v771
        %v788 = vadd.f32 %v756, %v772
        %v789 = vadd.f32 %v757, %v773
        %v790 = vadd.f32 %v758, %v774
        %v791 = vadd.f32 %v759, %v775
        %v792 = vadd.f32 %v760, %v776
        %v793 = vadd.f32 %v761, %v777
        %v794 = vadd.f32 %v762, %v778
        %v795 = vadd.f32 %v763, %v779
        %v796 = vadd.f32 %v764, %v780
        %v797 = vadd.f32 %v765, %v781
        %v798 = vadd.f32 %v766, %v782
        %v799 = vsel %vm444, %v783, 0.0
        %800 = vadd.xlane.f32.xlu0 %v799
        %v801 = vpop.xlane.xlu0 %800
        %v802 = vsel %vm444, %v784, 0.0
        %803 = vadd.xlane.f32.xlu0 %v802
        %v804 = vpop.xlane.xlu0 %803
        %v805 = vsel %vm444, %v785, 0.0
        %806 = vadd.xlane.f32.xlu0 %v805
        %v807 = vpop.xlane.xlu0 %806
        %v808 = vsel %vm444, %v786, 0.0
        %809 = vadd.xlane.f32.xlu0 %v808
        %v810 = vpop.xlane.xlu0 %809
        %v811 = vsel %vm444, %v787, 0.0
        %812 = vadd.xlane.f32.xlu0 %v811
        %v813 = vpop.xlane.xlu0 %812
        %v814 = vsel %vm444, %v788, 0.0
        %815 = vadd.xlane.f32.xlu0 %v814
        %v816 = vpop.xlane.xlu0 %815
        %v817 = vsel %vm444, %v789, 0.0
        %818 = vadd.xlane.f32.xlu0 %v817
        %v819 = vpop.xlane.xlu0 %818
        %v820 = vsel %vm444, %v790, 0.0
        %821 = vadd.xlane.f32.xlu0 %v820
        %v822 = vpop.xlane.xlu0 %821
        %v823 = vsel %vm444, %v791, 0.0
        %824 = vadd.xlane.f32.xlu0 %v823
        %v825 = vpop.xlane.xlu0 %824
        %v826 = vsel %vm444, %v792, 0.0
        %827 = vadd.xlane.f32.xlu0 %v826
        %v828 = vpop.xlane.xlu0 %827
        %v829 = vsel %vm444, %v793, 0.0
        %830 = vadd.xlane.f32.xlu0 %v829
        %v831 = vpop.xlane.xlu0 %830
        %v832 = vsel %vm444, %v794, 0.0
        %833 = vadd.xlane.f32.xlu0 %v832
        %v834 = vpop.xlane.xlu0 %833
        %v835 = vsel %vm444, %v795, 0.0
        %836 = vadd.xlane.f32.xlu0 %v835
        %v837 = vpop.xlane.xlu0 %836
        %v838 = vsel %vm444, %v796, 0.0
        %839 = vadd.xlane.f32.xlu0 %v838
        %v840 = vpop.xlane.xlu0 %839
        %v841 = vsel %vm444, %v797, 0.0
        %842 = vadd.xlane.f32.xlu0 %v841
        %v843 = vpop.xlane.xlu0 %842
        %v844 = vsel %vm444, %v798, 0.0
        %845 = vadd.xlane.f32.xlu0 %v844
        %v846 = vpop.xlane.xlu0 %845
        %p847 = scmp.eq.s32.totalorder %s23, 0
        // Predicated region
        $region37: #{tpu_custom_call.1} parent=35 // pred_check
          %p848 = pneg %p847
        $region38: #{tpu_custom_call.1} parent=35 // pred_check_branch
          %850 = sbr.rel (%p848) target = $region40
        $region39: #{tpu_custom_call.1} parent=35 // pred_region
          %v867 = vlaneseq
          %v868 = vand.u32 %v867, 127
          %v869 = vlaneseq
          %v870 = vshrl.u32 %v869, 7
          %v871 = vsub.s32 %v868, %v870
          %v872 = vrot.slane %v801, %v871
          %v873 = vadd.s32 %v868, 4294967288
          %v874 = vlaneseq
          %v875 = vshrl.u32 %v874, 7
          %v876 = vsub.s32 %v873, %v875
          %v877 = vrot.slane %v804, %v876
          %vm878 = vcmask 130112
          %v879 = vsel %vm878, %v877, %v872
          %v880 = vlaneseq
          %v881 = vshrl.u32 %v880, 7
          %v882 = vsub.s32 %v868, %v881
          %v883 = vrot.slane %v807, %v882
          %v884 = vlaneseq
          %v885 = vshrl.u32 %v884, 7
          %v886 = vsub.s32 %v873, %v885
          %v887 = vrot.slane %v810, %v886
          %v888 = vsel %vm878, %v887, %v883
          %v889 = vlaneseq
          %v890 = vshrl.u32 %v889, 7
          %v891 = vsub.s32 %v868, %v890
          %v892 = vrot.slane %v813, %v891
          %v893 = vlaneseq
          %v894 = vshrl.u32 %v893, 7
          %v895 = vsub.s32 %v873, %v894
          %v896 = vrot.slane %v816, %v895
          %v897 = vsel %vm878, %v896, %v892
          %v898 = vlaneseq
          %v899 = vshrl.u32 %v898, 7
          %v900 = vsub.s32 %v868, %v899
          %v901 = vrot.slane %v819, %v900
          %v902 = vlaneseq
          %v903 = vshrl.u32 %v902, 7
          %v904 = vsub.s32 %v873, %v903
          %v905 = vrot.slane %v822, %v904
          %v906 = vsel %vm878, %v905, %v901
          %v907 = vlaneseq
          %v908 = vshrl.u32 %v907, 7
          %v909 = vsub.s32 %v868, %v908
          %v910 = vrot.slane %v825, %v909
          %v911 = vlaneseq
          %v912 = vshrl.u32 %v911, 7
          %v913 = vsub.s32 %v873, %v912
          %v914 = vrot.slane %v828, %v913
          %v915 = vsel %vm878, %v914, %v910
          %v916 = vlaneseq
          %v917 = vshrl.u32 %v916, 7
          %v918 = vsub.s32 %v868, %v917
          %v919 = vrot.slane %v831, %v918
          %v920 = vlaneseq
          %v921 = vshrl.u32 %v920, 7
          %v922 = vsub.s32 %v873, %v921
          %v923 = vrot.slane %v834, %v922
          %v924 = vsel %vm878, %v923, %v919
          %v925 = vlaneseq
          %v926 = vshrl.u32 %v925, 7
          %v927 = vsub.s32 %v868, %v926
          %v928 = vrot.slane %v837, %v927
          %v929 = vlaneseq
          %v930 = vshrl.u32 %v929, 7
          %v931 = vsub.s32 %v873, %v930
          %v932 = vrot.slane %v840, %v931
          %v933 = vsel %vm878, %v932, %v928
          %v934 = vlaneseq
          %v935 = vshrl.u32 %v934, 7
          %v936 = vsub.s32 %v868, %v935
          %v937 = vrot.slane %v843, %v936
          %v938 = vlaneseq
          %v939 = vshrl.u32 %v938, 7
          %v940 = vsub.s32 %v873, %v939
          %v941 = vrot.slane %v846, %v940
          %v942 = vsel %vm878, %v941, %v937
          %v943 = vsel %vm620, %v888, %v879
          %v944 = vsel %vm622, %v897, %v943
          %v945 = vsel %vm624, %v906, %v944
          %v946 = vsel %vm626, %v915, %v945
          %v947 = vsel %vm628, %v924, %v946
          %v948 = vsel %vm630, %v933, %v947
          %v949 = vsel %vm632, %v942, %v948
          %vm951 = vcmask 130048
          %952 = vst.msk [vmem:[%s263] sm:$0xff] %vm951, %v949
        $region40: #{tpu_custom_call.1} parent=35 // pred_fallthru
          _
        %p953 = scmp.gt.s32.totalorder %s23, 0
        // Predicated region
        $region41: #{tpu_custom_call.1} parent=35 // pred_check
          %p954 = pneg %p953
        $region42: #{tpu_custom_call.1} parent=35 // pred_check_branch
          %956 = sbr.rel (%p954) target = $region44
        $region43: #{tpu_custom_call.1} parent=35 // pred_region
          %v957 = vld [vmem:[%s263] sm:$0xff]
          %v974 = vlaneseq
          %v975 = vand.u32 %v974, 127
          %v976 = vlaneseq
          %v977 = vshrl.u32 %v976, 7
          %v978 = vsub.s32 %v975, %v977
          %v979 = vrot.slane %v801, %v978
          %v980 = vadd.s32 %v975, 4294967288
          %v981 = vlaneseq
          %v982 = vshrl.u32 %v981, 7
          %v983 = vsub.s32 %v980, %v982
          %v984 = vrot.slane %v804, %v983
          %vm985 = vcmask 130112
          %v986 = vsel %vm985, %v984, %v979
          %v987 = vlaneseq
          %v988 = vshrl.u32 %v987, 7
          %v989 = vsub.s32 %v975, %v988
          %v990 = vrot.slane %v807, %v989
          %v991 = vlaneseq
          %v992 = vshrl.u32 %v991, 7
          %v993 = vsub.s32 %v980, %v992
          %v994 = vrot.slane %v810, %v993
          %v995 = vsel %vm985, %v994, %v990
          %v996 = vlaneseq
          %v997 = vshrl.u32 %v996, 7
          %v998 = vsub.s32 %v975, %v997
          %v999 = vrot.slane %v813, %v998
          %v1000 = vlaneseq
          %v1001 = vshrl.u32 %v1000, 7
          %v1002 = vsub.s32 %v980, %v1001
          %v1003 = vrot.slane %v816, %v1002
          %v1004 = vsel %vm985, %v1003, %v999
          %v1005 = vlaneseq
          %v1006 = vshrl.u32 %v1005, 7
          %v1007 = vsub.s32 %v975, %v1006
          %v1008 = vrot.slane %v819, %v1007
          %v1009 = vlaneseq
          %v1010 = vshrl.u32 %v1009, 7
          %v1011 = vsub.s32 %v980, %v1010
          %v1012 = vrot.slane %v822, %v1011
          %v1013 = vsel %vm985, %v1012, %v1008
          %v1014 = vlaneseq
          %v1015 = vshrl.u32 %v1014, 7
          %v1016 = vsub.s32 %v975, %v1015
          %v1017 = vrot.slane %v825, %v1016
          %v1018 = vlaneseq
          %v1019 = vshrl.u32 %v1018, 7
          %v1020 = vsub.s32 %v980, %v1019
          %v1021 = vrot.slane %v828, %v1020
          %v1022 = vsel %vm985, %v1021, %v1017
          %v1023 = vlaneseq
          %v1024 = vshrl.u32 %v1023, 7
          %v1025 = vsub.s32 %v975, %v1024
          %v1026 = vrot.slane %v831, %v1025
          %v1027 = vlaneseq
          %v1028 = vshrl.u32 %v1027, 7
          %v1029 = vsub.s32 %v980, %v1028
          %v1030 = vrot.slane %v834, %v1029
          %v1031 = vsel %vm985, %v1030, %v1026
          %v1032 = vlaneseq
          %v1033 = vshrl.u32 %v1032, 7
          %v1034 = vsub.s32 %v975, %v1033
          %v1035 = vrot.slane %v837, %v1034
          %v1036 = vlaneseq
          %v1037 = vshrl.u32 %v1036, 7
          %v1038 = vsub.s32 %v980, %v1037
          %v1039 = vrot.slane %v840, %v1038
          %v1040 = vsel %vm985, %v1039, %v1035
          %v1041 = vlaneseq
          %v1042 = vshrl.u32 %v1041, 7
          %v1043 = vsub.s32 %v975, %v1042
          %v1044 = vrot.slane %v843, %v1043
          %v1045 = vlaneseq
          %v1046 = vshrl.u32 %v1045, 7
          %v1047 = vsub.s32 %v980, %v1046
          %v1048 = vrot.slane %v846, %v1047
          %v1049 = vsel %vm985, %v1048, %v1044
          %v1050 = vsel %vm620, %v995, %v986
          %v1051 = vsel %vm622, %v1004, %v1050
          %v1052 = vsel %vm624, %v1013, %v1051
          %v1053 = vsel %vm626, %v1022, %v1052
          %v1054 = vsel %vm628, %v1031, %v1053
          %v1055 = vsel %vm630, %v1040, %v1054
          %v1056 = vsel %vm632, %v1049, %v1055
          %v1058 = vadd.f32 %v957, %v1056
          %vm1059 = vcmask 130048
          %1060 = vst.msk [vmem:[%s263] sm:$0xff] %vm1059, %v1058
        $region44: #{tpu_custom_call.1} parent=35 // pred_fallthru
          _
        %s1061 = sand.u32 %s146, 1
        %s1062 = scalar_lea.sflag [#allocation3], %s1061
        %s1063 = sand.u32 %s146, 1
        %s1064 = smul.addr %s1063, 8
        %s1065 = scalar_lea.vmem [#allocation2], %s1064
        // Predicated region
        $region45: #{tpu_custom_call.1} parent=35 // pred_check
          %p1066 = pneg %p156
        $region46: #{tpu_custom_call.1} parent=35 // pred_check_branch
          %1068 = sbr.rel (%p1066) target = $region48
        $region47: #{tpu_custom_call.1} parent=35 // pred_region
          %s1070 = ssub.s32 128, 128
          %1071 = vsyncadd %s1062, %s1070
          %s1072 = smul.addr %s22, 128
          %s1073 = scalar_lea.hbm %s4, %s1072
          %s1075 = sshll.u32 %s1065, 4
          %s1076 = int_to_ptr.vmem [resolvable:$true] %s1075
          %1078 = dma.vmem_to_hbm [thread:$0]  %s1076, 128, %s1073, %s1062
        $region48: #{tpu_custom_call.1} parent=35 // pred_fallthru
          _
      $region36: #{tpu_custom_call.1} parent=5 // pred_fallthru
        _
      %p1079 = scmp.le.s32.totalorder 2, %s13
      // Predicated region
      $region49: #{tpu_custom_call.1} parent=5 // pred_check
        %p1080 = pneg %p1079
      $region50: #{tpu_custom_call.1} parent=5 // pred_check_branch
        %1082 = sbr.rel (%p1080) target = $region52
      $region51: #{tpu_custom_call.1} parent=5 // pred_region
        %s1083 = ssub.s32 %s13, 2
        // Predicated region
        $region53: #{tpu_custom_call.1} parent=51 // pred_check
          %p1084 = pneg %p162
        $region54: #{tpu_custom_call.1} parent=51 // pred_check_branch
          %1086 = sbr.rel (%p1084) target = $region56
        $region55: #{tpu_custom_call.1} parent=51 // pred_region
          %s1087 = sand.u32 %s147, 1
          %s1088 = scalar_lea.sflag [#allocation3], %s1087
          %s1089 = sand.u32 %s147, 1
          %s1090 = smul.addr %s1089, 8
          %s1091 = scalar_lea.vmem [#allocation2], %s1090
          %1092 = dma.done %s1088, 128
        $region56: #{tpu_custom_call.1} parent=51 // pred_fallthru
          _
      $region52: #{tpu_custom_call.1} parent=5 // pred_fallthru
        _
    $region6: #{tpu_custom_call.1} parent=1 // loop_footer
      %s17 = sadd.s32 1, %s13
    $region7: #{tpu_custom_call.1} parent=1 // loop_footer_branch
      %12 = sbr.rel target = $region3
    $region8: #{tpu_custom_call.1} parent=1 // loop_exit
      _
    %1093 = vsyncpa [#allocation3], 1
    %s1094 = scalar_lea.sflag [#allocation3], 1
    %1095 = vsyncpa %s1094, 1

</llo_original>
